<compile_context>
chip_gen: v7x
topology: tpu7x:2x2x1
jax: 0.10.0
libtpu: 0.0.40
codegen_flags: <defaults>
</compile_context>

<pallas_src>
import jax
import jax.numpy as jnp
import numpy as np
from jax.experimental import pallas as pl
from jax.experimental.pallas import tpu as pltpu

LOW_DIM = 512            # embed_net low_dim
N_CLASS = 395            # embed_net n_class
N_CLASS_PAD = 512        # lane-dense classifier width (logits sliced back to 395)
C_STEM = 128             # synthetic trunk width (128-lane aligned; rely on big M for v6e/v7x MXU)
KSIZE = 3
IMG_BLK = 8              # images per grid step: >=8 sublane-aligned stores, M = 8*HW per dot


def _round_up(x, m):
    return ((x + m - 1) // m) * m


# ----------------------------- Pallas kernel --------------------------------

def _fused_branch_kernel(x_ref, wc_ref, bc_ref, wh_ref, bh_ref, out_ref):
    """Fused 3x3-conv (pre-built im2col slab) + bias + ReLU + global-avg-pool +
    folded (feature FC @ classifier FC) head for one (branch, image-block).

    x_ref  : (IMG_BLK, HW, KDIM_PAD)  bf16  im2col rows for IMG_BLK images
    wc_ref : (KDIM_PAD, C_STEM)       bf16  this branch's conv weight
    bc_ref : (1, C_STEM)              f32   conv bias
    wh_ref : (C_STEM, N_CLASS_PAD)    bf16  folded head weight (w_feat @ w_cls)
    bh_ref : (1, N_CLASS_PAD)         f32   folded head bias
    out_ref: (IMG_BLK, N_CLASS_PAD)   f32   logits block (disjoint per grid step)
    """
    nb, hw, kdim = x_ref.shape
    c_stem = wc_ref.shape[-1]

    # One big im2col matmul: M = IMG_BLK*HW, K = KDIM_PAD, N = C_STEM.
    xm = x_ref[...].reshape(nb * hw, kdim)                      # layout-preserving
    conv = jnp.dot(xm, wc_ref[...], preferred_element_type=jnp.float32)
    relu = jnp.maximum(conv + bc_ref[...], 0.0)                 # (nb*hw, C_STEM) f32

    # Global average pool on the XLU (frees MXU slots, keeps f32 precision).
    pooled = jnp.mean(relu.reshape(nb, hw, c_stem), axis=1)     # (nb, C_STEM) f32

    # Folded head (exact: no nonlinearity between feature FC and classifier).
    out_ref[...] = jnp.dot(pooled.astype(jnp.bfloat16), wh_ref[...],
                           preferred_element_type=jnp.float32) + bh_ref[...]


# ------------------------------ JAX wrapper ----------------------------------

def embed_net_logits(params, x1, x2):
    """Synthetic embed_net, logits-only path (element [4] of the model tuple)."""
    n, cin, h, w = x1.shape
    hw = h * w
    cin_pad = _round_up(cin, 16)                 # bf16 packs 16 rows per sublane group
    kdim = KSIZE * KSIZE * cin_pad
    kdim_pad = params["w_conv"].shape[1]
    assert kdim_pad == _round_up(kdim, 128)
    n_pad = _round_up(n, IMG_BLK)

    # NCHW -> NHWC; zero-pad batch (to IMG_BLK), spatial (same-pad), channels.
    x = jnp.stack([x1, x2], axis=0)              # (2, n, cin, h, w)  vis + thermal
    x = jnp.transpose(x, (0, 1, 3, 4, 2))
    x = jnp.pad(x, ((0, 0), (0, n_pad - n), (1, 1), (1, 1), (0, cin_pad - cin)))
    x = x.astype(jnp.bfloat16)

    # Wrapper-side im2col: 9 shifted views concatenated on the channel axis.
    # Tiny at these shapes; removes all in-kernel per-tap slice/reshape relayouts.
    taps = [x[:, :, di:di + h, dj:dj + w, :]
            for di in range(KSIZE) for dj in range(KSIZE)]
    slab = jnp.concatenate(taps, axis=-1).reshape(2, n_pad, hw, kdim)
    slab = jnp.pad(slab, ((0, 0), (0, 0), (0, 0), (0, kdim_pad - kdim)))

    # Fold feature FC and classifier into one (C_STEM, N_CLASS_PAD) weight.
    # Exact because there is no BN/nonlinearity between them in this head;
    # the zero-padded classifier columns/bias entries stay coupled here.
    w_cls32 = params["w_cls"].astype(jnp.float32)
    w_fold = (params["w_feat"].astype(jnp.float32) @ w_cls32).astype(jnp.bfloat16)
    b_fold = params["b_feat"] @ w_cls32 + params["b_cls"]       # (1, N_CLASS_PAD) f32

    logits_pad = pl.pallas_call(
        _fused_branch_kernel,
        out_shape=jax.ShapeDtypeStruct((2, n_pad, N_CLASS_PAD), jnp.float32),
        grid=(2, n_pad // IMG_BLK),
        in_specs=[
            pl.BlockSpec((None, IMG_BLK, hw, kdim_pad), lambda s, i: (s, i, 0, 0)),
            pl.BlockSpec((None, kdim_pad, C_STEM), lambda s, i: (s, 0, 0)),
            pl.BlockSpec((None, 1, C_STEM), lambda s, i: (s, 0, 0)),
            pl.BlockSpec((C_STEM, N_CLASS_PAD), lambda s, i: (0, 0)),
            pl.BlockSpec((1, N_CLASS_PAD), lambda s, i: (0, 0)),
        ],
        # disjoint logits block per step -> no resident accumulator, both grid
        # axes parallel (v7x megacore can load-balance branch x image blocks).
        out_specs=pl.BlockSpec((None, IMG_BLK, N_CLASS_PAD), lambda s, i: (s, i, 0)),
        compiler_params=pltpu.CompilerParams(
            dimension_semantics=("parallel", "parallel"),
            vmem_limit_bytes=32 * 1024 * 1024),
    )(slab, params["w_conv"], params["b_conv"], w_fold, b_fold)

    # concat(vis, thermal) over batch; drop batch / class padding.
    return logits_pad[:, :n, :N_CLASS].reshape(2 * n, N_CLASS)


def segmentation_model_output_wrapper(params, x1, x2):
    """SegmentationModelOutputWrapper.forward: return model(x1, x2)[4] (logits)."""
    return embed_net_logits(params, x1, x2)


# ----------------------------- parameter init --------------------------------

def init_params(key, cin):
    cin_pad = _round_up(cin, 16)
    kdim = KSIZE * KSIZE * cin_pad
    kdim_pad = _round_up(kdim, 128)
    ks = jax.random.split(key, 6)
    s_conv = 1.0 / np.sqrt(KSIZE * KSIZE * cin)
    s_feat = 1.0 / np.sqrt(C_STEM)
    s_cls = 1.0 / np.sqrt(LOW_DIM)

    def conv_w(k):
        wt = jax.random.normal(k, (KSIZE * KSIZE, cin, C_STEM), jnp.float32) * s_conv
        wt = jnp.pad(wt, ((0, 0), (0, cin_pad - cin), (0, 0))).reshape(kdim, C_STEM)
        return jnp.pad(wt, ((0, kdim_pad - kdim), (0, 0)))      # zero rows for padded K

    w_cls = jax.random.normal(ks[2], (LOW_DIM, N_CLASS), jnp.float32) * s_cls
    w_cls = jnp.pad(w_cls, ((0, 0), (0, N_CLASS_PAD - N_CLASS)))  # lane-dense, zero cols
    b_cls = jax.random.normal(ks[4], (1, N_CLASS), jnp.float32) * 0.1
    b_cls = jnp.pad(b_cls, ((0, 0), (0, N_CLASS_PAD - N_CLASS)))

    return {
        "w_conv": jnp.stack([conv_w(ks[0]), conv_w(ks[1])], 0).astype(jnp.bfloat16),
        "b_conv": jnp.zeros((2, 1, C_STEM), jnp.float32),
        "w_feat": (jax.random.normal(ks[3], (C_STEM, LOW_DIM), jnp.float32)
                   * s_feat).astype(jnp.bfloat16),
        "b_feat": jax.random.normal(ks[5], (1, LOW_DIM), jnp.float32) * 0.1,
        "w_cls": w_cls.astype(jnp.bfloat16),                     # (512, 512)
        "b_cls": b_cls,                                          # (1, 512) f32
    }


# ------------------------- pure-JAX reference (f32) ---------------------------

def _reference_logits(params, x1, x2):
    n, cin, h, w = x1.shape
    cin_pad = _round_up(cin, 16)
    kdim = KSIZE * KSIZE * cin_pad

    def branch(x, b):
        xx = jnp.transpose(x, (0, 2, 3, 1)).astype(jnp.float32)
        xx = jnp.pad(xx, ((0, 0), (1, 1), (1, 1), (0, cin_pad - cin)))
        taps = [xx[:, di:di + h, dj:dj + w, :]
                for di in range(KSIZE) for dj in range(KSIZE)]
        slab = jnp.concatenate(taps, axis=-1).reshape(n, h * w, kdim)
        conv = slab @ params["w_conv"][b, :kdim, :].astype(jnp.float32)
        relu = jnp.maximum(conv + params["b_conv"][b], 0.0)
        return jnp.mean(relu, axis=1)

    pooled = jnp.concatenate([branch(x1, 0), branch(x2, 1)], axis=0)
    feat = pooled @ params["w_feat"].astype(jnp.float32) + params["b_feat"]
    logits = feat @ params["w_cls"].astype(jnp.float32) + params["b_cls"]
    return logits[:, :N_CLASS]


# ----------------------------------- main -------------------------------------

if __name__ == "__main__":
    key = jax.random.PRNGKey(0)
    k1, k2, kp = jax.random.split(key, 3)

    B, CIN, H, W = 2, 4, 16, 16
    x1 = jax.random.normal(k1, (B, CIN, H, W), jnp.float32)   # visible images (NCHW)
    x2 = jax.random.normal(k2, (B, CIN, H, W), jnp.float32)   # thermal images (NCHW)

    params = init_params(kp, CIN)

    out = jax.jit(segmentation_model_output_wrapper)(params, x1, x2)
    out = jax.block_until_ready(out)

    assert out.shape == (2 * B, N_CLASS), out.shape
    assert bool(jnp.all(jnp.isfinite(out)))

    ref = _reference_logits(params, x1, x2)
    np.testing.assert_allclose(np.asarray(out), np.asarray(ref), atol=1e-1, rtol=1e-1)

    print("KERNEL_OK")
</pallas_src>

<mosaic_0001>
module attributes {stable_mosaic.version = 11 : i64} {
  func.func @_fused_branch_kernel(%arg0: i32, %arg1: i32, %arg2: memref<1x8x256x256xbf16, #tpu.memory_space<vmem>>, %arg3: memref<1x256x128xbf16, #tpu.memory_space<vmem>>, %arg4: memref<1x1x128xf32, #tpu.memory_space<vmem>>, %arg5: memref<128x512xbf16, #tpu.memory_space<vmem>>, %arg6: memref<1x512xf32, #tpu.memory_space<vmem>>, %arg7: memref<1x8x512xf32, #tpu.memory_space<vmem>>) attributes {dimension_semantics = [#tpu.dimension_semantics<parallel>, #tpu.dimension_semantics<parallel>], iteration_bounds = array<i64: 2, 1>, scalar_prefetch = 0 : i64, scratch_operands = 0 : i64, tpu.core_type = #tpu.core_type<tc>, window_params = [{transform_indices = @transform_0, window_bounds = array<i64: 1, 8, 256, 256>}, {transform_indices = @transform_1, window_bounds = array<i64: 1, 256, 128>}, {transform_indices = @transform_2, window_bounds = array<i64: 1, 1, 128>}, {pipeline_mode = #tpu.pipeline_mode<synchronous>, transform_indices = @transform_3, window_bounds = array<i64: 128, 512>}, {pipeline_mode = #tpu.pipeline_mode<synchronous>, transform_indices = @transform_4, window_bounds = array<i64: 1, 512>}, {transform_indices = @transform_5, window_bounds = array<i64: 1, 8, 512>}]} {
    %c0 = arith.constant 0 : index
    %c0_0 = arith.constant 0 : index
    %c0_1 = arith.constant 0 : index
    %c0_2 = arith.constant 0 : index
    %0 = vector.load %arg2[%c0, %c0_0, %c0_1, %c0_2] : memref<1x8x256x256xbf16, #tpu.memory_space<vmem>>, vector<1x8x256x256xbf16>
    %1 = vector.shape_cast %0 : vector<1x8x256x256xbf16> to vector<8x256x256xbf16>
    %2 = vector.shape_cast %1 : vector<8x256x256xbf16> to vector<2048x256xbf16>
    %c0_3 = arith.constant 0 : index
    %c0_4 = arith.constant 0 : index
    %c0_5 = arith.constant 0 : index
    %3 = vector.load %arg3[%c0_3, %c0_4, %c0_5] : memref<1x256x128xbf16, #tpu.memory_space<vmem>>, vector<1x256x128xbf16>
    %4 = vector.shape_cast %3 : vector<1x256x128xbf16> to vector<256x128xbf16>
    %cst = arith.constant dense<0.000000e+00> : vector<2048x128xf32>
    %5 = tpu.matmul %2, %4, %cst {dimension_numbers = #tpu.dot_dimension_numbers<[1], [0], [0], [1], [0, 0, 1, 1], [], []>} : vector<2048x256xbf16>, vector<256x128xbf16>, vector<2048x128xf32> -> vector<2048x128xf32>
    %c0_6 = arith.constant 0 : index
    %c0_7 = arith.constant 0 : index
    %c0_8 = arith.constant 0 : index
    %6 = vector.load %arg4[%c0_6, %c0_7, %c0_8] : memref<1x1x128xf32, #tpu.memory_space<vmem>>, vector<1x1x128xf32>
    %7 = vector.shape_cast %6 : vector<1x1x128xf32> to vector<1x128xf32>
    %8 = vector.broadcast %7 : vector<1x128xf32> to vector<2048x128xf32>
    %9 = arith.addf %5, %8 : vector<2048x128xf32>
    %cst_9 = arith.constant 0.000000e+00 : f32
    %10 = vector.broadcast %cst_9 : f32 to vector<2048x128xf32>
    %11 = arith.maximumf %9, %10 : vector<2048x128xf32>
    %12 = vector.shape_cast %11 : vector<2048x128xf32> to vector<8x256x128xf32>
    %cst_10 = arith.constant dense<0.000000e+00> : vector<8x128xf32>
    %13 = vector.multi_reduction <add>, %12, %cst_10 [1] : vector<8x256x128xf32> to vector<8x128xf32>
    %cst_11 = arith.constant 2.560000e+02 : f32
    %14 = vector.broadcast %cst_11 : f32 to vector<8x128xf32>
    %15 = arith.divf %13, %14 : vector<8x128xf32>
    %16 = arith.truncf %15 : vector<8x128xf32> to vector<8x128xbf16>
    %c0_12 = arith.constant 0 : index
    %c0_13 = arith.constant 0 : index
    %17 = vector.load %arg5[%c0_12, %c0_13] : memref<128x512xbf16, #tpu.memory_space<vmem>>, vector<128x512xbf16>
    %cst_14 = arith.constant dense<0.000000e+00> : vector<8x512xf32>
    %18 = tpu.matmul %16, %17, %cst_14 {dimension_numbers = #tpu.dot_dimension_numbers<[1], [0], [0], [1], [0, 0, 1, 1], [], []>} : vector<8x128xbf16>, vector<128x512xbf16>, vector<8x512xf32> -> vector<8x512xf32>
    %c0_15 = arith.constant 0 : index
    %c0_16 = arith.constant 0 : index
    %19 = vector.load %arg6[%c0_15, %c0_16] : memref<1x512xf32, #tpu.memory_space<vmem>>, vector<1x512xf32>
    %20 = vector.broadcast %19 : vector<1x512xf32> to vector<8x512xf32>
    %21 = arith.addf %18, %20 : vector<8x512xf32>
    %c0_17 = arith.constant 0 : index
    %c0_18 = arith.constant 0 : index
    %c0_19 = arith.constant 0 : index
    %22 = vector.load %arg7[%c0_17, %c0_18, %c0_19] : memref<1x8x512xf32, #tpu.memory_space<vmem>>, vector<1x8x512xf32>
    %23 = vector.shape_cast %22 : vector<1x8x512xf32> to vector<8x512xf32>
    %24 = vector.shape_cast %21 : vector<8x512xf32> to vector<1x8x512xf32>
    tpu.vector_store %arg7[%c0_17, %c0_18, %c0_19], %24 {strides = array<i32>} : memref<1x8x512xf32, #tpu.memory_space<vmem>>, vector<1x8x512xf32>,
    return
  }
  func.func @transform_0(%arg0: i32, %arg1: i32) -> (i32, i32, i32, i32) {
    %c0_i32 = arith.constant 0 : i32
    %c0_i32_0 = arith.constant 0 : i32
    %c0_i32_1 = arith.constant 0 : i32
    return %arg0, %arg1, %c0_i32, %c0_i32_0 : i32, i32, i32, i32
  }
  func.func @transform_1(%arg0: i32, %arg1: i32) -> (i32, i32, i32) {
    %c0_i32 = arith.constant 0 : i32
    %c0_i32_0 = arith.constant 0 : i32
    %c0_i32_1 = arith.constant 0 : i32
    return %arg0, %c0_i32, %c0_i32_0 : i32, i32, i32
  }
  func.func @transform_2(%arg0: i32, %arg1: i32) -> (i32, i32, i32) {
    %c0_i32 = arith.constant 0 : i32
    %c0_i32_0 = arith.constant 0 : i32
    %c0_i32_1 = arith.constant 0 : i32
    return %arg0, %c0_i32, %c0_i32_0 : i32, i32, i32
  }
  func.func @transform_3(%arg0: i32, %arg1: i32) -> (i32, i32) {
    %c0_i32 = arith.constant 0 : i32
    %c0_i32_0 = arith.constant 0 : i32
    %c0_i32_1 = arith.constant 0 : i32
    return %c0_i32, %c0_i32_0 : i32, i32
  }
  func.func @transform_4(%arg0: i32, %arg1: i32) -> (i32, i32) {
    %c0_i32 = arith.constant 0 : i32
    %c0_i32_0 = arith.constant 0 : i32
    %c0_i32_1 = arith.constant 0 : i32
    return %c0_i32, %c0_i32_0 : i32, i32
  }
  func.func @transform_5(%arg0: i32, %arg1: i32) -> (i32, i32, i32) {
    %c0_i32 = arith.constant 0 : i32
    %c0_i32_0 = arith.constant 0 : i32
    return %arg0, %arg1, %c0_i32 : i32, i32, i32
  }
}

</mosaic_0001>

<llo_original>
// kernel: segmentation_model_output_wrapper.1
$region0: #{segmentation_model_output_wrapper.1}
  #allocation0 [shape = 'u32[]', space=smem, size = 0x4, offset = 0x4, fixed_abs, tag = 'smem constant byte address 0x4 - core index']
  #allocation1 [shape = 'u32[144,128]{1,0:T(1,128)}', space=vmem, size = 0x12000, scoped, tag = 'internal scratch']
  %s0 = inlined_call_operand.vmem [shape: bf16[2,8,256,256], index: 0, kind: input, shape index: {}]
  %s1 = inlined_call_operand.vmem [shape: bf16[2,256,128], index: 1, kind: input, shape index: {}]
  %s2 = inlined_call_operand.vmem [shape: f32[2,1,128], index: 2, kind: input, shape index: {}]
  %s3 = inlined_call_operand.vmem [shape: bf16[128,512], index: 3, kind: input, shape index: {}]
  %s4 = inlined_call_operand.vmem [shape: f32[1,512], index: 4, kind: input, shape index: {}]
  %s5 = inlined_call_operand.vmem [shape: f32[2,8,512], index: 5, kind: output, shape index: {}]
  %s6 = sld [smem:[#allocation0]]
  $region53: #{segmentation_model_output_wrapper.1} parent=0
    _
  %s8 = ssub.s32 1, %s6
  %s9 = scalar_select 0, %s8, %s6
  loop: start=0, step=1, limit=4
  $region2: #{segmentation_model_output_wrapper.1} parent=0 // loop_pre_header
    _
  $region3: #{segmentation_model_output_wrapper.1} parent=0 // loop_header
    %s11 = sphi 0, %s15
    %p12 = scmp.ge.s32.totalorder %s11, 4
    %s18 = sphi 0, %s30
    %s19 = sphi 0, %s26
    %s20 = sphi 0, %s18
    %s21 = sphi 0, %s19
    %s22 = sphi 0, %s20
    %s23 = sphi 0, %s21
    %s35 = sphi 0, %s37
    %s38 = sphi 0, %s35
    %s39 = sphi 0, %s38
    %s55 = sphi 0, %s39
    %s61 = sphi 0, %s63
    %s64 = sphi 0, %s61
    %s65 = sphi 0, %s64
    %s81 = sphi 0, %s65
    %s87 = sphi 0, %s89
    %s90 = sphi 0, %s87
    %s91 = sphi 0, %s90
    %s107 = sphi 0, %s91
    %s111 = sphi 0, %s111
    %s113 = sphi 0, %s111
    %s114 = sphi 0, %s113
    %s128 = sphi 0, %s114
    %s132 = sphi 0, %s132
    %s134 = sphi 0, %s132
    %s135 = sphi 0, %s134
    %s149 = sphi 0, %s135
    %s157 = sphi 0, %s159
    %s160 = sphi 0, %s157
    %s161 = sphi 0, %s160
    %s177 = sphi 0, %s161
  $region4: #{segmentation_model_output_wrapper.1} parent=0 // loop_header_branch
    %14 = sbr.rel (%p12) target = $region8
  $region5: #{segmentation_model_output_wrapper.1} parent=0 // loop_body
    %s16 = ssub.s32 %s11, 1
    %s17 = ssub.s32 %s11, 2
    %s24 = sadd.s32 1, %s19
    %p25 = scmp.ge.s32.totalorder %s24, 1
    %s26 = scalar_select %p25, 0, %s24
    %s27 = sadd.s32 1, %s18
    %s28 = scalar_select %p25, %s27, %s18
    %p29 = scmp.ge.s32.totalorder %s28, 2
    %s30 = scalar_select %p29, 0, %s28
    %s31 = ssub.s32 %s18, %s30
    %s32 = ssub.s32 %s19, %s26
    %s33 = sor.u32 %s31, %s32
    %p34 = scmp.eq.s32.totalorder %s33, 0
    %s36 = sadd.s32 %s35, 1
    %s37 = scalar_select %p34, %s35, %s36
    %p40 = pneg %p34
    %p41 = scmp.eq.s32.totalorder %s11, 1
    %p42 = por %p40, %p41
    %p43 = scmp.ne.s32.totalorder %s35, %s38
    %p44 = scmp.eq.s32.totalorder %s11, 0
    %p45 = por %p43, %p44
    %p46 = scmp.ne.s32.totalorder %s35, %s38
    %p47 = scmp.eq.s32.totalorder %s16, 1
    %p48 = por %p46, %p47
    %p49 = scmp.ne.s32.totalorder %s38, %s39
    %p50 = scmp.eq.s32.totalorder %s16, 0
    %p51 = por %p49, %p50
    %p52 = scmp.ne.s32.totalorder %s38, %s39
    %p53 = scmp.eq.s32.totalorder %s17, 1
    %p54 = por %p52, %p53
    %p56 = scmp.ne.s32.totalorder %s39, %s55
    %p57 = scmp.eq.s32.totalorder %s17, 0
    %p58 = por %p56, %p57
    %s59 = ssub.s32 %s18, %s30
    %p60 = scmp.eq.s32.totalorder %s59, 0
    %s62 = sadd.s32 %s61, 1
    %s63 = scalar_select %p60, %s61, %s62
    %p66 = pneg %p60
    %p67 = scmp.eq.s32.totalorder %s11, 1
    %p68 = por %p66, %p67
    %p69 = scmp.ne.s32.totalorder %s61, %s64
    %p70 = scmp.eq.s32.totalorder %s11, 0
    %p71 = por %p69, %p70
    %p72 = scmp.ne.s32.totalorder %s61, %s64
    %p73 = scmp.eq.s32.totalorder %s16, 1
    %p74 = por %p72, %p73
    %p75 = scmp.ne.s32.totalorder %s64, %s65
    %p76 = scmp.eq.s32.totalorder %s16, 0
    %p77 = por %p75, %p76
    %p78 = scmp.ne.s32.totalorder %s64, %s65
    %p79 = scmp.eq.s32.totalorder %s17, 1
    %p80 = por %p78, %p79
    %p82 = scmp.ne.s32.totalorder %s65, %s81
    %p83 = scmp.eq.s32.totalorder %s17, 0
    %p84 = por %p82, %p83
    %s85 = ssub.s32 %s18, %s30
    %p86 = scmp.eq.s32.totalorder %s85, 0
    %s88 = sadd.s32 %s87, 1
    %s89 = scalar_select %p86, %s87, %s88
    %p92 = pneg %p86
    %p93 = scmp.eq.s32.totalorder %s11, 1
    %p94 = por %p92, %p93
    %p95 = scmp.ne.s32.totalorder %s87, %s90
    %p96 = scmp.eq.s32.totalorder %s11, 0
    %p97 = por %p95, %p96
    %p98 = scmp.ne.s32.totalorder %s87, %s90
    %p99 = scmp.eq.s32.totalorder %s16, 1
    %p100 = por %p98, %p99
    %p101 = scmp.ne.s32.totalorder %s90, %s91
    %p102 = scmp.eq.s32.totalorder %s16, 0
    %p103 = por %p101, %p102
    %p104 = scmp.ne.s32.totalorder %s90, %s91
    %p105 = scmp.eq.s32.totalorder %s17, 1
    %p106 = por %p104, %p105
    %p108 = scmp.ne.s32.totalorder %s91, %s107
    %p109 = scmp.eq.s32.totalorder %s17, 0
    %p110 = por %p108, %p109
    %s112 = sadd.s32 %s111, 1
    %p115 = scmp.eq.s32.totalorder %s11, 1
    %p116 = scmp.ne.s32.totalorder %s111, %s113
    %p117 = scmp.eq.s32.totalorder %s11, 0
    %p118 = por %p116, %p117
    %p119 = scmp.ne.s32.totalorder %s111, %s113
    %p120 = scmp.eq.s32.totalorder %s16, 1
    %p121 = por %p119, %p120
    %p122 = scmp.ne.s32.totalorder %s113, %s114
    %p123 = scmp.eq.s32.totalorder %s16, 0
    %p124 = por %p122, %p123
    %p125 = scmp.ne.s32.totalorder %s113, %s114
    %p126 = scmp.eq.s32.totalorder %s17, 1
    %p127 = por %p125, %p126
    %p129 = scmp.ne.s32.totalorder %s114, %s128
    %p130 = scmp.eq.s32.totalorder %s17, 0
    %p131 = por %p129, %p130
    %s133 = sadd.s32 %s132, 1
    %p136 = scmp.eq.s32.totalorder %s11, 1
    %p137 = scmp.ne.s32.totalorder %s132, %s134
    %p138 = scmp.eq.s32.totalorder %s11, 0
    %p139 = por %p137, %p138
    %p140 = scmp.ne.s32.totalorder %s132, %s134
    %p141 = scmp.eq.s32.totalorder %s16, 1
    %p142 = por %p140, %p141
    %p143 = scmp.ne.s32.totalorder %s134, %s135
    %p144 = scmp.eq.s32.totalorder %s16, 0
    %p145 = por %p143, %p144
    %p146 = scmp.ne.s32.totalorder %s134, %s135
    %p147 = scmp.eq.s32.totalorder %s17, 1
    %p148 = por %p146, %p147
    %p150 = scmp.ne.s32.totalorder %s135, %s149
    %p151 = scmp.eq.s32.totalorder %s17, 0
    %p152 = por %p150, %p151
    %s153 = ssub.s32 %s18, %s30
    %s154 = ssub.s32 %s19, %s26
    %s155 = sor.u32 %s153, %s154
    %p156 = scmp.eq.s32.totalorder %s155, 0
    %s158 = sadd.s32 %s157, 1
    %s159 = scalar_select %p156, %s157, %s158
    %p162 = pneg %p156
    %p163 = scmp.eq.s32.totalorder %s11, 1
    %p164 = por %p162, %p163
    %p165 = scmp.ne.s32.totalorder %s157, %s160
    %p166 = scmp.eq.s32.totalorder %s11, 0
    %p167 = por %p165, %p166
    %p168 = scmp.ne.s32.totalorder %s157, %s160
    %p169 = scmp.eq.s32.totalorder %s16, 1
    %p170 = por %p168, %p169
    %p171 = scmp.ne.s32.totalorder %s160, %s161
    %p172 = scmp.eq.s32.totalorder %s16, 0
    %p173 = por %p171, %p172
    %p174 = scmp.ne.s32.totalorder %s160, %s161
    %p175 = scmp.eq.s32.totalorder %s17, 1
    %p176 = por %p174, %p175
    %p178 = scmp.ne.s32.totalorder %s161, %s177
    %p179 = scmp.eq.s32.totalorder %s17, 0
    %p180 = por %p178, %p179
    %p181 = scmp.le.s32.totalorder 1, %s11
    %p182 = scmp.lt.s32.totalorder %s11, 3
    %p183 = pnand %p181, %p182
    %p184 = pneg %p183
    // Predicated region
    $region9: #{segmentation_model_output_wrapper.1} parent=5 // pred_check
      _
    $region10: #{segmentation_model_output_wrapper.1} parent=5 // pred_check_branch
      %186 = sbr.rel (%p183) target = $region12
    $region11: #{segmentation_model_output_wrapper.1} parent=5 // pred_region
      %s187 = ssub.s32 %s11, 1
      // Predicated region
      $region13: #{segmentation_model_output_wrapper.1} parent=11 // pred_check
        %p188 = pneg %p124
      $region14: #{segmentation_model_output_wrapper.1} parent=11 // pred_check_branch
        %190 = sbr.rel (%p188) target = $region16
      $region15: #{segmentation_model_output_wrapper.1} parent=11 // pred_region
        _
      $region16: #{segmentation_model_output_wrapper.1} parent=11 // pred_fallthru
        _
      // Predicated region
      $region17: #{segmentation_model_output_wrapper.1} parent=11 // pred_check
        %p191 = pneg %p145
      $region18: #{segmentation_model_output_wrapper.1} parent=11 // pred_check_branch
        %193 = sbr.rel (%p191) target = $region20
      $region19: #{segmentation_model_output_wrapper.1} parent=11 // pred_region
        _
      $region20: #{segmentation_model_output_wrapper.1} parent=11 // pred_fallthru
        _
    $region12: #{segmentation_model_output_wrapper.1} parent=5 // pred_fallthru
      _
    %p194 = scmp.lt.s32.totalorder %s11, 2
    // Predicated region
    $region21: #{segmentation_model_output_wrapper.1} parent=5 // pred_check
      %p195 = pneg %p194
    $region22: #{segmentation_model_output_wrapper.1} parent=5 // pred_check_branch
      %197 = sbr.rel (%p195) target = $region24
    $region23: #{segmentation_model_output_wrapper.1} parent=5 // pred_region
      // Predicated region
      $region25: #{segmentation_model_output_wrapper.1} parent=23 // pred_check
        %p198 = pneg %p45
      $region26: #{segmentation_model_output_wrapper.1} parent=23 // pred_check_branch
        %200 = sbr.rel (%p198) target = $region28
      $region27: #{segmentation_model_output_wrapper.1} parent=23 // pred_region
        %s201 = smul.u32 8, %s19
        %p202 = scmp.lt.s32.totalorder %s18, 1
        %s203 = scalar_select %p202, %s18, 1
        %p204 = scmp.lt.s32.totalorder %s201, 7
        %s205 = scalar_select %p204, %s201, 7
        %s206 = smul.addr %s205, 64
        %s207 = smul.addr %s203, 512
        %s208 = sadd.s32 %s206, %s207
        %s209 = smul.addr %s208, 4
        %s210 = scalar_lea.vmem %s0, %s209
        %s211 = smul.u32 8, %s19
      $region28: #{segmentation_model_output_wrapper.1} parent=23 // pred_fallthru
        _
      // Predicated region
      $region29: #{segmentation_model_output_wrapper.1} parent=23 // pred_check
        %p212 = pneg %p71
      $region30: #{segmentation_model_output_wrapper.1} parent=23 // pred_check_branch
        %214 = sbr.rel (%p212) target = $region32
      $region31: #{segmentation_model_output_wrapper.1} parent=23 // pred_region
        %p215 = scmp.lt.s32.totalorder %s18, 1
        %s216 = scalar_select %p215, %s18, 1
        %s217 = smul.addr %s216, 32
        %s218 = smul.addr %s217, 4
        %s219 = scalar_lea.vmem %s1, %s218
      $region32: #{segmentation_model_output_wrapper.1} parent=23 // pred_fallthru
        _
      // Predicated region
      $region33: #{segmentation_model_output_wrapper.1} parent=23 // pred_check
        %p220 = pneg %p97
      $region34: #{segmentation_model_output_wrapper.1} parent=23 // pred_check_branch
        %222 = sbr.rel (%p220) target = $region36
      $region35: #{segmentation_model_output_wrapper.1} parent=23 // pred_region
        %p223 = scmp.lt.s32.totalorder %s18, 1
        %s224 = scalar_select %p223, %s18, 1
        %s225 = scalar_lea.vmem %s2, %s224
      $region36: #{segmentation_model_output_wrapper.1} parent=23 // pred_fallthru
        _
    $region24: #{segmentation_model_output_wrapper.1} parent=5 // pred_fallthru
      _
    %p226 = scmp.le.s32.totalorder 1, %s11
    %p227 = scmp.lt.s32.totalorder %s11, 3
    %p228 = pnand %p226, %p227
    %p229 = pneg %p228
    // Predicated region
    $region37: #{segmentation_model_output_wrapper.1} parent=5 // pred_check
      _
    $region38: #{segmentation_model_output_wrapper.1} parent=5 // pred_check_branch
      %231 = sbr.rel (%p228) target = $region40
    $region39: #{segmentation_model_output_wrapper.1} parent=5 // pred_region
      %s232 = ssub.s32 %s11, 1
      %s233 = smul.u32 8, %s21
      %p234 = scmp.lt.s32.totalorder %s20, 1
      %s235 = scalar_select %p234, %s20, 1
      %p236 = scmp.lt.s32.totalorder %s233, 7
      %s237 = scalar_select %p236, %s233, 7
      %s238 = smul.addr %s237, 64
      %s239 = smul.addr %s235, 512
      %s240 = sadd.s32 %s238, %s239
      %s241 = smul.addr %s240, 4
      %s242 = scalar_lea.vmem %s0, %s241
      %p243 = pneg %p51
      %p244 = pneg %p48
      %p245 = scmp.lt.s32.totalorder %s20, 1
      %s246 = scalar_select %p245, %s20, 1
      %s247 = smul.addr %s246, 32
      %s248 = smul.addr %s247, 4
      %s249 = scalar_lea.vmem %s1, %s248
      %p250 = pneg %p77
      %p251 = pneg %p74
      %p252 = scmp.lt.s32.totalorder %s20, 1
      %s253 = scalar_select %p252, %s20, 1
      %s254 = scalar_lea.vmem %s2, %s253
      %p255 = pneg %p103
      %p256 = pneg %p100
      %p257 = pneg %p124
      %p258 = pneg %p121
      %p259 = pneg %p145
      %p260 = pneg %p142
      %p261 = pneg %p173
      %p262 = pneg %p170
      %p263 = scmp.lt.s32.totalorder %s20, 1
      %s264 = scalar_select %p263, %s20, 1
      %p265 = scmp.lt.s32.totalorder %s21, 0
      %s266 = scalar_select %p265, %s21, 0
      %s267 = smul.addr %s266, 4
      %s268 = smul.addr %s264, 4
      %s269 = sadd.s32 %s267, %s268
      %s270 = smul.addr %s269, 8
      %s271 = scalar_lea.vmem %s5, %s270
      %s272 = smul.u32 8, %s21
      %p273 = scmp.lt.s32.totalorder %s20, 1
      %s274 = scalar_select %p273, %s20, 1
      %p275 = scmp.lt.s32.totalorder %s272, 7
      %s276 = scalar_select %p275, %s272, 7
      %s277 = smul.addr %s276, 64
      %s278 = smul.addr %s274, 512
      %s279 = sadd.s32 %s277, %s278
      %s280 = smul.addr %s279, 4
      %s281 = scalar_lea.vmem %s0, %s280
      %s282 = smul.u32 8, %s21
      %p283 = scmp.lt.s32.totalorder %s20, 1
      %s284 = scalar_select %p283, %s20, 1
      %s285 = smul.addr %s284, 32
      %s286 = smul.addr %s285, 4
      %s287 = scalar_lea.vmem %s1, %s286
      %p288 = scmp.lt.s32.totalorder %s20, 1
      %s289 = scalar_select %p288, %s20, 1
      %s290 = scalar_lea.vmem %s2, %s289
      %p291 = scmp.lt.s32.totalorder %s20, 1
      %s292 = scalar_select %p291, %s20, 1
      %p293 = scmp.lt.s32.totalorder %s21, 0
      %s294 = scalar_select %p293, %s21, 0
      %s295 = smul.addr %s294, 4
      %s296 = smul.addr %s292, 4
      %s297 = sadd.s32 %s295, %s296
      %s298 = smul.addr %s297, 8
      %s299 = scalar_lea.vmem %s5, %s298
      %v301 = vld [vmem:[%s281] sm:$0xff]
      %v302 = vld [vmem:[%s281 + $0x8] sm:$0xff]
      %v303 = vld [vmem:[%s281 + $0x10] sm:$0xff]
      %v304 = vld [vmem:[%s281 + $0x18] sm:$0xff]
      %v305 = vld [vmem:[%s281 + $0x20] sm:$0xff]
      %v306 = vld [vmem:[%s281 + $0x28] sm:$0xff]
      %v307 = vld [vmem:[%s281 + $0x30] sm:$0xff]
      %v308 = vld [vmem:[%s281 + $0x38] sm:$0xff]
      %v309 = vld [vmem:[%s281 + $0x40] sm:$0xff]
      %v310 = vld [vmem:[%s281 + $0x48] sm:$0xff]
      %v311 = vld [vmem:[%s281 + $0x50] sm:$0xff]
      %v312 = vld [vmem:[%s281 + $0x58] sm:$0xff]
      %v313 = vld [vmem:[%s281 + $0x60] sm:$0xff]
      %v314 = vld [vmem:[%s281 + $0x68] sm:$0xff]
      %v315 = vld [vmem:[%s281 + $0x70] sm:$0xff]
      %v316 = vld [vmem:[%s281 + $0x78] sm:$0xff]
      %v317 = vld [vmem:[%s281 + $0x80] sm:$0xff]
      %v318 = vld [vmem:[%s281 + $0x88] sm:$0xff]
      %v319 = vld [vmem:[%s281 + $0x90] sm:$0xff]
      %v320 = vld [vmem:[%s281 + $0x98] sm:$0xff]
      %v321 = vld [vmem:[%s281 + $0xa0] sm:$0xff]
      %v322 = vld [vmem:[%s281 + $0xa8] sm:$0xff]
      %v323 = vld [vmem:[%s281 + $0xb0] sm:$0xff]
      %v324 = vld [vmem:[%s281 + $0xb8] sm:$0xff]
      %v325 = vld [vmem:[%s281 + $0xc0] sm:$0xff]
      %v326 = vld [vmem:[%s281 + $0xc8] sm:$0xff]
      %v327 = vld [vmem:[%s281 + $0xd0] sm:$0xff]
      %v328 = vld [vmem:[%s281 + $0xd8] sm:$0xff]
      %v329 = vld [vmem:[%s281 + $0xe0] sm:$0xff]
      %v330 = vld [vmem:[%s281 + $0xe8] sm:$0xff]
      %v331 = vld [vmem:[%s281 + $0xf0] sm:$0xff]
      %v332 = vld [vmem:[%s281 + $0xf8] sm:$0xff]
      %v333 = vld [vmem:[%s281 + $0x100] sm:$0xff]
      %v334 = vld [vmem:[%s281 + $0x108] sm:$0xff]
      %v335 = vld [vmem:[%s281 + $0x110] sm:$0xff]
      %v336 = vld [vmem:[%s281 + $0x118] sm:$0xff]
      %v337 = vld [vmem:[%s281 + $0x120] sm:$0xff]
      %v338 = vld [vmem:[%s281 + $0x128] sm:$0xff]
      %v339 = vld [vmem:[%s281 + $0x130] sm:$0xff]
      %v340 = vld [vmem:[%s281 + $0x138] sm:$0xff]
      %v341 = vld [vmem:[%s281 + $0x140] sm:$0xff]
      %v342 = vld [vmem:[%s281 + $0x148] sm:$0xff]
      %v343 = vld [vmem:[%s281 + $0x150] sm:$0xff]
      %v344 = vld [vmem:[%s281 + $0x158] sm:$0xff]
      %v345 = vld [vmem:[%s281 + $0x160] sm:$0xff]
      %v346 = vld [vmem:[%s281 + $0x168] sm:$0xff]
      %v347 = vld [vmem:[%s281 + $0x170] sm:$0xff]
      %v348 = vld [vmem:[%s281 + $0x178] sm:$0xff]
      %v349 = vld [vmem:[%s281 + $0x180] sm:$0xff]
      %v350 = vld [vmem:[%s281 + $0x188] sm:$0xff]
      %v351 = vld [vmem:[%s281 + $0x190] sm:$0xff]
      %v352 = vld [vmem:[%s281 + $0x198] sm:$0xff]
      %v353 = vld [vmem:[%s281 + $0x1a0] sm:$0xff]
      %v354 = vld [vmem:[%s281 + $0x1a8] sm:$0xff]
      %v355 = vld [vmem:[%s281 + $0x1b0] sm:$0xff]
      %v356 = vld [vmem:[%s281 + $0x1b8] sm:$0xff]
      %v357 = vld [vmem:[%s281 + $0x1c0] sm:$0xff]
      %v358 = vld [vmem:[%s281 + $0x1c8] sm:$0xff]
      %v359 = vld [vmem:[%s281 + $0x1d0] sm:$0xff]
      %v360 = vld [vmem:[%s281 + $0x1d8] sm:$0xff]
      %v361 = vld [vmem:[%s281 + $0x1e0] sm:$0xff]
      %v362 = vld [vmem:[%s281 + $0x1e8] sm:$0xff]
      %v363 = vld [vmem:[%s281 + $0x1f0] sm:$0xff]
      %v364 = vld [vmem:[%s281 + $0x1f8] sm:$0xff]
      %v365 = vld [vmem:[%s281 + $0x200] sm:$0xff]
      %v366 = vld [vmem:[%s281 + $0x208] sm:$0xff]
      %v367 = vld [vmem:[%s281 + $0x210] sm:$0xff]
      %v368 = vld [vmem:[%s281 + $0x218] sm:$0xff]
      %v369 = vld [vmem:[%s281 + $0x220] sm:$0xff]
      %v370 = vld [vmem:[%s281 + $0x228] sm:$0xff]
      %v371 = vld [vmem:[%s281 + $0x230] sm:$0xff]
      %v372 = vld [vmem:[%s281 + $0x238] sm:$0xff]
      %v373 = vld [vmem:[%s281 + $0x240] sm:$0xff]
      %v374 = vld [vmem:[%s281 + $0x248] sm:$0xff]
      %v375 = vld [vmem:[%s281 + $0x250] sm:$0xff]
      %v376 = vld [vmem:[%s281 + $0x258] sm:$0xff]
      %v377 = vld [vmem:[%s281 + $0x260] sm:$0xff]
      %v378 = vld [vmem:[%s281 + $0x268] sm:$0xff]
      %v379 = vld [vmem:[%s281 + $0x270] sm:$0xff]
      %v380 = vld [vmem:[%s281 + $0x278] sm:$0xff]
      %v381 = vld [vmem:[%s281 + $0x280] sm:$0xff]
      %v382 = vld [vmem:[%s281 + $0x288] sm:$0xff]
      %v383 = vld [vmem:[%s281 + $0x290] sm:$0xff]
      %v384 = vld [vmem:[%s281 + $0x298] sm:$0xff]
      %v385 = vld [vmem:[%s281 + $0x2a0] sm:$0xff]
      %v386 = vld [vmem:[%s281 + $0x2a8] sm:$0xff]
      %v387 = vld [vmem:[%s281 + $0x2b0] sm:$0xff]
      %v388 = vld [vmem:[%s281 + $0x2b8] sm:$0xff]
      %v389 = vld [vmem:[%s281 + $0x2c0] sm:$0xff]
      %v390 = vld [vmem:[%s281 + $0x2c8] sm:$0xff]
      %v391 = vld [vmem:[%s281 + $0x2d0] sm:$0xff]
      %v392 = vld [vmem:[%s281 + $0x2d8] sm:$0xff]
      %v393 = vld [vmem:[%s281 + $0x2e0] sm:$0xff]
      %v394 = vld [vmem:[%s281 + $0x2e8] sm:$0xff]
      %v395 = vld [vmem:[%s281 + $0x2f0] sm:$0xff]
      %v396 = vld [vmem:[%s281 + $0x2f8] sm:$0xff]
      %v397 = vld [vmem:[%s281 + $0x300] sm:$0xff]
      %v398 = vld [vmem:[%s281 + $0x308] sm:$0xff]
      %v399 = vld [vmem:[%s281 + $0x310] sm:$0xff]
      %v400 = vld [vmem:[%s281 + $0x318] sm:$0xff]
      %v401 = vld [vmem:[%s281 + $0x320] sm:$0xff]
      %v402 = vld [vmem:[%s281 + $0x328] sm:$0xff]
      %v403 = vld [vmem:[%s281 + $0x330] sm:$0xff]
      %v404 = vld [vmem:[%s281 + $0x338] sm:$0xff]
      %v405 = vld [vmem:[%s281 + $0x340] sm:$0xff]
      %v406 = vld [vmem:[%s281 + $0x348] sm:$0xff]
      %v407 = vld [vmem:[%s281 + $0x350] sm:$0xff]
      %v408 = vld [vmem:[%s281 + $0x358] sm:$0xff]
      %v409 = vld [vmem:[%s281 + $0x360] sm:$0xff]
      %v410 = vld [vmem:[%s281 + $0x368] sm:$0xff]
      %v411 = vld [vmem:[%s281 + $0x370] sm:$0xff]
      %v412 = vld [vmem:[%s281 + $0x378] sm:$0xff]
      %v413 = vld [vmem:[%s281 + $0x380] sm:$0xff]
      %v414 = vld [vmem:[%s281 + $0x388] sm:$0xff]
      %v415 = vld [vmem:[%s281 + $0x390] sm:$0xff]
      %v416 = vld [vmem:[%s281 + $0x398] sm:$0xff]
      %v417 = vld [vmem:[%s281 + $0x3a0] sm:$0xff]
      %v418 = vld [vmem:[%s281 + $0x3a8] sm:$0xff]
      %v419 = vld [vmem:[%s281 + $0x3b0] sm:$0xff]
      %v420 = vld [vmem:[%s281 + $0x3b8] sm:$0xff]
      %v421 = vld [vmem:[%s281 + $0x3c0] sm:$0xff]
      %v422 = vld [vmem:[%s281 + $0x3c8] sm:$0xff]
      %v423 = vld [vmem:[%s281 + $0x3d0] sm:$0xff]
      %v424 = vld [vmem:[%s281 + $0x3d8] sm:$0xff]
      %v425 = vld [vmem:[%s281 + $0x3e0] sm:$0xff]
      %v426 = vld [vmem:[%s281 + $0x3e8] sm:$0xff]
      %v427 = vld [vmem:[%s281 + $0x3f0] sm:$0xff]
      %v428 = vld [vmem:[%s281 + $0x3f8] sm:$0xff]
      %v429 = vld [vmem:[%s281 + $0x400] sm:$0xff]
      %v430 = vld [vmem:[%s281 + $0x408] sm:$0xff]
      %v431 = vld [vmem:[%s281 + $0x410] sm:$0xff]
      %v432 = vld [vmem:[%s281 + $0x418] sm:$0xff]
      %v433 = vld [vmem:[%s281 + $0x420] sm:$0xff]
      %v434 = vld [vmem:[%s281 + $0x428] sm:$0xff]
      %v435 = vld [vmem:[%s281 + $0x430] sm:$0xff]
      %v436 = vld [vmem:[%s281 + $0x438] sm:$0xff]
      %v437 = vld [vmem:[%s281 + $0x440] sm:$0xff]
      %v438 = vld [vmem:[%s281 + $0x448] sm:$0xff]
      %v439 = vld [vmem:[%s281 + $0x450] sm:$0xff]
      %v440 = vld [vmem:[%s281 + $0x458] sm:$0xff]
      %v441 = vld [vmem:[%s281 + $0x460] sm:$0xff]
      %v442 = vld [vmem:[%s281 + $0x468] sm:$0xff]
      %v443 = vld [vmem:[%s281 + $0x470] sm:$0xff]
      %v444 = vld [vmem:[%s281 + $0x478] sm:$0xff]
      %v445 = vld [vmem:[%s281 + $0x480] sm:$0xff]
      %v446 = vld [vmem:[%s281 + $0x488] sm:$0xff]
      %v447 = vld [vmem:[%s281 + $0x490] sm:$0xff]
      %v448 = vld [vmem:[%s281 + $0x498] sm:$0xff]
      %v449 = vld [vmem:[%s281 + $0x4a0] sm:$0xff]
      %v450 = vld [vmem:[%s281 + $0x4a8] sm:$0xff]
      %v451 = vld [vmem:[%s281 + $0x4b0] sm:$0xff]
      %v452 = vld [vmem:[%s281 + $0x4b8] sm:$0xff]
      %v453 = vld [vmem:[%s281 + $0x4c0] sm:$0xff]
      %v454 = vld [vmem:[%s281 + $0x4c8] sm:$0xff]
      %v455 = vld [vmem:[%s281 + $0x4d0] sm:$0xff]
      %v456 = vld [vmem:[%s281 + $0x4d8] sm:$0xff]
      %v457 = vld [vmem:[%s281 + $0x4e0] sm:$0xff]
      %v458 = vld [vmem:[%s281 + $0x4e8] sm:$0xff]
      %v459 = vld [vmem:[%s281 + $0x4f0] sm:$0xff]
      %v460 = vld [vmem:[%s281 + $0x4f8] sm:$0xff]
      %v461 = vld [vmem:[%s281 + $0x500] sm:$0xff]
      %v462 = vld [vmem:[%s281 + $0x508] sm:$0xff]
      %v463 = vld [vmem:[%s281 + $0x510] sm:$0xff]
      %v464 = vld [vmem:[%s281 + $0x518] sm:$0xff]
      %v465 = vld [vmem:[%s281 + $0x520] sm:$0xff]
      %v466 = vld [vmem:[%s281 + $0x528] sm:$0xff]
      %v467 = vld [vmem:[%s281 + $0x530] sm:$0xff]
      %v468 = vld [vmem:[%s281 + $0x538] sm:$0xff]
      %v469 = vld [vmem:[%s281 + $0x540] sm:$0xff]
      %v470 = vld [vmem:[%s281 + $0x548] sm:$0xff]
      %v471 = vld [vmem:[%s281 + $0x550] sm:$0xff]
      %v472 = vld [vmem:[%s281 + $0x558] sm:$0xff]
      %v473 = vld [vmem:[%s281 + $0x560] sm:$0xff]
      %v474 = vld [vmem:[%s281 + $0x568] sm:$0xff]
      %v475 = vld [vmem:[%s281 + $0x570] sm:$0xff]
      %v476 = vld [vmem:[%s281 + $0x578] sm:$0xff]
      %v477 = vld [vmem:[%s281 + $0x580] sm:$0xff]
      %v478 = vld [vmem:[%s281 + $0x588] sm:$0xff]
      %v479 = vld [vmem:[%s281 + $0x590] sm:$0xff]
      %v480 = vld [vmem:[%s281 + $0x598] sm:$0xff]
      %v481 = vld [vmem:[%s281 + $0x5a0] sm:$0xff]
      %v482 = vld [vmem:[%s281 + $0x5a8] sm:$0xff]
      %v483 = vld [vmem:[%s281 + $0x5b0] sm:$0xff]
      %v484 = vld [vmem:[%s281 + $0x5b8] sm:$0xff]
      %v485 = vld [vmem:[%s281 + $0x5c0] sm:$0xff]
      %v486 = vld [vmem:[%s281 + $0x5c8] sm:$0xff]
      %v487 = vld [vmem:[%s281 + $0x5d0] sm:$0xff]
      %v488 = vld [vmem:[%s281 + $0x5d8] sm:$0xff]
      %v489 = vld [vmem:[%s281 + $0x5e0] sm:$0xff]
      %v490 = vld [vmem:[%s281 + $0x5e8] sm:$0xff]
      %v491 = vld [vmem:[%s281 + $0x5f0] sm:$0xff]
      %v492 = vld [vmem:[%s281 + $0x5f8] sm:$0xff]
      %v493 = vld [vmem:[%s281 + $0x600] sm:$0xff]
      %v494 = vld [vmem:[%s281 + $0x608] sm:$0xff]
      %v495 = vld [vmem:[%s281 + $0x610] sm:$0xff]
      %v496 = vld [vmem:[%s281 + $0x618] sm:$0xff]
      %v497 = vld [vmem:[%s281 + $0x620] sm:$0xff]
      %v498 = vld [vmem:[%s281 + $0x628] sm:$0xff]
      %v499 = vld [vmem:[%s281 + $0x630] sm:$0xff]
      %v500 = vld [vmem:[%s281 + $0x638] sm:$0xff]
      %v501 = vld [vmem:[%s281 + $0x640] sm:$0xff]
      %v502 = vld [vmem:[%s281 + $0x648] sm:$0xff]
      %v503 = vld [vmem:[%s281 + $0x650] sm:$0xff]
      %v504 = vld [vmem:[%s281 + $0x658] sm:$0xff]
      %v505 = vld [vmem:[%s281 + $0x660] sm:$0xff]
      %v506 = vld [vmem:[%s281 + $0x668] sm:$0xff]
      %v507 = vld [vmem:[%s281 + $0x670] sm:$0xff]
      %v508 = vld [vmem:[%s281 + $0x678] sm:$0xff]
      %v509 = vld [vmem:[%s281 + $0x680] sm:$0xff]
      %v510 = vld [vmem:[%s281 + $0x688] sm:$0xff]
      %v511 = vld [vmem:[%s281 + $0x690] sm:$0xff]
      %v512 = vld [vmem:[%s281 + $0x698] sm:$0xff]
      %v513 = vld [vmem:[%s281 + $0x6a0] sm:$0xff]
      %v514 = vld [vmem:[%s281 + $0x6a8] sm:$0xff]
      %v515 = vld [vmem:[%s281 + $0x6b0] sm:$0xff]
      %v516 = vld [vmem:[%s281 + $0x6b8] sm:$0xff]
      %v517 = vld [vmem:[%s281 + $0x6c0] sm:$0xff]
      %v518 = vld [vmem:[%s281 + $0x6c8] sm:$0xff]
      %v519 = vld [vmem:[%s281 + $0x6d0] sm:$0xff]
      %v520 = vld [vmem:[%s281 + $0x6d8] sm:$0xff]
      %v521 = vld [vmem:[%s281 + $0x6e0] sm:$0xff]
      %v522 = vld [vmem:[%s281 + $0x6e8] sm:$0xff]
      %v523 = vld [vmem:[%s281 + $0x6f0] sm:$0xff]
      %v524 = vld [vmem:[%s281 + $0x6f8] sm:$0xff]
      %v525 = vld [vmem:[%s281 + $0x700] sm:$0xff]
      %v526 = vld [vmem:[%s281 + $0x708] sm:$0xff]
      %v527 = vld [vmem:[%s281 + $0x710] sm:$0xff]
      %v528 = vld [vmem:[%s281 + $0x718] sm:$0xff]
      %v529 = vld [vmem:[%s281 + $0x720] sm:$0xff]
      %v530 = vld [vmem:[%s281 + $0x728] sm:$0xff]
      %v531 = vld [vmem:[%s281 + $0x730] sm:$0xff]
      %v532 = vld [vmem:[%s281 + $0x738] sm:$0xff]
      %v533 = vld [vmem:[%s281 + $0x740] sm:$0xff]
      %v534 = vld [vmem:[%s281 + $0x748] sm:$0xff]
      %v535 = vld [vmem:[%s281 + $0x750] sm:$0xff]
      %v536 = vld [vmem:[%s281 + $0x758] sm:$0xff]
      %v537 = vld [vmem:[%s281 + $0x760] sm:$0xff]
      %v538 = vld [vmem:[%s281 + $0x768] sm:$0xff]
      %v539 = vld [vmem:[%s281 + $0x770] sm:$0xff]
      %v540 = vld [vmem:[%s281 + $0x778] sm:$0xff]
      %v541 = vld [vmem:[%s281 + $0x780] sm:$0xff]
      %v542 = vld [vmem:[%s281 + $0x788] sm:$0xff]
      %v543 = vld [vmem:[%s281 + $0x790] sm:$0xff]
      %v544 = vld [vmem:[%s281 + $0x798] sm:$0xff]
      %v545 = vld [vmem:[%s281 + $0x7a0] sm:$0xff]
      %v546 = vld [vmem:[%s281 + $0x7a8] sm:$0xff]
      %v547 = vld [vmem:[%s281 + $0x7b0] sm:$0xff]
      %v548 = vld [vmem:[%s281 + $0x7b8] sm:$0xff]
      %v549 = vld [vmem:[%s281 + $0x7c0] sm:$0xff]
      %v550 = vld [vmem:[%s281 + $0x7c8] sm:$0xff]
      %v551 = vld [vmem:[%s281 + $0x7d0] sm:$0xff]
      %v552 = vld [vmem:[%s281 + $0x7d8] sm:$0xff]
      %v553 = vld [vmem:[%s281 + $0x7e0] sm:$0xff]
      %v554 = vld [vmem:[%s281 + $0x7e8] sm:$0xff]
      %v555 = vld [vmem:[%s281 + $0x7f0] sm:$0xff]
      %v556 = vld [vmem:[%s281 + $0x7f8] sm:$0xff]
      %v557 = vld [vmem:[%s287] sm:$0xf]
      %v558 = vld [vmem:[%s287 + $0x4] sm:$0xf]
      %v559 = vld [vmem:[%s287 + $0x8] sm:$0xf]
      %v560 = vld [vmem:[%s287 + $0xc] sm:$0xf]
      %v561 = vld [vmem:[%s287 + $0x10] sm:$0xf]
      %v562 = vld [vmem:[%s287 + $0x14] sm:$0xf]
      %v563 = vld [vmem:[%s287 + $0x18] sm:$0xf]
      %v564 = vld [vmem:[%s287 + $0x1c] sm:$0xf]
      %v565 = vld [vmem:[%s287 + $0x20] sm:$0xf]
      %v566 = vld [vmem:[%s287 + $0x24] sm:$0xf]
      %v567 = vld [vmem:[%s287 + $0x28] sm:$0xf]
      %v568 = vld [vmem:[%s287 + $0x2c] sm:$0xf]
      %v569 = vld [vmem:[%s287 + $0x30] sm:$0xf]
      %v570 = vld [vmem:[%s287 + $0x34] sm:$0xf]
      %v571 = vld [vmem:[%s287 + $0x38] sm:$0xf]
      %v572 = vld [vmem:[%s287 + $0x3c] sm:$0xf]
      %v573 = vld [vmem:[%s287 + $0x40] sm:$0xf]
      %v574 = vld [vmem:[%s287 + $0x44] sm:$0xf]
      %v575 = vld [vmem:[%s287 + $0x48] sm:$0xf]
      %v576 = vld [vmem:[%s287 + $0x4c] sm:$0xf]
      %v577 = vld [vmem:[%s287 + $0x50] sm:$0xf]
      %v578 = vld [vmem:[%s287 + $0x54] sm:$0xf]
      %v579 = vld [vmem:[%s287 + $0x58] sm:$0xf]
      %v580 = vld [vmem:[%s287 + $0x5c] sm:$0xf]
      %v581 = vld [vmem:[%s287 + $0x60] sm:$0xf]
      %v582 = vld [vmem:[%s287 + $0x64] sm:$0xf]
      %v583 = vld [vmem:[%s287 + $0x68] sm:$0xf]
      %v584 = vld [vmem:[%s287 + $0x6c] sm:$0xf]
      %v585 = vld [vmem:[%s287 + $0x70] sm:$0xf]
      %v586 = vld [vmem:[%s287 + $0x74] sm:$0xf]
      %v587 = vld [vmem:[%s287 + $0x78] sm:$0xf]
      %v588 = vld [vmem:[%s287 + $0x7c] sm:$0xf]
      %v589 = vld [vmem:[%s290] sm:$0x1]
      %v591 = vlaneseq
      %v592 = vshrl.u32 %v591, 7
      %v593 = vsub.s32 0, %v592
      %v594 = vrot.slane %v589, %v593
      %v852 = vunpack.c.l.b16 %v301
      %v853 = vunpack.c.h.b16 %v301
      %v854 = vunpack.c.l.b16 %v302
      %v855 = vunpack.c.h.b16 %v302
      %v856 = vunpack.c.l.b16 %v303
      %v857 = vunpack.c.h.b16 %v303
      %v858 = vunpack.c.l.b16 %v304
      %v859 = vunpack.c.h.b16 %v304
      %v860 = vunpack.c.l.b16 %v305
      %v861 = vunpack.c.h.b16 %v305
      %v862 = vunpack.c.l.b16 %v306
      %v863 = vunpack.c.h.b16 %v306
      %v864 = vunpack.c.l.b16 %v307
      %v865 = vunpack.c.h.b16 %v307
      %v866 = vunpack.c.l.b16 %v308
      %v867 = vunpack.c.h.b16 %v308
      %v868 = vunpack.c.l.b16 %v309
      %v869 = vunpack.c.h.b16 %v309
      %v870 = vunpack.c.l.b16 %v310
      %v871 = vunpack.c.h.b16 %v310
      %v872 = vunpack.c.l.b16 %v311
      %v873 = vunpack.c.h.b16 %v311
      %v874 = vunpack.c.l.b16 %v312
      %v875 = vunpack.c.h.b16 %v312
      %v876 = vunpack.c.l.b16 %v313
      %v877 = vunpack.c.h.b16 %v313
      %v878 = vunpack.c.l.b16 %v314
      %v879 = vunpack.c.h.b16 %v314
      %v880 = vunpack.c.l.b16 %v315
      %v881 = vunpack.c.h.b16 %v315
      %v882 = vunpack.c.l.b16 %v316
      %v883 = vunpack.c.h.b16 %v316
      %v884 = vunpack.c.l.b16 %v317
      %v885 = vunpack.c.h.b16 %v317
      %v886 = vunpack.c.l.b16 %v318
      %v887 = vunpack.c.h.b16 %v318
      %v888 = vunpack.c.l.b16 %v319
      %v889 = vunpack.c.h.b16 %v319
      %v890 = vunpack.c.l.b16 %v320
      %v891 = vunpack.c.h.b16 %v320
      %v892 = vunpack.c.l.b16 %v321
      %v893 = vunpack.c.h.b16 %v321
      %v894 = vunpack.c.l.b16 %v322
      %v895 = vunpack.c.h.b16 %v322
      %v896 = vunpack.c.l.b16 %v323
      %v897 = vunpack.c.h.b16 %v323
      %v898 = vunpack.c.l.b16 %v324
      %v899 = vunpack.c.h.b16 %v324
      %v900 = vunpack.c.l.b16 %v325
      %v901 = vunpack.c.h.b16 %v325
      %v902 = vunpack.c.l.b16 %v326
      %v903 = vunpack.c.h.b16 %v326
      %v904 = vunpack.c.l.b16 %v327
      %v905 = vunpack.c.h.b16 %v327
      %v906 = vunpack.c.l.b16 %v328
      %v907 = vunpack.c.h.b16 %v328
      %v908 = vunpack.c.l.b16 %v329
      %v909 = vunpack.c.h.b16 %v329
      %v910 = vunpack.c.l.b16 %v330
      %v911 = vunpack.c.h.b16 %v330
      %v912 = vunpack.c.l.b16 %v331
      %v913 = vunpack.c.h.b16 %v331
      %v914 = vunpack.c.l.b16 %v332
      %v915 = vunpack.c.h.b16 %v332
      %v916 = vunpack.c.l.b16 %v333
      %v917 = vunpack.c.h.b16 %v333
      %v918 = vunpack.c.l.b16 %v334
      %v919 = vunpack.c.h.b16 %v334
      %v920 = vunpack.c.l.b16 %v335
      %v921 = vunpack.c.h.b16 %v335
      %v922 = vunpack.c.l.b16 %v336
      %v923 = vunpack.c.h.b16 %v336
      %v924 = vunpack.c.l.b16 %v337
      %v925 = vunpack.c.h.b16 %v337
      %v926 = vunpack.c.l.b16 %v338
      %v927 = vunpack.c.h.b16 %v338
      %v928 = vunpack.c.l.b16 %v339
      %v929 = vunpack.c.h.b16 %v339
      %v930 = vunpack.c.l.b16 %v340
      %v931 = vunpack.c.h.b16 %v340
      %v932 = vunpack.c.l.b16 %v341
      %v933 = vunpack.c.h.b16 %v341
      %v934 = vunpack.c.l.b16 %v342
      %v935 = vunpack.c.h.b16 %v342
      %v936 = vunpack.c.l.b16 %v343
      %v937 = vunpack.c.h.b16 %v343
      %v938 = vunpack.c.l.b16 %v344
      %v939 = vunpack.c.h.b16 %v344
      %v940 = vunpack.c.l.b16 %v345
      %v941 = vunpack.c.h.b16 %v345
      %v942 = vunpack.c.l.b16 %v346
      %v943 = vunpack.c.h.b16 %v346
      %v944 = vunpack.c.l.b16 %v347
      %v945 = vunpack.c.h.b16 %v347
      %v946 = vunpack.c.l.b16 %v348
      %v947 = vunpack.c.h.b16 %v348
      %v948 = vunpack.c.l.b16 %v349
      %v949 = vunpack.c.h.b16 %v349
      %v950 = vunpack.c.l.b16 %v350
      %v951 = vunpack.c.h.b16 %v350
      %v952 = vunpack.c.l.b16 %v351
      %v953 = vunpack.c.h.b16 %v351
      %v954 = vunpack.c.l.b16 %v352
      %v955 = vunpack.c.h.b16 %v352
      %v956 = vunpack.c.l.b16 %v353
      %v957 = vunpack.c.h.b16 %v353
      %v958 = vunpack.c.l.b16 %v354
      %v959 = vunpack.c.h.b16 %v354
      %v960 = vunpack.c.l.b16 %v355
      %v961 = vunpack.c.h.b16 %v355
      %v962 = vunpack.c.l.b16 %v356
      %v963 = vunpack.c.h.b16 %v356
      %v964 = vunpack.c.l.b16 %v357
      %v965 = vunpack.c.h.b16 %v357
      %v966 = vunpack.c.l.b16 %v358
      %v967 = vunpack.c.h.b16 %v358
      %v968 = vunpack.c.l.b16 %v359
      %v969 = vunpack.c.h.b16 %v359
      %v970 = vunpack.c.l.b16 %v360
      %v971 = vunpack.c.h.b16 %v360
      %v972 = vunpack.c.l.b16 %v361
      %v973 = vunpack.c.h.b16 %v361
      %v974 = vunpack.c.l.b16 %v362
      %v975 = vunpack.c.h.b16 %v362
      %v976 = vunpack.c.l.b16 %v363
      %v977 = vunpack.c.h.b16 %v363
      %v978 = vunpack.c.l.b16 %v364
      %v979 = vunpack.c.h.b16 %v364
      %v980 = vunpack.c.l.b16 %v365
      %v981 = vunpack.c.h.b16 %v365
      %v982 = vunpack.c.l.b16 %v366
      %v983 = vunpack.c.h.b16 %v366
      %v984 = vunpack.c.l.b16 %v367
      %v985 = vunpack.c.h.b16 %v367
      %v986 = vunpack.c.l.b16 %v368
      %v987 = vunpack.c.h.b16 %v368
      %v988 = vunpack.c.l.b16 %v369
      %v989 = vunpack.c.h.b16 %v369
      %v990 = vunpack.c.l.b16 %v370
      %v991 = vunpack.c.h.b16 %v370
      %v992 = vunpack.c.l.b16 %v371
      %v993 = vunpack.c.h.b16 %v371
      %v994 = vunpack.c.l.b16 %v372
      %v995 = vunpack.c.h.b16 %v372
      %v996 = vunpack.c.l.b16 %v373
      %v997 = vunpack.c.h.b16 %v373
      %v998 = vunpack.c.l.b16 %v374
      %v999 = vunpack.c.h.b16 %v374
      %v1000 = vunpack.c.l.b16 %v375
      %v1001 = vunpack.c.h.b16 %v375
      %v1002 = vunpack.c.l.b16 %v376
      %v1003 = vunpack.c.h.b16 %v376
      %v1004 = vunpack.c.l.b16 %v377
      %v1005 = vunpack.c.h.b16 %v377
      %v1006 = vunpack.c.l.b16 %v378
      %v1007 = vunpack.c.h.b16 %v378
      %v1008 = vunpack.c.l.b16 %v379
      %v1009 = vunpack.c.h.b16 %v379
      %v1010 = vunpack.c.l.b16 %v380
      %v1011 = vunpack.c.h.b16 %v380
      %v1012 = vunpack.c.l.b16 %v381
      %v1013 = vunpack.c.h.b16 %v381
      %v1014 = vunpack.c.l.b16 %v382
      %v1015 = vunpack.c.h.b16 %v382
      %v1016 = vunpack.c.l.b16 %v383
      %v1017 = vunpack.c.h.b16 %v383
      %v1018 = vunpack.c.l.b16 %v384
      %v1019 = vunpack.c.h.b16 %v384
      %v1020 = vunpack.c.l.b16 %v385
      %v1021 = vunpack.c.h.b16 %v385
      %v1022 = vunpack.c.l.b16 %v386
      %v1023 = vunpack.c.h.b16 %v386
      %v1024 = vunpack.c.l.b16 %v387
      %v1025 = vunpack.c.h.b16 %v387
      %v1026 = vunpack.c.l.b16 %v388
      %v1027 = vunpack.c.h.b16 %v388
      %v1028 = vunpack.c.l.b16 %v389
      %v1029 = vunpack.c.h.b16 %v389
      %v1030 = vunpack.c.l.b16 %v390
      %v1031 = vunpack.c.h.b16 %v390
      %v1032 = vunpack.c.l.b16 %v391
      %v1033 = vunpack.c.h.b16 %v391
      %v1034 = vunpack.c.l.b16 %v392
      %v1035 = vunpack.c.h.b16 %v392
      %v1036 = vunpack.c.l.b16 %v393
      %v1037 = vunpack.c.h.b16 %v393
      %v1038 = vunpack.c.l.b16 %v394
      %v1039 = vunpack.c.h.b16 %v394
      %v1040 = vunpack.c.l.b16 %v395
      %v1041 = vunpack.c.h.b16 %v395
      %v1042 = vunpack.c.l.b16 %v396
      %v1043 = vunpack.c.h.b16 %v396
      %v1044 = vunpack.c.l.b16 %v397
      %v1045 = vunpack.c.h.b16 %v397
      %v1046 = vunpack.c.l.b16 %v398
      %v1047 = vunpack.c.h.b16 %v398
      %v1048 = vunpack.c.l.b16 %v399
      %v1049 = vunpack.c.h.b16 %v399
      %v1050 = vunpack.c.l.b16 %v400
      %v1051 = vunpack.c.h.b16 %v400
      %v1052 = vunpack.c.l.b16 %v401
      %v1053 = vunpack.c.h.b16 %v401
      %v1054 = vunpack.c.l.b16 %v402
      %v1055 = vunpack.c.h.b16 %v402
      %v1056 = vunpack.c.l.b16 %v403
      %v1057 = vunpack.c.h.b16 %v403
      %v1058 = vunpack.c.l.b16 %v404
      %v1059 = vunpack.c.h.b16 %v404
      %v1060 = vunpack.c.l.b16 %v405
      %v1061 = vunpack.c.h.b16 %v405
      %v1062 = vunpack.c.l.b16 %v406
      %v1063 = vunpack.c.h.b16 %v406
      %v1064 = vunpack.c.l.b16 %v407
      %v1065 = vunpack.c.h.b16 %v407
      %v1066 = vunpack.c.l.b16 %v408
      %v1067 = vunpack.c.h.b16 %v408
      %v1068 = vunpack.c.l.b16 %v409
      %v1069 = vunpack.c.h.b16 %v409
      %v1070 = vunpack.c.l.b16 %v410
      %v1071 = vunpack.c.h.b16 %v410
      %v1072 = vunpack.c.l.b16 %v411
      %v1073 = vunpack.c.h.b16 %v411
      %v1074 = vunpack.c.l.b16 %v412
      %v1075 = vunpack.c.h.b16 %v412
      %v1076 = vunpack.c.l.b16 %v413
      %v1077 = vunpack.c.h.b16 %v413
      %v1078 = vunpack.c.l.b16 %v414
      %v1079 = vunpack.c.h.b16 %v414
      %v1080 = vunpack.c.l.b16 %v415
      %v1081 = vunpack.c.h.b16 %v415
      %v1082 = vunpack.c.l.b16 %v416
      %v1083 = vunpack.c.h.b16 %v416
      %v1084 = vunpack.c.l.b16 %v417
      %v1085 = vunpack.c.h.b16 %v417
      %v1086 = vunpack.c.l.b16 %v418
      %v1087 = vunpack.c.h.b16 %v418
      %v1088 = vunpack.c.l.b16 %v419
      %v1089 = vunpack.c.h.b16 %v419
      %v1090 = vunpack.c.l.b16 %v420
      %v1091 = vunpack.c.h.b16 %v420
      %v1092 = vunpack.c.l.b16 %v421
      %v1093 = vunpack.c.h.b16 %v421
      %v1094 = vunpack.c.l.b16 %v422
      %v1095 = vunpack.c.h.b16 %v422
      %v1096 = vunpack.c.l.b16 %v423
      %v1097 = vunpack.c.h.b16 %v423
      %v1098 = vunpack.c.l.b16 %v424
      %v1099 = vunpack.c.h.b16 %v424
      %v1100 = vunpack.c.l.b16 %v425
      %v1101 = vunpack.c.h.b16 %v425
      %v1102 = vunpack.c.l.b16 %v426
      %v1103 = vunpack.c.h.b16 %v426
      %v1104 = vunpack.c.l.b16 %v427
      %v1105 = vunpack.c.h.b16 %v427
      %v1106 = vunpack.c.l.b16 %v428
      %v1107 = vunpack.c.h.b16 %v428
      %v1108 = vunpack.c.l.b16 %v429
      %v1109 = vunpack.c.h.b16 %v429
      %v1110 = vunpack.c.l.b16 %v430
      %v1111 = vunpack.c.h.b16 %v430
      %v1112 = vunpack.c.l.b16 %v431
      %v1113 = vunpack.c.h.b16 %v431
      %v1114 = vunpack.c.l.b16 %v432
      %v1115 = vunpack.c.h.b16 %v432
      %v1116 = vunpack.c.l.b16 %v433
      %v1117 = vunpack.c.h.b16 %v433
      %v1118 = vunpack.c.l.b16 %v434
      %v1119 = vunpack.c.h.b16 %v434
      %v1120 = vunpack.c.l.b16 %v435
      %v1121 = vunpack.c.h.b16 %v435
      %v1122 = vunpack.c.l.b16 %v436
      %v1123 = vunpack.c.h.b16 %v436
      %v1124 = vunpack.c.l.b16 %v437
      %v1125 = vunpack.c.h.b16 %v437
      %v1126 = vunpack.c.l.b16 %v438
      %v1127 = vunpack.c.h.b16 %v438
      %v1128 = vunpack.c.l.b16 %v439
      %v1129 = vunpack.c.h.b16 %v439
      %v1130 = vunpack.c.l.b16 %v440
      %v1131 = vunpack.c.h.b16 %v440
      %v1132 = vunpack.c.l.b16 %v441
      %v1133 = vunpack.c.h.b16 %v441
      %v1134 = vunpack.c.l.b16 %v442
      %v1135 = vunpack.c.h.b16 %v442
      %v1136 = vunpack.c.l.b16 %v443
      %v1137 = vunpack.c.h.b16 %v443
      %v1138 = vunpack.c.l.b16 %v444
      %v1139 = vunpack.c.h.b16 %v444
      %v1140 = vunpack.c.l.b16 %v445
      %v1141 = vunpack.c.h.b16 %v445
      %v1142 = vunpack.c.l.b16 %v446
      %v1143 = vunpack.c.h.b16 %v446
      %v1144 = vunpack.c.l.b16 %v447
      %v1145 = vunpack.c.h.b16 %v447
      %v1146 = vunpack.c.l.b16 %v448
      %v1147 = vunpack.c.h.b16 %v448
      %v1148 = vunpack.c.l.b16 %v449
      %v1149 = vunpack.c.h.b16 %v449
      %v1150 = vunpack.c.l.b16 %v450
      %v1151 = vunpack.c.h.b16 %v450
      %v1152 = vunpack.c.l.b16 %v451
      %v1153 = vunpack.c.h.b16 %v451
      %v1154 = vunpack.c.l.b16 %v452
      %v1155 = vunpack.c.h.b16 %v452
      %v1156 = vunpack.c.l.b16 %v453
      %v1157 = vunpack.c.h.b16 %v453
      %v1158 = vunpack.c.l.b16 %v454
      %v1159 = vunpack.c.h.b16 %v454
      %v1160 = vunpack.c.l.b16 %v455
      %v1161 = vunpack.c.h.b16 %v455
      %v1162 = vunpack.c.l.b16 %v456
      %v1163 = vunpack.c.h.b16 %v456
      %v1164 = vunpack.c.l.b16 %v457
      %v1165 = vunpack.c.h.b16 %v457
      %v1166 = vunpack.c.l.b16 %v458
      %v1167 = vunpack.c.h.b16 %v458
      %v1168 = vunpack.c.l.b16 %v459
      %v1169 = vunpack.c.h.b16 %v459
      %v1170 = vunpack.c.l.b16 %v460
      %v1171 = vunpack.c.h.b16 %v460
      %v1172 = vunpack.c.l.b16 %v461
      %v1173 = vunpack.c.h.b16 %v461
      %v1174 = vunpack.c.l.b16 %v462
      %v1175 = vunpack.c.h.b16 %v462
      %v1176 = vunpack.c.l.b16 %v463
      %v1177 = vunpack.c.h.b16 %v463
      %v1178 = vunpack.c.l.b16 %v464
      %v1179 = vunpack.c.h.b16 %v464
      %v1180 = vunpack.c.l.b16 %v465
      %v1181 = vunpack.c.h.b16 %v465
      %v1182 = vunpack.c.l.b16 %v466
      %v1183 = vunpack.c.h.b16 %v466
      %v1184 = vunpack.c.l.b16 %v467
      %v1185 = vunpack.c.h.b16 %v467
      %v1186 = vunpack.c.l.b16 %v468
      %v1187 = vunpack.c.h.b16 %v468
      %v1188 = vunpack.c.l.b16 %v469
      %v1189 = vunpack.c.h.b16 %v469
      %v1190 = vunpack.c.l.b16 %v470
      %v1191 = vunpack.c.h.b16 %v470
      %v1192 = vunpack.c.l.b16 %v471
      %v1193 = vunpack.c.h.b16 %v471
      %v1194 = vunpack.c.l.b16 %v472
      %v1195 = vunpack.c.h.b16 %v472
      %v1196 = vunpack.c.l.b16 %v473
      %v1197 = vunpack.c.h.b16 %v473
      %v1198 = vunpack.c.l.b16 %v474
      %v1199 = vunpack.c.h.b16 %v474
      %v1200 = vunpack.c.l.b16 %v475
      %v1201 = vunpack.c.h.b16 %v475
      %v1202 = vunpack.c.l.b16 %v476
      %v1203 = vunpack.c.h.b16 %v476
      %v1204 = vunpack.c.l.b16 %v477
      %v1205 = vunpack.c.h.b16 %v477
      %v1206 = vunpack.c.l.b16 %v478
      %v1207 = vunpack.c.h.b16 %v478
      %v1208 = vunpack.c.l.b16 %v479
      %v1209 = vunpack.c.h.b16 %v479
      %v1210 = vunpack.c.l.b16 %v480
      %v1211 = vunpack.c.h.b16 %v480
      %v1212 = vunpack.c.l.b16 %v481
      %v1213 = vunpack.c.h.b16 %v481
      %v1214 = vunpack.c.l.b16 %v482
      %v1215 = vunpack.c.h.b16 %v482
      %v1216 = vunpack.c.l.b16 %v483
      %v1217 = vunpack.c.h.b16 %v483
      %v1218 = vunpack.c.l.b16 %v484
      %v1219 = vunpack.c.h.b16 %v484
      %v1220 = vunpack.c.l.b16 %v485
      %v1221 = vunpack.c.h.b16 %v485
      %v1222 = vunpack.c.l.b16 %v486
      %v1223 = vunpack.c.h.b16 %v486
      %v1224 = vunpack.c.l.b16 %v487
      %v1225 = vunpack.c.h.b16 %v487
      %v1226 = vunpack.c.l.b16 %v488
      %v1227 = vunpack.c.h.b16 %v488
      %v1228 = vunpack.c.l.b16 %v489
      %v1229 = vunpack.c.h.b16 %v489
      %v1230 = vunpack.c.l.b16 %v490
      %v1231 = vunpack.c.h.b16 %v490
      %v1232 = vunpack.c.l.b16 %v491
      %v1233 = vunpack.c.h.b16 %v491
      %v1234 = vunpack.c.l.b16 %v492
      %v1235 = vunpack.c.h.b16 %v492
      %v1236 = vunpack.c.l.b16 %v493
      %v1237 = vunpack.c.h.b16 %v493
      %v1238 = vunpack.c.l.b16 %v494
      %v1239 = vunpack.c.h.b16 %v494
      %v1240 = vunpack.c.l.b16 %v495
      %v1241 = vunpack.c.h.b16 %v495
      %v1242 = vunpack.c.l.b16 %v496
      %v1243 = vunpack.c.h.b16 %v496
      %v1244 = vunpack.c.l.b16 %v497
      %v1245 = vunpack.c.h.b16 %v497
      %v1246 = vunpack.c.l.b16 %v498
      %v1247 = vunpack.c.h.b16 %v498
      %v1248 = vunpack.c.l.b16 %v499
      %v1249 = vunpack.c.h.b16 %v499
      %v1250 = vunpack.c.l.b16 %v500
      %v1251 = vunpack.c.h.b16 %v500
      %v1252 = vunpack.c.l.b16 %v501
      %v1253 = vunpack.c.h.b16 %v501
      %v1254 = vunpack.c.l.b16 %v502
      %v1255 = vunpack.c.h.b16 %v502
      %v1256 = vunpack.c.l.b16 %v503
      %v1257 = vunpack.c.h.b16 %v503
      %v1258 = vunpack.c.l.b16 %v504
      %v1259 = vunpack.c.h.b16 %v504
      %v1260 = vunpack.c.l.b16 %v505
      %v1261 = vunpack.c.h.b16 %v505
      %v1262 = vunpack.c.l.b16 %v506
      %v1263 = vunpack.c.h.b16 %v506
      %v1264 = vunpack.c.l.b16 %v507
      %v1265 = vunpack.c.h.b16 %v507
      %v1266 = vunpack.c.l.b16 %v508
      %v1267 = vunpack.c.h.b16 %v508
      %v1268 = vunpack.c.l.b16 %v509
      %v1269 = vunpack.c.h.b16 %v509
      %v1270 = vunpack.c.l.b16 %v510
      %v1271 = vunpack.c.h.b16 %v510
      %v1272 = vunpack.c.l.b16 %v511
      %v1273 = vunpack.c.h.b16 %v511
      %v1274 = vunpack.c.l.b16 %v512
      %v1275 = vunpack.c.h.b16 %v512
      %v1276 = vunpack.c.l.b16 %v513
      %v1277 = vunpack.c.h.b16 %v513
      %v1278 = vunpack.c.l.b16 %v514
      %v1279 = vunpack.c.h.b16 %v514
      %v1280 = vunpack.c.l.b16 %v515
      %v1281 = vunpack.c.h.b16 %v515
      %v1282 = vunpack.c.l.b16 %v516
      %v1283 = vunpack.c.h.b16 %v516
      %v1284 = vunpack.c.l.b16 %v517
      %v1285 = vunpack.c.h.b16 %v517
      %v1286 = vunpack.c.l.b16 %v518
      %v1287 = vunpack.c.h.b16 %v518
      %v1288 = vunpack.c.l.b16 %v519
      %v1289 = vunpack.c.h.b16 %v519
      %v1290 = vunpack.c.l.b16 %v520
      %v1291 = vunpack.c.h.b16 %v520
      %v1292 = vunpack.c.l.b16 %v521
      %v1293 = vunpack.c.h.b16 %v521
      %v1294 = vunpack.c.l.b16 %v522
      %v1295 = vunpack.c.h.b16 %v522
      %v1296 = vunpack.c.l.b16 %v523
      %v1297 = vunpack.c.h.b16 %v523
      %v1298 = vunpack.c.l.b16 %v524
      %v1299 = vunpack.c.h.b16 %v524
      %v1300 = vunpack.c.l.b16 %v525
      %v1301 = vunpack.c.h.b16 %v525
      %v1302 = vunpack.c.l.b16 %v526
      %v1303 = vunpack.c.h.b16 %v526
      %v1304 = vunpack.c.l.b16 %v527
      %v1305 = vunpack.c.h.b16 %v527
      %v1306 = vunpack.c.l.b16 %v528
      %v1307 = vunpack.c.h.b16 %v528
      %v1308 = vunpack.c.l.b16 %v529
      %v1309 = vunpack.c.h.b16 %v529
      %v1310 = vunpack.c.l.b16 %v530
      %v1311 = vunpack.c.h.b16 %v530
      %v1312 = vunpack.c.l.b16 %v531
      %v1313 = vunpack.c.h.b16 %v531
      %v1314 = vunpack.c.l.b16 %v532
      %v1315 = vunpack.c.h.b16 %v532
      %v1316 = vunpack.c.l.b16 %v533
      %v1317 = vunpack.c.h.b16 %v533
      %v1318 = vunpack.c.l.b16 %v534
      %v1319 = vunpack.c.h.b16 %v534
      %v1320 = vunpack.c.l.b16 %v535
      %v1321 = vunpack.c.h.b16 %v535
      %v1322 = vunpack.c.l.b16 %v536
      %v1323 = vunpack.c.h.b16 %v536
      %v1324 = vunpack.c.l.b16 %v537
      %v1325 = vunpack.c.h.b16 %v537
      %v1326 = vunpack.c.l.b16 %v538
      %v1327 = vunpack.c.h.b16 %v538
      %v1328 = vunpack.c.l.b16 %v539
      %v1329 = vunpack.c.h.b16 %v539
      %v1330 = vunpack.c.l.b16 %v540
      %v1331 = vunpack.c.h.b16 %v540
      %v1332 = vunpack.c.l.b16 %v541
      %v1333 = vunpack.c.h.b16 %v541
      %v1334 = vunpack.c.l.b16 %v542
      %v1335 = vunpack.c.h.b16 %v542
      %v1336 = vunpack.c.l.b16 %v543
      %v1337 = vunpack.c.h.b16 %v543
      %v1338 = vunpack.c.l.b16 %v544
      %v1339 = vunpack.c.h.b16 %v544
      %v1340 = vunpack.c.l.b16 %v545
      %v1341 = vunpack.c.h.b16 %v545
      %v1342 = vunpack.c.l.b16 %v546
      %v1343 = vunpack.c.h.b16 %v546
      %v1344 = vunpack.c.l.b16 %v547
      %v1345 = vunpack.c.h.b16 %v547
      %v1346 = vunpack.c.l.b16 %v548
      %v1347 = vunpack.c.h.b16 %v548
      %v1348 = vunpack.c.l.b16 %v549
      %v1349 = vunpack.c.h.b16 %v549
      %v1350 = vunpack.c.l.b16 %v550
      %v1351 = vunpack.c.h.b16 %v550
      %v1352 = vunpack.c.l.b16 %v551
      %v1353 = vunpack.c.h.b16 %v551
      %v1354 = vunpack.c.l.b16 %v552
      %v1355 = vunpack.c.h.b16 %v552
      %v1356 = vunpack.c.l.b16 %v553
      %v1357 = vunpack.c.h.b16 %v553
      %v1358 = vunpack.c.l.b16 %v554
      %v1359 = vunpack.c.h.b16 %v554
      %v1360 = vunpack.c.l.b16 %v555
      %v1361 = vunpack.c.h.b16 %v555
      %v1362 = vunpack.c.l.b16 %v556
      %v1363 = vunpack.c.h.b16 %v556
      %v1364 = vpack.c.b16 %v854, %v852
      %v1365 = vpack.c.b16 %v855, %v853
      %v1366 = vpack.c.b16 %v858, %v856
      %v1367 = vpack.c.b16 %v859, %v857
      %v1368 = vpack.c.b16 %v862, %v860
      %v1369 = vpack.c.b16 %v863, %v861
      %v1370 = vpack.c.b16 %v866, %v864
      %v1371 = vpack.c.b16 %v867, %v865
      %v1372 = vpack.c.b16 %v870, %v868
      %v1373 = vpack.c.b16 %v871, %v869
      %v1374 = vpack.c.b16 %v874, %v872
      %v1375 = vpack.c.b16 %v875, %v873
      %v1376 = vpack.c.b16 %v878, %v876
      %v1377 = vpack.c.b16 %v879, %v877
      %v1378 = vpack.c.b16 %v882, %v880
      %v1379 = vpack.c.b16 %v883, %v881
      %v1380 = vpack.c.b16 %v886, %v884
      %v1381 = vpack.c.b16 %v887, %v885
      %v1382 = vpack.c.b16 %v890, %v888
      %v1383 = vpack.c.b16 %v891, %v889
      %v1384 = vpack.c.b16 %v894, %v892
      %v1385 = vpack.c.b16 %v895, %v893
      %v1386 = vpack.c.b16 %v898, %v896
      %v1387 = vpack.c.b16 %v899, %v897
      %v1388 = vpack.c.b16 %v902, %v900
      %v1389 = vpack.c.b16 %v903, %v901
      %v1390 = vpack.c.b16 %v906, %v904
      %v1391 = vpack.c.b16 %v907, %v905
      %v1392 = vpack.c.b16 %v910, %v908
      %v1393 = vpack.c.b16 %v911, %v909
      %v1394 = vpack.c.b16 %v914, %v912
      %v1395 = vpack.c.b16 %v915, %v913
      %v1396 = vpack.c.b16 %v918, %v916
      %v1397 = vpack.c.b16 %v919, %v917
      %v1398 = vpack.c.b16 %v922, %v920
      %v1399 = vpack.c.b16 %v923, %v921
      %v1400 = vpack.c.b16 %v926, %v924
      %v1401 = vpack.c.b16 %v927, %v925
      %v1402 = vpack.c.b16 %v930, %v928
      %v1403 = vpack.c.b16 %v931, %v929
      %v1404 = vpack.c.b16 %v934, %v932
      %v1405 = vpack.c.b16 %v935, %v933
      %v1406 = vpack.c.b16 %v938, %v936
      %v1407 = vpack.c.b16 %v939, %v937
      %v1408 = vpack.c.b16 %v942, %v940
      %v1409 = vpack.c.b16 %v943, %v941
      %v1410 = vpack.c.b16 %v946, %v944
      %v1411 = vpack.c.b16 %v947, %v945
      %v1412 = vpack.c.b16 %v950, %v948
      %v1413 = vpack.c.b16 %v951, %v949
      %v1414 = vpack.c.b16 %v954, %v952
      %v1415 = vpack.c.b16 %v955, %v953
      %v1416 = vpack.c.b16 %v958, %v956
      %v1417 = vpack.c.b16 %v959, %v957
      %v1418 = vpack.c.b16 %v962, %v960
      %v1419 = vpack.c.b16 %v963, %v961
      %v1420 = vpack.c.b16 %v966, %v964
      %v1421 = vpack.c.b16 %v967, %v965
      %v1422 = vpack.c.b16 %v970, %v968
      %v1423 = vpack.c.b16 %v971, %v969
      %v1424 = vpack.c.b16 %v974, %v972
      %v1425 = vpack.c.b16 %v975, %v973
      %v1426 = vpack.c.b16 %v978, %v976
      %v1427 = vpack.c.b16 %v979, %v977
      %v1428 = vpack.c.b16 %v982, %v980
      %v1429 = vpack.c.b16 %v983, %v981
      %v1430 = vpack.c.b16 %v986, %v984
      %v1431 = vpack.c.b16 %v987, %v985
      %v1432 = vpack.c.b16 %v990, %v988
      %v1433 = vpack.c.b16 %v991, %v989
      %v1434 = vpack.c.b16 %v994, %v992
      %v1435 = vpack.c.b16 %v995, %v993
      %v1436 = vpack.c.b16 %v998, %v996
      %v1437 = vpack.c.b16 %v999, %v997
      %v1438 = vpack.c.b16 %v1002, %v1000
      %v1439 = vpack.c.b16 %v1003, %v1001
      %v1440 = vpack.c.b16 %v1006, %v1004
      %v1441 = vpack.c.b16 %v1007, %v1005
      %v1442 = vpack.c.b16 %v1010, %v1008
      %v1443 = vpack.c.b16 %v1011, %v1009
      %v1444 = vpack.c.b16 %v1014, %v1012
      %v1445 = vpack.c.b16 %v1015, %v1013
      %v1446 = vpack.c.b16 %v1018, %v1016
      %v1447 = vpack.c.b16 %v1019, %v1017
      %v1448 = vpack.c.b16 %v1022, %v1020
      %v1449 = vpack.c.b16 %v1023, %v1021
      %v1450 = vpack.c.b16 %v1026, %v1024
      %v1451 = vpack.c.b16 %v1027, %v1025
      %v1452 = vpack.c.b16 %v1030, %v1028
      %v1453 = vpack.c.b16 %v1031, %v1029
      %v1454 = vpack.c.b16 %v1034, %v1032
      %v1455 = vpack.c.b16 %v1035, %v1033
      %v1456 = vpack.c.b16 %v1038, %v1036
      %v1457 = vpack.c.b16 %v1039, %v1037
      %v1458 = vpack.c.b16 %v1042, %v1040
      %v1459 = vpack.c.b16 %v1043, %v1041
      %v1460 = vpack.c.b16 %v1046, %v1044
      %v1461 = vpack.c.b16 %v1047, %v1045
      %v1462 = vpack.c.b16 %v1050, %v1048
      %v1463 = vpack.c.b16 %v1051, %v1049
      %v1464 = vpack.c.b16 %v1054, %v1052
      %v1465 = vpack.c.b16 %v1055, %v1053
      %v1466 = vpack.c.b16 %v1058, %v1056
      %v1467 = vpack.c.b16 %v1059, %v1057
      %v1468 = vpack.c.b16 %v1062, %v1060
      %v1469 = vpack.c.b16 %v1063, %v1061
      %v1470 = vpack.c.b16 %v1066, %v1064
      %v1471 = vpack.c.b16 %v1067, %v1065
      %v1472 = vpack.c.b16 %v1070, %v1068
      %v1473 = vpack.c.b16 %v1071, %v1069
      %v1474 = vpack.c.b16 %v1074, %v1072
      %v1475 = vpack.c.b16 %v1075, %v1073
      %v1476 = vpack.c.b16 %v1078, %v1076
      %v1477 = vpack.c.b16 %v1079, %v1077
      %v1478 = vpack.c.b16 %v1082, %v1080
      %v1479 = vpack.c.b16 %v1083, %v1081
      %v1480 = vpack.c.b16 %v1086, %v1084
      %v1481 = vpack.c.b16 %v1087, %v1085
      %v1482 = vpack.c.b16 %v1090, %v1088
      %v1483 = vpack.c.b16 %v1091, %v1089
      %v1484 = vpack.c.b16 %v1094, %v1092
      %v1485 = vpack.c.b16 %v1095, %v1093
      %v1486 = vpack.c.b16 %v1098, %v1096
      %v1487 = vpack.c.b16 %v1099, %v1097
      %v1488 = vpack.c.b16 %v1102, %v1100
      %v1489 = vpack.c.b16 %v1103, %v1101
      %v1490 = vpack.c.b16 %v1106, %v1104
      %v1491 = vpack.c.b16 %v1107, %v1105
      %v1492 = vpack.c.b16 %v1110, %v1108
      %v1493 = vpack.c.b16 %v1111, %v1109
      %v1494 = vpack.c.b16 %v1114, %v1112
      %v1495 = vpack.c.b16 %v1115, %v1113
      %v1496 = vpack.c.b16 %v1118, %v1116
      %v1497 = vpack.c.b16 %v1119, %v1117
      %v1498 = vpack.c.b16 %v1122, %v1120
      %v1499 = vpack.c.b16 %v1123, %v1121
      %v1500 = vpack.c.b16 %v1126, %v1124
      %v1501 = vpack.c.b16 %v1127, %v1125
      %v1502 = vpack.c.b16 %v1130, %v1128
      %v1503 = vpack.c.b16 %v1131, %v1129
      %v1504 = vpack.c.b16 %v1134, %v1132
      %v1505 = vpack.c.b16 %v1135, %v1133
      %v1506 = vpack.c.b16 %v1138, %v1136
      %v1507 = vpack.c.b16 %v1139, %v1137
      %v1508 = vpack.c.b16 %v1142, %v1140
      %v1509 = vpack.c.b16 %v1143, %v1141
      %v1510 = vpack.c.b16 %v1146, %v1144
      %v1511 = vpack.c.b16 %v1147, %v1145
      %v1512 = vpack.c.b16 %v1150, %v1148
      %v1513 = vpack.c.b16 %v1151, %v1149
      %v1514 = vpack.c.b16 %v1154, %v1152
      %v1515 = vpack.c.b16 %v1155, %v1153
      %v1516 = vpack.c.b16 %v1158, %v1156
      %v1517 = vpack.c.b16 %v1159, %v1157
      %v1518 = vpack.c.b16 %v1162, %v1160
      %v1519 = vpack.c.b16 %v1163, %v1161
      %v1520 = vpack.c.b16 %v1166, %v1164
      %v1521 = vpack.c.b16 %v1167, %v1165
      %v1522 = vpack.c.b16 %v1170, %v1168
      %v1523 = vpack.c.b16 %v1171, %v1169
      %v1524 = vpack.c.b16 %v1174, %v1172
      %v1525 = vpack.c.b16 %v1175, %v1173
      %v1526 = vpack.c.b16 %v1178, %v1176
      %v1527 = vpack.c.b16 %v1179, %v1177
      %v1528 = vpack.c.b16 %v1182, %v1180
      %v1529 = vpack.c.b16 %v1183, %v1181
      %v1530 = vpack.c.b16 %v1186, %v1184
      %v1531 = vpack.c.b16 %v1187, %v1185
      %v1532 = vpack.c.b16 %v1190, %v1188
      %v1533 = vpack.c.b16 %v1191, %v1189
      %v1534 = vpack.c.b16 %v1194, %v1192
      %v1535 = vpack.c.b16 %v1195, %v1193
      %v1536 = vpack.c.b16 %v1198, %v1196
      %v1537 = vpack.c.b16 %v1199, %v1197
      %v1538 = vpack.c.b16 %v1202, %v1200
      %v1539 = vpack.c.b16 %v1203, %v1201
      %v1540 = vpack.c.b16 %v1206, %v1204
      %v1541 = vpack.c.b16 %v1207, %v1205
      %v1542 = vpack.c.b16 %v1210, %v1208
      %v1543 = vpack.c.b16 %v1211, %v1209
      %v1544 = vpack.c.b16 %v1214, %v1212
      %v1545 = vpack.c.b16 %v1215, %v1213
      %v1546 = vpack.c.b16 %v1218, %v1216
      %v1547 = vpack.c.b16 %v1219, %v1217
      %v1548 = vpack.c.b16 %v1222, %v1220
      %v1549 = vpack.c.b16 %v1223, %v1221
      %v1550 = vpack.c.b16 %v1226, %v1224
      %v1551 = vpack.c.b16 %v1227, %v1225
      %v1552 = vpack.c.b16 %v1230, %v1228
      %v1553 = vpack.c.b16 %v1231, %v1229
      %v1554 = vpack.c.b16 %v1234, %v1232
      %v1555 = vpack.c.b16 %v1235, %v1233
      %v1556 = vpack.c.b16 %v1238, %v1236
      %v1557 = vpack.c.b16 %v1239, %v1237
      %v1558 = vpack.c.b16 %v1242, %v1240
      %v1559 = vpack.c.b16 %v1243, %v1241
      %v1560 = vpack.c.b16 %v1246, %v1244
      %v1561 = vpack.c.b16 %v1247, %v1245
      %v1562 = vpack.c.b16 %v1250, %v1248
      %v1563 = vpack.c.b16 %v1251, %v1249
      %v1564 = vpack.c.b16 %v1254, %v1252
      %v1565 = vpack.c.b16 %v1255, %v1253
      %v1566 = vpack.c.b16 %v1258, %v1256
      %v1567 = vpack.c.b16 %v1259, %v1257
      %v1568 = vpack.c.b16 %v1262, %v1260
      %v1569 = vpack.c.b16 %v1263, %v1261
      %v1570 = vpack.c.b16 %v1266, %v1264
      %v1571 = vpack.c.b16 %v1267, %v1265
      %v1572 = vpack.c.b16 %v1270, %v1268
      %v1573 = vpack.c.b16 %v1271, %v1269
      %v1574 = vpack.c.b16 %v1274, %v1272
      %v1575 = vpack.c.b16 %v1275, %v1273
      %v1576 = vpack.c.b16 %v1278, %v1276
      %v1577 = vpack.c.b16 %v1279, %v1277
      %v1578 = vpack.c.b16 %v1282, %v1280
      %v1579 = vpack.c.b16 %v1283, %v1281
      %v1580 = vpack.c.b16 %v1286, %v1284
      %v1581 = vpack.c.b16 %v1287, %v1285
      %v1582 = vpack.c.b16 %v1290, %v1288
      %v1583 = vpack.c.b16 %v1291, %v1289
      %v1584 = vpack.c.b16 %v1294, %v1292
      %v1585 = vpack.c.b16 %v1295, %v1293
      %v1586 = vpack.c.b16 %v1298, %v1296
      %v1587 = vpack.c.b16 %v1299, %v1297
      %v1588 = vpack.c.b16 %v1302, %v1300
      %v1589 = vpack.c.b16 %v1303, %v1301
      %v1590 = vpack.c.b16 %v1306, %v1304
      %v1591 = vpack.c.b16 %v1307, %v1305
      %v1592 = vpack.c.b16 %v1310, %v1308
      %v1593 = vpack.c.b16 %v1311, %v1309
      %v1594 = vpack.c.b16 %v1314, %v1312
      %v1595 = vpack.c.b16 %v1315, %v1313
      %v1596 = vpack.c.b16 %v1318, %v1316
      %v1597 = vpack.c.b16 %v1319, %v1317
      %v1598 = vpack.c.b16 %v1322, %v1320
      %v1599 = vpack.c.b16 %v1323, %v1321
      %v1600 = vpack.c.b16 %v1326, %v1324
      %v1601 = vpack.c.b16 %v1327, %v1325
      %v1602 = vpack.c.b16 %v1330, %v1328
      %v1603 = vpack.c.b16 %v1331, %v1329
      %v1604 = vpack.c.b16 %v1334, %v1332
      %v1605 = vpack.c.b16 %v1335, %v1333
      %v1606 = vpack.c.b16 %v1338, %v1336
      %v1607 = vpack.c.b16 %v1339, %v1337
      %v1608 = vpack.c.b16 %v1342, %v1340
      %v1609 = vpack.c.b16 %v1343, %v1341
      %v1610 = vpack.c.b16 %v1346, %v1344
      %v1611 = vpack.c.b16 %v1347, %v1345
      %v1612 = vpack.c.b16 %v1350, %v1348
      %v1613 = vpack.c.b16 %v1351, %v1349
      %v1614 = vpack.c.b16 %v1354, %v1352
      %v1615 = vpack.c.b16 %v1355, %v1353
      %v1616 = vpack.c.b16 %v1358, %v1356
      %v1617 = vpack.c.b16 %v1359, %v1357
      %v1618 = vpack.c.b16 %v1362, %v1360
      %v1619 = vpack.c.b16 %v1363, %v1361
      %v1908 = vunpack.c.l.b16 %v557
      %v1909 = vunpack.c.l.b16 %v558
      %v1910 = vunpack.c.l.b16 %v559
      %v1911 = vunpack.c.l.b16 %v560
      %v1912 = vunpack.c.l.b16 %v561
      %v1913 = vunpack.c.l.b16 %v562
      %v1914 = vunpack.c.l.b16 %v563
      %v1915 = vunpack.c.l.b16 %v564
      %v1916 = vunpack.c.l.b16 %v565
      %v1917 = vunpack.c.l.b16 %v566
      %v1918 = vunpack.c.l.b16 %v567
      %v1919 = vunpack.c.l.b16 %v568
      %v1920 = vunpack.c.l.b16 %v569
      %v1921 = vunpack.c.l.b16 %v570
      %v1922 = vunpack.c.l.b16 %v571
      %v1923 = vunpack.c.l.b16 %v572
      %v1924 = vunpack.c.l.b16 %v573
      %v1925 = vunpack.c.l.b16 %v574
      %v1926 = vunpack.c.l.b16 %v575
      %v1927 = vunpack.c.l.b16 %v576
      %v1928 = vunpack.c.l.b16 %v577
      %v1929 = vunpack.c.l.b16 %v578
      %v1930 = vunpack.c.l.b16 %v579
      %v1931 = vunpack.c.l.b16 %v580
      %v1932 = vunpack.c.l.b16 %v581
      %v1933 = vunpack.c.l.b16 %v582
      %v1934 = vunpack.c.l.b16 %v583
      %v1935 = vunpack.c.l.b16 %v584
      %v1936 = vunpack.c.l.b16 %v585
      %v1937 = vunpack.c.l.b16 %v586
      %v1938 = vunpack.c.l.b16 %v587
      %v1939 = vunpack.c.l.b16 %v588
      %v1940 = vpack.c.b16 %v1909, %v1908
      %v1941 = vpack.c.b16 %v1911, %v1910
      %v1942 = vpack.c.b16 %v1913, %v1912
      %v1943 = vpack.c.b16 %v1915, %v1914
      %v1944 = vpack.c.b16 %v1917, %v1916
      %v1945 = vpack.c.b16 %v1919, %v1918
      %v1946 = vpack.c.b16 %v1921, %v1920
      %v1947 = vpack.c.b16 %v1923, %v1922
      %v1948 = vpack.c.b16 %v1925, %v1924
      %v1949 = vpack.c.b16 %v1927, %v1926
      %v1950 = vpack.c.b16 %v1929, %v1928
      %v1951 = vpack.c.b16 %v1931, %v1930
      %v1952 = vpack.c.b16 %v1933, %v1932
      %v1953 = vpack.c.b16 %v1935, %v1934
      %v1954 = vpack.c.b16 %v1937, %v1936
      %v1955 = vpack.c.b16 %v1939, %v1938
      %1972 = vmatprep.subr.bf16.mxu0 0
      %1973 = vmatpush1.bf16.msra.mxu0 %v1940
      %1974 = vmatprep.subr.bf16.mxu0 0
      %1975 = vmatpush1.bf16.msra.mxu0 %v1941
      %1976 = vmatprep.subr.bf16.mxu0 0
      %1977 = vmatpush1.bf16.msra.mxu0 %v1942
      %1978 = vmatprep.subr.bf16.mxu0 0
      %1979 = vmatpush1.bf16.msra.mxu0 %v1943
      %1980 = vmatprep.subr.bf16.mxu0 0
      %1981 = vmatpush1.bf16.msra.mxu0 %v1944
      %1982 = vmatprep.subr.bf16.mxu0 0
      %1983 = vmatpush1.bf16.msra.mxu0 %v1945
      %1984 = vmatprep.subr.bf16.mxu0 0
      %1985 = vmatpush1.bf16.msra.mxu0 %v1946
      %1986 = vmatprep.subr.bf16.mxu0 0
      %1987 = vmatpush1.bf16.msra.mxu0 %v1947
      %1988 = vmatprep.subr.bf16.mxu0 0
      %1989 = vmatpush1.bf16.msra.mxu0 %v1948
      %1990 = vmatprep.subr.bf16.mxu0 0
      %1991 = vmatpush1.bf16.msra.mxu0 %v1949
      %1992 = vmatprep.subr.bf16.mxu0 0
      %1993 = vmatpush1.bf16.msra.mxu0 %v1950
      %1994 = vmatprep.subr.bf16.mxu0 0
      %1995 = vmatpush1.bf16.msra.mxu0 %v1951
      %1996 = vmatprep.subr.bf16.mxu0 0
      %1997 = vmatpush1.bf16.msra.mxu0 %v1952
      %1998 = vmatprep.subr.bf16.mxu0 0
      %1999 = vmatpush1.bf16.msra.mxu0 %v1953
      %2000 = vmatprep.subr.bf16.mxu0 0
      %2001 = vmatpush1.bf16.msra.mxu0 %v1954
      %2002 = vmatprep.subr.bf16.mxu0 0
      %2003 = vmatpush1.bf16.msra.mxu0 %v1955
      %2004 = vmatprep.mubr.bf16.mxu0 %v1365
      %2005 = vmatmul.mubr.bf16.gmra.mrb[0].mxu0 %v1364
      %v2006 = vpop.f32.mrb[0].mxu0
      %v2007 = vadd.f32 %v594, %v2006
      %v2008 = vpop.f32.mrb[0].mxu0
      %v2009 = vpop.f32.mrb[0].mxu0
      %v2010 = vadd.f32 %v594, %v2009
      %v2011 = vpop.f32.mrb[0].mxu0
      %2012 = vmatprep.mubr.bf16.mxu0 %v1367
      %2013 = vmatmul.mubr.bf16.gmra.mrb[0].mxu0 %v1366
      %v2014 = vpop.f32.mrb[0].mxu0
      %v2015 = vadd.f32 %v594, %v2014
      %v2016 = vpop.f32.mrb[0].mxu0
      %v2017 = vpop.f32.mrb[0].mxu0
      %v2018 = vadd.f32 %v594, %v2017
      %v2019 = vpop.f32.mrb[0].mxu0
      %2020 = vmatprep.mubr.bf16.mxu0 %v1369
      %2021 = vmatmul.mubr.bf16.gmra.mrb[0].mxu0 %v1368
      %v2022 = vpop.f32.mrb[0].mxu0
      %v2023 = vadd.f32 %v594, %v2022
      %v2024 = vpop.f32.mrb[0].mxu0
      %v2025 = vpop.f32.mrb[0].mxu0
      %v2026 = vadd.f32 %v594, %v2025
      %v2027 = vpop.f32.mrb[0].mxu0
      %2028 = vmatprep.mubr.bf16.mxu0 %v1371
      %2029 = vmatmul.mubr.bf16.gmra.mrb[0].mxu0 %v1370
      %v2030 = vpop.f32.mrb[0].mxu0
      %v2031 = vadd.f32 %v594, %v2030
      %v2032 = vpop.f32.mrb[0].mxu0
      %v2033 = vpop.f32.mrb[0].mxu0
      %v2034 = vadd.f32 %v594, %v2033
      %v2035 = vpop.f32.mrb[0].mxu0
      %2036 = vmatprep.mubr.bf16.mxu0 %v1373
      %2037 = vmatmul.mubr.bf16.gmra.mrb[0].mxu0 %v1372
      %v2038 = vpop.f32.mrb[0].mxu0
      %v2039 = vadd.f32 %v594, %v2038
      %v2040 = vpop.f32.mrb[0].mxu0
      %v2041 = vpop.f32.mrb[0].mxu0
      %v2042 = vadd.f32 %v594, %v2041
      %v2043 = vpop.f32.mrb[0].mxu0
      %2044 = vmatprep.mubr.bf16.mxu0 %v1375
      %2045 = vmatmul.mubr.bf16.gmra.mrb[0].mxu0 %v1374
      %v2046 = vpop.f32.mrb[0].mxu0
      %v2047 = vadd.f32 %v594, %v2046
      %v2048 = vpop.f32.mrb[0].mxu0
      %v2049 = vpop.f32.mrb[0].mxu0
      %v2050 = vadd.f32 %v594, %v2049
      %v2051 = vpop.f32.mrb[0].mxu0
      %2052 = vmatprep.mubr.bf16.mxu0 %v1377
      %2053 = vmatmul.mubr.bf16.gmra.mrb[0].mxu0 %v1376
      %v2054 = vpop.f32.mrb[0].mxu0
      %v2055 = vadd.f32 %v594, %v2054
      %v2056 = vpop.f32.mrb[0].mxu0
      %v2057 = vpop.f32.mrb[0].mxu0
      %v2058 = vadd.f32 %v594, %v2057
      %v2059 = vpop.f32.mrb[0].mxu0
      %2060 = vmatprep.mubr.bf16.mxu0 %v1379
      %2061 = vmatmul.mubr.bf16.gmra.mrb[0].mxu0 %v1378
      %v2062 = vpop.f32.mrb[0].mxu0
      %v2063 = vadd.f32 %v594, %v2062
      %v2064 = vpop.f32.mrb[0].mxu0
      %v2065 = vpop.f32.mrb[0].mxu0
      %v2066 = vadd.f32 %v594, %v2065
      %v2067 = vpop.f32.mrb[0].mxu0
      %2068 = vmatprep.mubr.bf16.mxu0 %v1381
      %2069 = vmatmul.mubr.bf16.gmra.mrb[0].mxu0 %v1380
      %v2070 = vpop.f32.mrb[0].mxu0
      %v2071 = vadd.f32 %v594, %v2070
      %v2072 = vpop.f32.mrb[0].mxu0
      %v2073 = vpop.f32.mrb[0].mxu0
      %v2074 = vadd.f32 %v594, %v2073
      %v2075 = vpop.f32.mrb[0].mxu0
      %2076 = vmatprep.mubr.bf16.mxu0 %v1383
      %2077 = vmatmul.mubr.bf16.gmra.mrb[0].mxu0 %v1382
      %v2078 = vpop.f32.mrb[0].mxu0
      %v2079 = vadd.f32 %v594, %v2078
      %v2080 = vpop.f32.mrb[0].mxu0
      %v2081 = vpop.f32.mrb[0].mxu0
      %v2082 = vadd.f32 %v594, %v2081
      %v2083 = vpop.f32.mrb[0].mxu0
      %2084 = vmatprep.mubr.bf16.mxu0 %v1385
      %2085 = vmatmul.mubr.bf16.gmra.mrb[0].mxu0 %v1384
      %v2086 = vpop.f32.mrb[0].mxu0
      %v2087 = vadd.f32 %v594, %v2086
      %v2088 = vpop.f32.mrb[0].mxu0
      %v2089 = vpop.f32.mrb[0].mxu0
      %v2090 = vadd.f32 %v594, %v2089
      %v2091 = vpop.f32.mrb[0].mxu0
      %2092 = vmatprep.mubr.bf16.mxu0 %v1387
      %2093 = vmatmul.mubr.bf16.gmra.mrb[0].mxu0 %v1386
      %v2094 = vpop.f32.mrb[0].mxu0
      %v2095 = vadd.f32 %v594, %v2094
      %v2096 = vpop.f32.mrb[0].mxu0
      %v2097 = vpop.f32.mrb[0].mxu0
      %v2098 = vadd.f32 %v594, %v2097
      %v2099 = vpop.f32.mrb[0].mxu0
      %2100 = vmatprep.mubr.bf16.mxu0 %v1389
      %2101 = vmatmul.mubr.bf16.gmra.mrb[0].mxu0 %v1388
      %v2102 = vpop.f32.mrb[0].mxu0
      %v2103 = vadd.f32 %v594, %v2102
      %v2104 = vpop.f32.mrb[0].mxu0
      %v2105 = vpop.f32.mrb[0].mxu0
      %v2106 = vadd.f32 %v594, %v2105
      %v2107 = vpop.f32.mrb[0].mxu0
      %2108 = vmatprep.mubr.bf16.mxu0 %v1391
      %2109 = vmatmul.mubr.bf16.gmra.mrb[0].mxu0 %v1390
      %v2110 = vpop.f32.mrb[0].mxu0
      %v2111 = vadd.f32 %v594, %v2110
      %v2112 = vpop.f32.mrb[0].mxu0
      %v2113 = vpop.f32.mrb[0].mxu0
      %v2114 = vadd.f32 %v594, %v2113
      %v2115 = vpop.f32.mrb[0].mxu0
      %2116 = vmatprep.mubr.bf16.mxu0 %v1393
      %2117 = vmatmul.mubr.bf16.gmra.mrb[0].mxu0 %v1392
      %v2118 = vpop.f32.mrb[0].mxu0
      %v2119 = vadd.f32 %v594, %v2118
      %v2120 = vpop.f32.mrb[0].mxu0
      %v2121 = vpop.f32.mrb[0].mxu0
      %v2122 = vadd.f32 %v594, %v2121
      %v2123 = vpop.f32.mrb[0].mxu0
      %2124 = vmatprep.mubr.bf16.mxu0 %v1395
      %2125 = vmatmul.mubr.bf16.gmra.mrb[0].mxu0 %v1394
      %v2126 = vpop.f32.mrb[0].mxu0
      %v2127 = vadd.f32 %v594, %v2126
      %v2128 = vpop.f32.mrb[0].mxu0
      %v2129 = vpop.f32.mrb[0].mxu0
      %v2130 = vadd.f32 %v594, %v2129
      %v2131 = vpop.f32.mrb[0].mxu0
      %2132 = vmatprep.mubr.bf16.mxu0 %v1397
      %2133 = vmatmul.mubr.bf16.gmra.mrb[0].mxu0 %v1396
      %v2134 = vpop.f32.mrb[0].mxu0
      %v2135 = vadd.f32 %v594, %v2134
      %v2136 = vpop.f32.mrb[0].mxu0
      %v2137 = vpop.f32.mrb[0].mxu0
      %v2138 = vadd.f32 %v594, %v2137
      %v2139 = vpop.f32.mrb[0].mxu0
      %2140 = vmatprep.mubr.bf16.mxu0 %v1399
      %2141 = vmatmul.mubr.bf16.gmra.mrb[0].mxu0 %v1398
      %v2142 = vpop.f32.mrb[0].mxu0
      %v2143 = vadd.f32 %v594, %v2142
      %v2144 = vpop.f32.mrb[0].mxu0
      %v2145 = vpop.f32.mrb[0].mxu0
      %v2146 = vadd.f32 %v594, %v2145
      %v2147 = vpop.f32.mrb[0].mxu0
      %2148 = vmatprep.mubr.bf16.mxu0 %v1401
      %2149 = vmatmul.mubr.bf16.gmra.mrb[0].mxu0 %v1400
      %v2150 = vpop.f32.mrb[0].mxu0
      %v2151 = vadd.f32 %v594, %v2150
      %v2152 = vpop.f32.mrb[0].mxu0
      %v2153 = vpop.f32.mrb[0].mxu0
      %v2154 = vadd.f32 %v594, %v2153
      %v2155 = vpop.f32.mrb[0].mxu0
      %2156 = vmatprep.mubr.bf16.mxu0 %v1403
      %2157 = vmatmul.mubr.bf16.gmra.mrb[0].mxu0 %v1402
      %v2158 = vpop.f32.mrb[0].mxu0
      %v2159 = vadd.f32 %v594, %v2158
      %v2160 = vpop.f32.mrb[0].mxu0
      %v2161 = vpop.f32.mrb[0].mxu0
      %v2162 = vadd.f32 %v594, %v2161
      %v2163 = vpop.f32.mrb[0].mxu0
      %2164 = vmatprep.mubr.bf16.mxu0 %v1405
      %2165 = vmatmul.mubr.bf16.gmra.mrb[0].mxu0 %v1404
      %v2166 = vpop.f32.mrb[0].mxu0
      %v2167 = vadd.f32 %v594, %v2166
      %v2168 = vpop.f32.mrb[0].mxu0
      %v2169 = vpop.f32.mrb[0].mxu0
      %v2170 = vadd.f32 %v594, %v2169
      %v2171 = vpop.f32.mrb[0].mxu0
      %2172 = vmatprep.mubr.bf16.mxu0 %v1407
      %2173 = vmatmul.mubr.bf16.gmra.mrb[0].mxu0 %v1406
      %v2174 = vpop.f32.mrb[0].mxu0
      %v2175 = vadd.f32 %v594, %v2174
      %v2176 = vpop.f32.mrb[0].mxu0
      %v2177 = vpop.f32.mrb[0].mxu0
      %v2178 = vadd.f32 %v594, %v2177
      %v2179 = vpop.f32.mrb[0].mxu0
      %2180 = vmatprep.mubr.bf16.mxu0 %v1409
      %2181 = vmatmul.mubr.bf16.gmra.mrb[0].mxu0 %v1408
      %v2182 = vpop.f32.mrb[0].mxu0
      %v2183 = vadd.f32 %v594, %v2182
      %v2184 = vpop.f32.mrb[0].mxu0
      %v2185 = vpop.f32.mrb[0].mxu0
      %v2186 = vadd.f32 %v594, %v2185
      %v2187 = vpop.f32.mrb[0].mxu0
      %2188 = vmatprep.mubr.bf16.mxu0 %v1411
      %2189 = vmatmul.mubr.bf16.gmra.mrb[0].mxu0 %v1410
      %v2190 = vpop.f32.mrb[0].mxu0
      %v2191 = vadd.f32 %v594, %v2190
      %v2192 = vpop.f32.mrb[0].mxu0
      %v2193 = vpop.f32.mrb[0].mxu0
      %v2194 = vadd.f32 %v594, %v2193
      %v2195 = vpop.f32.mrb[0].mxu0
      %2196 = vmatprep.mubr.bf16.mxu0 %v1413
      %2197 = vmatmul.mubr.bf16.gmra.mrb[0].mxu0 %v1412
      %v2198 = vpop.f32.mrb[0].mxu0
      %v2199 = vadd.f32 %v594, %v2198
      %v2200 = vpop.f32.mrb[0].mxu0
      %v2201 = vpop.f32.mrb[0].mxu0
      %v2202 = vadd.f32 %v594, %v2201
      %v2203 = vpop.f32.mrb[0].mxu0
      %2204 = vmatprep.mubr.bf16.mxu0 %v1415
      %2205 = vmatmul.mubr.bf16.gmra.mrb[0].mxu0 %v1414
      %v2206 = vpop.f32.mrb[0].mxu0
      %v2207 = vadd.f32 %v594, %v2206
      %v2208 = vpop.f32.mrb[0].mxu0
      %v2209 = vpop.f32.mrb[0].mxu0
      %v2210 = vadd.f32 %v594, %v2209
      %v2211 = vpop.f32.mrb[0].mxu0
      %2212 = vmatprep.mubr.bf16.mxu0 %v1417
      %2213 = vmatmul.mubr.bf16.gmra.mrb[0].mxu0 %v1416
      %v2214 = vpop.f32.mrb[0].mxu0
      %v2215 = vadd.f32 %v594, %v2214
      %v2216 = vpop.f32.mrb[0].mxu0
      %v2217 = vpop.f32.mrb[0].mxu0
      %v2218 = vadd.f32 %v594, %v2217
      %v2219 = vpop.f32.mrb[0].mxu0
      %2220 = vmatprep.mubr.bf16.mxu0 %v1419
      %2221 = vmatmul.mubr.bf16.gmra.mrb[0].mxu0 %v1418
      %v2222 = vpop.f32.mrb[0].mxu0
      %v2223 = vadd.f32 %v594, %v2222
      %v2224 = vpop.f32.mrb[0].mxu0
      %v2225 = vpop.f32.mrb[0].mxu0
      %v2226 = vadd.f32 %v594, %v2225
      %v2227 = vpop.f32.mrb[0].mxu0
      %2228 = vmatprep.mubr.bf16.mxu0 %v1421
      %2229 = vmatmul.mubr.bf16.gmra.mrb[0].mxu0 %v1420
      %v2230 = vpop.f32.mrb[0].mxu0
      %v2231 = vadd.f32 %v594, %v2230
      %v2232 = vpop.f32.mrb[0].mxu0
      %v2233 = vpop.f32.mrb[0].mxu0
      %v2234 = vadd.f32 %v594, %v2233
      %v2235 = vpop.f32.mrb[0].mxu0
      %2236 = vmatprep.mubr.bf16.mxu0 %v1423
      %2237 = vmatmul.mubr.bf16.gmra.mrb[0].mxu0 %v1422
      %v2238 = vpop.f32.mrb[0].mxu0
      %v2239 = vadd.f32 %v594, %v2238
      %v2240 = vpop.f32.mrb[0].mxu0
      %v2241 = vpop.f32.mrb[0].mxu0
      %v2242 = vadd.f32 %v594, %v2241
      %v2243 = vpop.f32.mrb[0].mxu0
      %2244 = vmatprep.mubr.bf16.mxu0 %v1425
      %2245 = vmatmul.mubr.bf16.gmra.mrb[0].mxu0 %v1424
      %v2246 = vpop.f32.mrb[0].mxu0
      %v2247 = vadd.f32 %v594, %v2246
      %v2248 = vpop.f32.mrb[0].mxu0
      %v2249 = vpop.f32.mrb[0].mxu0
      %v2250 = vadd.f32 %v594, %v2249
      %v2251 = vpop.f32.mrb[0].mxu0
      %2252 = vmatprep.mubr.bf16.mxu0 %v1427
      %2253 = vmatmul.mubr.bf16.gmra.mrb[0].mxu0 %v1426
      %v2254 = vpop.f32.mrb[0].mxu0
      %v2255 = vadd.f32 %v594, %v2254
      %v2256 = vpop.f32.mrb[0].mxu0
      %v2257 = vpop.f32.mrb[0].mxu0
      %v2258 = vadd.f32 %v594, %v2257
      %v2259 = vpop.f32.mrb[0].mxu0
      %2260 = vmatprep.mubr.bf16.mxu0 %v1429
      %2261 = vmatmul.mubr.bf16.gmra.mrb[0].mxu0 %v1428
      %v2262 = vpop.f32.mrb[0].mxu0
      %v2263 = vadd.f32 %v594, %v2262
      %v2264 = vpop.f32.mrb[0].mxu0
      %v2265 = vpop.f32.mrb[0].mxu0
      %v2266 = vadd.f32 %v594, %v2265
      %v2267 = vpop.f32.mrb[0].mxu0
      %2268 = vmatprep.mubr.bf16.mxu0 %v1431
      %2269 = vmatmul.mubr.bf16.gmra.mrb[0].mxu0 %v1430
      %v2270 = vpop.f32.mrb[0].mxu0
      %v2271 = vadd.f32 %v594, %v2270
      %v2272 = vpop.f32.mrb[0].mxu0
      %v2273 = vpop.f32.mrb[0].mxu0
      %v2274 = vadd.f32 %v594, %v2273
      %v2275 = vpop.f32.mrb[0].mxu0
      %2276 = vmatprep.mubr.bf16.mxu0 %v1433
      %2277 = vmatmul.mubr.bf16.gmra.mrb[0].mxu0 %v1432
      %v2278 = vpop.f32.mrb[0].mxu0
      %v2279 = vadd.f32 %v594, %v2278
      %v2280 = vpop.f32.mrb[0].mxu0
      %v2281 = vpop.f32.mrb[0].mxu0
      %v2282 = vadd.f32 %v594, %v2281
      %v2283 = vpop.f32.mrb[0].mxu0
      %2284 = vmatprep.mubr.bf16.mxu0 %v1435
      %2285 = vmatmul.mubr.bf16.gmra.mrb[0].mxu0 %v1434
      %v2286 = vpop.f32.mrb[0].mxu0
      %v2287 = vadd.f32 %v594, %v2286
      %v2288 = vpop.f32.mrb[0].mxu0
      %v2289 = vpop.f32.mrb[0].mxu0
      %v2290 = vadd.f32 %v594, %v2289
      %v2291 = vpop.f32.mrb[0].mxu0
      %2292 = vmatprep.mubr.bf16.mxu0 %v1437
      %2293 = vmatmul.mubr.bf16.gmra.mrb[0].mxu0 %v1436
      %v2294 = vpop.f32.mrb[0].mxu0
      %v2295 = vadd.f32 %v594, %v2294
      %v2296 = vpop.f32.mrb[0].mxu0
      %v2297 = vpop.f32.mrb[0].mxu0
      %v2298 = vadd.f32 %v594, %v2297
      %v2299 = vpop.f32.mrb[0].mxu0
      %2300 = vmatprep.mubr.bf16.mxu0 %v1439
      %2301 = vmatmul.mubr.bf16.gmra.mrb[0].mxu0 %v1438
      %v2302 = vpop.f32.mrb[0].mxu0
      %v2303 = vadd.f32 %v594, %v2302
      %v2304 = vpop.f32.mrb[0].mxu0
      %v2305 = vpop.f32.mrb[0].mxu0
      %v2306 = vadd.f32 %v594, %v2305
      %v2307 = vpop.f32.mrb[0].mxu0
      %2308 = vmatprep.mubr.bf16.mxu0 %v1441
      %2309 = vmatmul.mubr.bf16.gmra.mrb[0].mxu0 %v1440
      %v2310 = vpop.f32.mrb[0].mxu0
      %v2311 = vadd.f32 %v594, %v2310
      %v2312 = vpop.f32.mrb[0].mxu0
      %v2313 = vpop.f32.mrb[0].mxu0
      %v2314 = vadd.f32 %v594, %v2313
      %v2315 = vpop.f32.mrb[0].mxu0
      %2316 = vmatprep.mubr.bf16.mxu0 %v1443
      %2317 = vmatmul.mubr.bf16.gmra.mrb[0].mxu0 %v1442
      %v2318 = vpop.f32.mrb[0].mxu0
      %v2319 = vadd.f32 %v594, %v2318
      %v2320 = vpop.f32.mrb[0].mxu0
      %v2321 = vpop.f32.mrb[0].mxu0
      %v2322 = vadd.f32 %v594, %v2321
      %v2323 = vpop.f32.mrb[0].mxu0
      %2324 = vmatprep.mubr.bf16.mxu0 %v1445
      %2325 = vmatmul.mubr.bf16.gmra.mrb[0].mxu0 %v1444
      %v2326 = vpop.f32.mrb[0].mxu0
      %v2327 = vadd.f32 %v594, %v2326
      %v2328 = vpop.f32.mrb[0].mxu0
      %v2329 = vpop.f32.mrb[0].mxu0
      %v2330 = vadd.f32 %v594, %v2329
      %v2331 = vpop.f32.mrb[0].mxu0
      %2332 = vmatprep.mubr.bf16.mxu0 %v1447
      %2333 = vmatmul.mubr.bf16.gmra.mrb[0].mxu0 %v1446
      %v2334 = vpop.f32.mrb[0].mxu0
      %v2335 = vadd.f32 %v594, %v2334
      %v2336 = vpop.f32.mrb[0].mxu0
      %v2337 = vpop.f32.mrb[0].mxu0
      %v2338 = vadd.f32 %v594, %v2337
      %v2339 = vpop.f32.mrb[0].mxu0
      %2340 = vmatprep.mubr.bf16.mxu0 %v1449
      %2341 = vmatmul.mubr.bf16.gmra.mrb[0].mxu0 %v1448
      %v2342 = vpop.f32.mrb[0].mxu0
      %v2343 = vadd.f32 %v594, %v2342
      %v2344 = vpop.f32.mrb[0].mxu0
      %v2345 = vpop.f32.mrb[0].mxu0
      %v2346 = vadd.f32 %v594, %v2345
      %v2347 = vpop.f32.mrb[0].mxu0
      %2348 = vmatprep.mubr.bf16.mxu0 %v1451
      %2349 = vmatmul.mubr.bf16.gmra.mrb[0].mxu0 %v1450
      %v2350 = vpop.f32.mrb[0].mxu0
      %v2351 = vadd.f32 %v594, %v2350
      %v2352 = vpop.f32.mrb[0].mxu0
      %v2353 = vpop.f32.mrb[0].mxu0
      %v2354 = vadd.f32 %v594, %v2353
      %v2355 = vpop.f32.mrb[0].mxu0
      %2356 = vmatprep.mubr.bf16.mxu0 %v1453
      %2357 = vmatmul.mubr.bf16.gmra.mrb[0].mxu0 %v1452
      %v2358 = vpop.f32.mrb[0].mxu0
      %v2359 = vadd.f32 %v594, %v2358
      %v2360 = vpop.f32.mrb[0].mxu0
      %v2361 = vpop.f32.mrb[0].mxu0
      %v2362 = vadd.f32 %v594, %v2361
      %v2363 = vpop.f32.mrb[0].mxu0
      %2364 = vmatprep.mubr.bf16.mxu0 %v1455
      %2365 = vmatmul.mubr.bf16.gmra.mrb[0].mxu0 %v1454
      %v2366 = vpop.f32.mrb[0].mxu0
      %v2367 = vadd.f32 %v594, %v2366
      %v2368 = vpop.f32.mrb[0].mxu0
      %v2369 = vpop.f32.mrb[0].mxu0
      %v2370 = vadd.f32 %v594, %v2369
      %v2371 = vpop.f32.mrb[0].mxu0
      %2372 = vmatprep.mubr.bf16.mxu0 %v1457
      %2373 = vmatmul.mubr.bf16.gmra.mrb[0].mxu0 %v1456
      %v2374 = vpop.f32.mrb[0].mxu0
      %v2375 = vadd.f32 %v594, %v2374
      %v2376 = vpop.f32.mrb[0].mxu0
      %v2377 = vpop.f32.mrb[0].mxu0
      %v2378 = vadd.f32 %v594, %v2377
      %v2379 = vpop.f32.mrb[0].mxu0
      %2380 = vmatprep.mubr.bf16.mxu0 %v1459
      %2381 = vmatmul.mubr.bf16.gmra.mrb[0].mxu0 %v1458
      %v2382 = vpop.f32.mrb[0].mxu0
      %v2383 = vadd.f32 %v594, %v2382
      %v2384 = vpop.f32.mrb[0].mxu0
      %v2385 = vpop.f32.mrb[0].mxu0
      %v2386 = vadd.f32 %v594, %v2385
      %v2387 = vpop.f32.mrb[0].mxu0
      %2388 = vmatprep.mubr.bf16.mxu0 %v1461
      %2389 = vmatmul.mubr.bf16.gmra.mrb[0].mxu0 %v1460
      %v2390 = vpop.f32.mrb[0].mxu0
      %v2391 = vadd.f32 %v594, %v2390
      %v2392 = vpop.f32.mrb[0].mxu0
      %v2393 = vpop.f32.mrb[0].mxu0
      %v2394 = vadd.f32 %v594, %v2393
      %v2395 = vpop.f32.mrb[0].mxu0
      %2396 = vmatprep.mubr.bf16.mxu0 %v1463
      %2397 = vmatmul.mubr.bf16.gmra.mrb[0].mxu0 %v1462
      %v2398 = vpop.f32.mrb[0].mxu0
      %v2399 = vadd.f32 %v594, %v2398
      %v2400 = vpop.f32.mrb[0].mxu0
      %v2401 = vpop.f32.mrb[0].mxu0
      %v2402 = vadd.f32 %v594, %v2401
      %v2403 = vpop.f32.mrb[0].mxu0
      %2404 = vmatprep.mubr.bf16.mxu0 %v1465
      %2405 = vmatmul.mubr.bf16.gmra.mrb[0].mxu0 %v1464
      %v2406 = vpop.f32.mrb[0].mxu0
      %v2407 = vadd.f32 %v594, %v2406
      %v2408 = vpop.f32.mrb[0].mxu0
      %v2409 = vpop.f32.mrb[0].mxu0
      %v2410 = vadd.f32 %v594, %v2409
      %v2411 = vpop.f32.mrb[0].mxu0
      %2412 = vmatprep.mubr.bf16.mxu0 %v1467
      %2413 = vmatmul.mubr.bf16.gmra.mrb[0].mxu0 %v1466
      %v2414 = vpop.f32.mrb[0].mxu0
      %v2415 = vadd.f32 %v594, %v2414
      %v2416 = vpop.f32.mrb[0].mxu0
      %v2417 = vpop.f32.mrb[0].mxu0
      %v2418 = vadd.f32 %v594, %v2417
      %v2419 = vpop.f32.mrb[0].mxu0
      %2420 = vmatprep.mubr.bf16.mxu0 %v1469
      %2421 = vmatmul.mubr.bf16.gmra.mrb[0].mxu0 %v1468
      %v2422 = vpop.f32.mrb[0].mxu0
      %v2423 = vadd.f32 %v594, %v2422
      %v2424 = vpop.f32.mrb[0].mxu0
      %v2425 = vpop.f32.mrb[0].mxu0
      %v2426 = vadd.f32 %v594, %v2425
      %v2427 = vpop.f32.mrb[0].mxu0
      %2428 = vmatprep.mubr.bf16.mxu0 %v1471
      %2429 = vmatmul.mubr.bf16.gmra.mrb[0].mxu0 %v1470
      %v2430 = vpop.f32.mrb[0].mxu0
      %v2431 = vadd.f32 %v594, %v2430
      %v2432 = vpop.f32.mrb[0].mxu0
      %v2433 = vpop.f32.mrb[0].mxu0
      %v2434 = vadd.f32 %v594, %v2433
      %v2435 = vpop.f32.mrb[0].mxu0
      %2436 = vmatprep.mubr.bf16.mxu0 %v1473
      %2437 = vmatmul.mubr.bf16.gmra.mrb[0].mxu0 %v1472
      %v2438 = vpop.f32.mrb[0].mxu0
      %v2439 = vadd.f32 %v594, %v2438
      %v2440 = vpop.f32.mrb[0].mxu0
      %v2441 = vpop.f32.mrb[0].mxu0
      %v2442 = vadd.f32 %v594, %v2441
      %v2443 = vpop.f32.mrb[0].mxu0
      %2444 = vmatprep.mubr.bf16.mxu0 %v1475
      %2445 = vmatmul.mubr.bf16.gmra.mrb[0].mxu0 %v1474
      %v2446 = vpop.f32.mrb[0].mxu0
      %v2447 = vadd.f32 %v594, %v2446
      %v2448 = vpop.f32.mrb[0].mxu0
      %v2449 = vpop.f32.mrb[0].mxu0
      %v2450 = vadd.f32 %v594, %v2449
      %v2451 = vpop.f32.mrb[0].mxu0
      %2452 = vmatprep.mubr.bf16.mxu0 %v1477
      %2453 = vmatmul.mubr.bf16.gmra.mrb[0].mxu0 %v1476
      %v2454 = vpop.f32.mrb[0].mxu0
      %v2455 = vadd.f32 %v594, %v2454
      %v2456 = vpop.f32.mrb[0].mxu0
      %v2457 = vpop.f32.mrb[0].mxu0
      %v2458 = vadd.f32 %v594, %v2457
      %v2459 = vpop.f32.mrb[0].mxu0
      %2460 = vmatprep.mubr.bf16.mxu0 %v1479
      %2461 = vmatmul.mubr.bf16.gmra.mrb[0].mxu0 %v1478
      %v2462 = vpop.f32.mrb[0].mxu0
      %v2463 = vadd.f32 %v594, %v2462
      %v2464 = vpop.f32.mrb[0].mxu0
      %v2465 = vpop.f32.mrb[0].mxu0
      %v2466 = vadd.f32 %v594, %v2465
      %v2467 = vpop.f32.mrb[0].mxu0
      %2468 = vmatprep.mubr.bf16.mxu0 %v1481
      %2469 = vmatmul.mubr.bf16.gmra.mrb[0].mxu0 %v1480
      %v2470 = vpop.f32.mrb[0].mxu0
      %v2471 = vadd.f32 %v594, %v2470
      %v2472 = vpop.f32.mrb[0].mxu0
      %v2473 = vpop.f32.mrb[0].mxu0
      %v2474 = vadd.f32 %v594, %v2473
      %v2475 = vpop.f32.mrb[0].mxu0
      %2476 = vmatprep.mubr.bf16.mxu0 %v1483
      %2477 = vmatmul.mubr.bf16.gmra.mrb[0].mxu0 %v1482
      %v2478 = vpop.f32.mrb[0].mxu0
      %v2479 = vadd.f32 %v594, %v2478
      %v2480 = vpop.f32.mrb[0].mxu0
      %v2481 = vpop.f32.mrb[0].mxu0
      %v2482 = vadd.f32 %v594, %v2481
      %v2483 = vpop.f32.mrb[0].mxu0
      %2484 = vmatprep.mubr.bf16.mxu0 %v1485
      %2485 = vmatmul.mubr.bf16.gmra.mrb[0].mxu0 %v1484
      %v2486 = vpop.f32.mrb[0].mxu0
      %v2487 = vadd.f32 %v594, %v2486
      %v2488 = vpop.f32.mrb[0].mxu0
      %v2489 = vpop.f32.mrb[0].mxu0
      %v2490 = vadd.f32 %v594, %v2489
      %v2491 = vpop.f32.mrb[0].mxu0
      %2492 = vmatprep.mubr.bf16.mxu0 %v1487
      %2493 = vmatmul.mubr.bf16.gmra.mrb[0].mxu0 %v1486
      %v2494 = vpop.f32.mrb[0].mxu0
      %v2495 = vadd.f32 %v594, %v2494
      %v2496 = vpop.f32.mrb[0].mxu0
      %v2497 = vpop.f32.mrb[0].mxu0
      %v2498 = vadd.f32 %v594, %v2497
      %v2499 = vpop.f32.mrb[0].mxu0
      %2500 = vmatprep.mubr.bf16.mxu0 %v1489
      %2501 = vmatmul.mubr.bf16.gmra.mrb[0].mxu0 %v1488
      %v2502 = vpop.f32.mrb[0].mxu0
      %v2503 = vadd.f32 %v594, %v2502
      %v2504 = vpop.f32.mrb[0].mxu0
      %v2505 = vpop.f32.mrb[0].mxu0
      %v2506 = vadd.f32 %v594, %v2505
      %v2507 = vpop.f32.mrb[0].mxu0
      %2508 = vmatprep.mubr.bf16.mxu0 %v1491
      %2509 = vmatmul.mubr.bf16.gmra.mrb[0].mxu0 %v1490
      %v2510 = vpop.f32.mrb[0].mxu0
      %v2511 = vadd.f32 %v594, %v2510
      %v2512 = vpop.f32.mrb[0].mxu0
      %v2513 = vpop.f32.mrb[0].mxu0
      %v2514 = vadd.f32 %v594, %v2513
      %v2515 = vpop.f32.mrb[0].mxu0
      %2516 = vmatprep.mubr.bf16.mxu0 %v1493
      %2517 = vmatmul.mubr.bf16.gmra.mrb[0].mxu0 %v1492
      %v2518 = vpop.f32.mrb[0].mxu0
      %v2519 = vadd.f32 %v594, %v2518
      %v2520 = vpop.f32.mrb[0].mxu0
      %v2521 = vpop.f32.mrb[0].mxu0
      %v2522 = vadd.f32 %v594, %v2521
      %v2523 = vpop.f32.mrb[0].mxu0
      %2524 = vmatprep.mubr.bf16.mxu0 %v1495
      %2525 = vmatmul.mubr.bf16.gmra.mrb[0].mxu0 %v1494
      %v2526 = vpop.f32.mrb[0].mxu0
      %v2527 = vadd.f32 %v594, %v2526
      %v2528 = vpop.f32.mrb[0].mxu0
      %v2529 = vpop.f32.mrb[0].mxu0
      %v2530 = vadd.f32 %v594, %v2529
      %v2531 = vpop.f32.mrb[0].mxu0
      %2532 = vmatprep.mubr.bf16.mxu0 %v1497
      %2533 = vmatmul.mubr.bf16.gmra.mrb[0].mxu0 %v1496
      %v2534 = vpop.f32.mrb[0].mxu0
      %v2535 = vadd.f32 %v594, %v2534
      %v2536 = vpop.f32.mrb[0].mxu0
      %v2537 = vpop.f32.mrb[0].mxu0
      %v2538 = vadd.f32 %v594, %v2537
      %v2539 = vpop.f32.mrb[0].mxu0
      %2540 = vmatprep.mubr.bf16.mxu0 %v1499
      %2541 = vmatmul.mubr.bf16.gmra.mrb[0].mxu0 %v1498
      %v2542 = vpop.f32.mrb[0].mxu0
      %v2543 = vadd.f32 %v594, %v2542
      %v2544 = vpop.f32.mrb[0].mxu0
      %v2545 = vpop.f32.mrb[0].mxu0
      %v2546 = vadd.f32 %v594, %v2545
      %v2547 = vpop.f32.mrb[0].mxu0
      %2548 = vmatprep.mubr.bf16.mxu0 %v1501
      %2549 = vmatmul.mubr.bf16.gmra.mrb[0].mxu0 %v1500
      %v2550 = vpop.f32.mrb[0].mxu0
      %v2551 = vadd.f32 %v594, %v2550
      %v2552 = vpop.f32.mrb[0].mxu0
      %v2553 = vpop.f32.mrb[0].mxu0
      %v2554 = vadd.f32 %v594, %v2553
      %v2555 = vpop.f32.mrb[0].mxu0
      %2556 = vmatprep.mubr.bf16.mxu0 %v1503
      %2557 = vmatmul.mubr.bf16.gmra.mrb[0].mxu0 %v1502
      %v2558 = vpop.f32.mrb[0].mxu0
      %v2559 = vadd.f32 %v594, %v2558
      %v2560 = vpop.f32.mrb[0].mxu0
      %v2561 = vpop.f32.mrb[0].mxu0
      %v2562 = vadd.f32 %v594, %v2561
      %v2563 = vpop.f32.mrb[0].mxu0
      %2564 = vmatprep.mubr.bf16.mxu0 %v1505
      %2565 = vmatmul.mubr.bf16.gmra.mrb[0].mxu0 %v1504
      %v2566 = vpop.f32.mrb[0].mxu0
      %v2567 = vadd.f32 %v594, %v2566
      %v2568 = vpop.f32.mrb[0].mxu0
      %v2569 = vpop.f32.mrb[0].mxu0
      %v2570 = vadd.f32 %v594, %v2569
      %v2571 = vpop.f32.mrb[0].mxu0
      %2572 = vmatprep.mubr.bf16.mxu0 %v1507
      %2573 = vmatmul.mubr.bf16.gmra.mrb[0].mxu0 %v1506
      %v2574 = vpop.f32.mrb[0].mxu0
      %v2575 = vadd.f32 %v594, %v2574
      %v2576 = vpop.f32.mrb[0].mxu0
      %v2577 = vpop.f32.mrb[0].mxu0
      %v2578 = vadd.f32 %v594, %v2577
      %v2579 = vpop.f32.mrb[0].mxu0
      %2580 = vmatprep.mubr.bf16.mxu0 %v1509
      %2581 = vmatmul.mubr.bf16.gmra.mrb[0].mxu0 %v1508
      %v2582 = vpop.f32.mrb[0].mxu0
      %v2583 = vadd.f32 %v594, %v2582
      %v2584 = vpop.f32.mrb[0].mxu0
      %v2585 = vpop.f32.mrb[0].mxu0
      %v2586 = vadd.f32 %v594, %v2585
      %v2587 = vpop.f32.mrb[0].mxu0
      %2588 = vmatprep.mubr.bf16.mxu0 %v1511
      %2589 = vmatmul.mubr.bf16.gmra.mrb[0].mxu0 %v1510
      %v2590 = vpop.f32.mrb[0].mxu0
      %v2591 = vadd.f32 %v594, %v2590
      %v2592 = vpop.f32.mrb[0].mxu0
      %v2593 = vpop.f32.mrb[0].mxu0
      %v2594 = vadd.f32 %v594, %v2593
      %v2595 = vpop.f32.mrb[0].mxu0
      %2596 = vmatprep.mubr.bf16.mxu0 %v1513
      %2597 = vmatmul.mubr.bf16.gmra.mrb[0].mxu0 %v1512
      %v2598 = vpop.f32.mrb[0].mxu0
      %v2599 = vadd.f32 %v594, %v2598
      %v2600 = vpop.f32.mrb[0].mxu0
      %v2601 = vpop.f32.mrb[0].mxu0
      %v2602 = vadd.f32 %v594, %v2601
      %v2603 = vpop.f32.mrb[0].mxu0
      %2604 = vmatprep.mubr.bf16.mxu0 %v1515
      %2605 = vmatmul.mubr.bf16.gmra.mrb[0].mxu0 %v1514
      %v2606 = vpop.f32.mrb[0].mxu0
      %v2607 = vadd.f32 %v594, %v2606
      %v2608 = vpop.f32.mrb[0].mxu0
      %v2609 = vpop.f32.mrb[0].mxu0
      %v2610 = vadd.f32 %v594, %v2609
      %v2611 = vpop.f32.mrb[0].mxu0
      %2612 = vmatprep.mubr.bf16.mxu0 %v1517
      %2613 = vmatmul.mubr.bf16.gmra.mrb[0].mxu0 %v1516
      %v2614 = vpop.f32.mrb[0].mxu0
      %v2615 = vadd.f32 %v594, %v2614
      %v2616 = vpop.f32.mrb[0].mxu0
      %v2617 = vpop.f32.mrb[0].mxu0
      %v2618 = vadd.f32 %v594, %v2617
      %v2619 = vpop.f32.mrb[0].mxu0
      %2620 = vmatprep.mubr.bf16.mxu0 %v1519
      %2621 = vmatmul.mubr.bf16.gmra.mrb[0].mxu0 %v1518
      %v2622 = vpop.f32.mrb[0].mxu0
      %v2623 = vadd.f32 %v594, %v2622
      %v2624 = vpop.f32.mrb[0].mxu0
      %v2625 = vpop.f32.mrb[0].mxu0
      %v2626 = vadd.f32 %v594, %v2625
      %v2627 = vpop.f32.mrb[0].mxu0
      %2628 = vmatprep.mubr.bf16.mxu0 %v1521
      %2629 = vmatmul.mubr.bf16.gmra.mrb[0].mxu0 %v1520
      %v2630 = vpop.f32.mrb[0].mxu0
      %v2631 = vadd.f32 %v594, %v2630
      %v2632 = vpop.f32.mrb[0].mxu0
      %v2633 = vpop.f32.mrb[0].mxu0
      %v2634 = vadd.f32 %v594, %v2633
      %v2635 = vpop.f32.mrb[0].mxu0
      %2636 = vmatprep.mubr.bf16.mxu0 %v1523
      %2637 = vmatmul.mubr.bf16.gmra.mrb[0].mxu0 %v1522
      %v2638 = vpop.f32.mrb[0].mxu0
      %v2639 = vadd.f32 %v594, %v2638
      %v2640 = vpop.f32.mrb[0].mxu0
      %v2641 = vpop.f32.mrb[0].mxu0
      %v2642 = vadd.f32 %v594, %v2641
      %v2643 = vpop.f32.mrb[0].mxu0
      %2644 = vmatprep.mubr.bf16.mxu0 %v1525
      %2645 = vmatmul.mubr.bf16.gmra.mrb[0].mxu0 %v1524
      %v2646 = vpop.f32.mrb[0].mxu0
      %v2647 = vadd.f32 %v594, %v2646
      %v2648 = vpop.f32.mrb[0].mxu0
      %v2649 = vpop.f32.mrb[0].mxu0
      %v2650 = vadd.f32 %v594, %v2649
      %v2651 = vpop.f32.mrb[0].mxu0
      %2652 = vmatprep.mubr.bf16.mxu0 %v1527
      %2653 = vmatmul.mubr.bf16.gmra.mrb[0].mxu0 %v1526
      %v2654 = vpop.f32.mrb[0].mxu0
      %v2655 = vadd.f32 %v594, %v2654
      %v2656 = vpop.f32.mrb[0].mxu0
      %v2657 = vpop.f32.mrb[0].mxu0
      %v2658 = vadd.f32 %v594, %v2657
      %v2659 = vpop.f32.mrb[0].mxu0
      %2660 = vmatprep.mubr.bf16.mxu0 %v1529
      %2661 = vmatmul.mubr.bf16.gmra.mrb[0].mxu0 %v1528
      %v2662 = vpop.f32.mrb[0].mxu0
      %v2663 = vadd.f32 %v594, %v2662
      %v2664 = vpop.f32.mrb[0].mxu0
      %v2665 = vpop.f32.mrb[0].mxu0
      %v2666 = vadd.f32 %v594, %v2665
      %v2667 = vpop.f32.mrb[0].mxu0
      %2668 = vmatprep.mubr.bf16.mxu0 %v1531
      %2669 = vmatmul.mubr.bf16.gmra.mrb[0].mxu0 %v1530
      %v2670 = vpop.f32.mrb[0].mxu0
      %v2671 = vadd.f32 %v594, %v2670
      %v2672 = vpop.f32.mrb[0].mxu0
      %v2673 = vpop.f32.mrb[0].mxu0
      %v2674 = vadd.f32 %v594, %v2673
      %v2675 = vpop.f32.mrb[0].mxu0
      %2676 = vmatprep.mubr.bf16.mxu0 %v1533
      %2677 = vmatmul.mubr.bf16.gmra.mrb[0].mxu0 %v1532
      %v2678 = vpop.f32.mrb[0].mxu0
      %v2679 = vadd.f32 %v594, %v2678
      %v2680 = vpop.f32.mrb[0].mxu0
      %v2681 = vpop.f32.mrb[0].mxu0
      %v2682 = vadd.f32 %v594, %v2681
      %v2683 = vpop.f32.mrb[0].mxu0
      %2684 = vmatprep.mubr.bf16.mxu0 %v1535
      %2685 = vmatmul.mubr.bf16.gmra.mrb[0].mxu0 %v1534
      %v2686 = vpop.f32.mrb[0].mxu0
      %v2687 = vadd.f32 %v594, %v2686
      %v2688 = vpop.f32.mrb[0].mxu0
      %v2689 = vpop.f32.mrb[0].mxu0
      %v2690 = vadd.f32 %v594, %v2689
      %v2691 = vpop.f32.mrb[0].mxu0
      %2692 = vmatprep.mubr.bf16.mxu0 %v1537
      %2693 = vmatmul.mubr.bf16.gmra.mrb[0].mxu0 %v1536
      %v2694 = vpop.f32.mrb[0].mxu0
      %v2695 = vadd.f32 %v594, %v2694
      %v2696 = vpop.f32.mrb[0].mxu0
      %v2697 = vpop.f32.mrb[0].mxu0
      %v2698 = vadd.f32 %v594, %v2697
      %v2699 = vpop.f32.mrb[0].mxu0
      %2700 = vmatprep.mubr.bf16.mxu0 %v1539
      %2701 = vmatmul.mubr.bf16.gmra.mrb[0].mxu0 %v1538
      %v2702 = vpop.f32.mrb[0].mxu0
      %v2703 = vadd.f32 %v594, %v2702
      %v2704 = vpop.f32.mrb[0].mxu0
      %v2705 = vpop.f32.mrb[0].mxu0
      %v2706 = vadd.f32 %v594, %v2705
      %v2707 = vpop.f32.mrb[0].mxu0
      %2708 = vmatprep.mubr.bf16.mxu0 %v1541
      %2709 = vmatmul.mubr.bf16.gmra.mrb[0].mxu0 %v1540
      %v2710 = vpop.f32.mrb[0].mxu0
      %v2711 = vadd.f32 %v594, %v2710
      %v2712 = vpop.f32.mrb[0].mxu0
      %v2713 = vpop.f32.mrb[0].mxu0
      %v2714 = vadd.f32 %v594, %v2713
      %v2715 = vpop.f32.mrb[0].mxu0
      %2716 = vmatprep.mubr.bf16.mxu0 %v1543
      %2717 = vmatmul.mubr.bf16.gmra.mrb[0].mxu0 %v1542
      %v2718 = vpop.f32.mrb[0].mxu0
      %v2719 = vadd.f32 %v594, %v2718
      %v2720 = vpop.f32.mrb[0].mxu0
      %v2721 = vpop.f32.mrb[0].mxu0
      %v2722 = vadd.f32 %v594, %v2721
      %v2723 = vpop.f32.mrb[0].mxu0
      %2724 = vmatprep.mubr.bf16.mxu0 %v1545
      %2725 = vmatmul.mubr.bf16.gmra.mrb[0].mxu0 %v1544
      %v2726 = vpop.f32.mrb[0].mxu0
      %v2727 = vadd.f32 %v594, %v2726
      %v2728 = vpop.f32.mrb[0].mxu0
      %v2729 = vpop.f32.mrb[0].mxu0
      %v2730 = vadd.f32 %v594, %v2729
      %v2731 = vpop.f32.mrb[0].mxu0
      %2732 = vmatprep.mubr.bf16.mxu0 %v1547
      %2733 = vmatmul.mubr.bf16.gmra.mrb[0].mxu0 %v1546
      %v2734 = vpop.f32.mrb[0].mxu0
      %v2735 = vadd.f32 %v594, %v2734
      %v2736 = vpop.f32.mrb[0].mxu0
      %v2737 = vpop.f32.mrb[0].mxu0
      %v2738 = vadd.f32 %v594, %v2737
      %v2739 = vpop.f32.mrb[0].mxu0
      %2740 = vmatprep.mubr.bf16.mxu0 %v1549
      %2741 = vmatmul.mubr.bf16.gmra.mrb[0].mxu0 %v1548
      %v2742 = vpop.f32.mrb[0].mxu0
      %v2743 = vadd.f32 %v594, %v2742
      %v2744 = vpop.f32.mrb[0].mxu0
      %v2745 = vpop.f32.mrb[0].mxu0
      %v2746 = vadd.f32 %v594, %v2745
      %v2747 = vpop.f32.mrb[0].mxu0
      %2748 = vmatprep.mubr.bf16.mxu0 %v1551
      %2749 = vmatmul.mubr.bf16.gmra.mrb[0].mxu0 %v1550
      %v2750 = vpop.f32.mrb[0].mxu0
      %v2751 = vadd.f32 %v594, %v2750
      %v2752 = vpop.f32.mrb[0].mxu0
      %v2753 = vpop.f32.mrb[0].mxu0
      %v2754 = vadd.f32 %v594, %v2753
      %v2755 = vpop.f32.mrb[0].mxu0
      %2756 = vmatprep.mubr.bf16.mxu0 %v1553
      %2757 = vmatmul.mubr.bf16.gmra.mrb[0].mxu0 %v1552
      %v2758 = vpop.f32.mrb[0].mxu0
      %v2759 = vadd.f32 %v594, %v2758
      %v2760 = vpop.f32.mrb[0].mxu0
      %v2761 = vpop.f32.mrb[0].mxu0
      %v2762 = vadd.f32 %v594, %v2761
      %v2763 = vpop.f32.mrb[0].mxu0
      %2764 = vmatprep.mubr.bf16.mxu0 %v1555
      %2765 = vmatmul.mubr.bf16.gmra.mrb[0].mxu0 %v1554
      %v2766 = vpop.f32.mrb[0].mxu0
      %v2767 = vadd.f32 %v594, %v2766
      %v2768 = vpop.f32.mrb[0].mxu0
      %v2769 = vpop.f32.mrb[0].mxu0
      %v2770 = vadd.f32 %v594, %v2769
      %v2771 = vpop.f32.mrb[0].mxu0
      %2772 = vmatprep.mubr.bf16.mxu0 %v1557
      %2773 = vmatmul.mubr.bf16.gmra.mrb[0].mxu0 %v1556
      %v2774 = vpop.f32.mrb[0].mxu0
      %v2775 = vadd.f32 %v594, %v2774
      %v2776 = vpop.f32.mrb[0].mxu0
      %v2777 = vpop.f32.mrb[0].mxu0
      %v2778 = vadd.f32 %v594, %v2777
      %v2779 = vpop.f32.mrb[0].mxu0
      %2780 = vmatprep.mubr.bf16.mxu0 %v1559
      %2781 = vmatmul.mubr.bf16.gmra.mrb[0].mxu0 %v1558
      %v2782 = vpop.f32.mrb[0].mxu0
      %v2783 = vadd.f32 %v594, %v2782
      %v2784 = vpop.f32.mrb[0].mxu0
      %v2785 = vpop.f32.mrb[0].mxu0
      %v2786 = vadd.f32 %v594, %v2785
      %v2787 = vpop.f32.mrb[0].mxu0
      %2788 = vmatprep.mubr.bf16.mxu0 %v1561
      %2789 = vmatmul.mubr.bf16.gmra.mrb[0].mxu0 %v1560
      %v2790 = vpop.f32.mrb[0].mxu0
      %v2791 = vadd.f32 %v594, %v2790
      %v2792 = vpop.f32.mrb[0].mxu0
      %v2793 = vpop.f32.mrb[0].mxu0
      %v2794 = vadd.f32 %v594, %v2793
      %v2795 = vpop.f32.mrb[0].mxu0
      %2796 = vmatprep.mubr.bf16.mxu0 %v1563
      %2797 = vmatmul.mubr.bf16.gmra.mrb[0].mxu0 %v1562
      %v2798 = vpop.f32.mrb[0].mxu0
      %v2799 = vadd.f32 %v594, %v2798
      %v2800 = vpop.f32.mrb[0].mxu0
      %v2801 = vpop.f32.mrb[0].mxu0
      %v2802 = vadd.f32 %v594, %v2801
      %v2803 = vpop.f32.mrb[0].mxu0
      %2804 = vmatprep.mubr.bf16.mxu0 %v1565
      %2805 = vmatmul.mubr.bf16.gmra.mrb[0].mxu0 %v1564
      %v2806 = vpop.f32.mrb[0].mxu0
      %v2807 = vadd.f32 %v594, %v2806
      %v2808 = vpop.f32.mrb[0].mxu0
      %v2809 = vpop.f32.mrb[0].mxu0
      %v2810 = vadd.f32 %v594, %v2809
      %v2811 = vpop.f32.mrb[0].mxu0
      %2812 = vmatprep.mubr.bf16.mxu0 %v1567
      %2813 = vmatmul.mubr.bf16.gmra.mrb[0].mxu0 %v1566
      %v2814 = vpop.f32.mrb[0].mxu0
      %v2815 = vadd.f32 %v594, %v2814
      %v2816 = vpop.f32.mrb[0].mxu0
      %v2817 = vpop.f32.mrb[0].mxu0
      %v2818 = vadd.f32 %v594, %v2817
      %v2819 = vpop.f32.mrb[0].mxu0
      %2820 = vmatprep.mubr.bf16.mxu0 %v1569
      %2821 = vmatmul.mubr.bf16.gmra.mrb[0].mxu0 %v1568
      %v2822 = vpop.f32.mrb[0].mxu0
      %v2823 = vadd.f32 %v594, %v2822
      %v2824 = vpop.f32.mrb[0].mxu0
      %v2825 = vpop.f32.mrb[0].mxu0
      %v2826 = vadd.f32 %v594, %v2825
      %v2827 = vpop.f32.mrb[0].mxu0
      %2828 = vmatprep.mubr.bf16.mxu0 %v1571
      %2829 = vmatmul.mubr.bf16.gmra.mrb[0].mxu0 %v1570
      %v2830 = vpop.f32.mrb[0].mxu0
      %v2831 = vadd.f32 %v594, %v2830
      %v2832 = vpop.f32.mrb[0].mxu0
      %v2833 = vpop.f32.mrb[0].mxu0
      %v2834 = vadd.f32 %v594, %v2833
      %v2835 = vpop.f32.mrb[0].mxu0
      %2836 = vmatprep.mubr.bf16.mxu0 %v1573
      %2837 = vmatmul.mubr.bf16.gmra.mrb[0].mxu0 %v1572
      %v2838 = vpop.f32.mrb[0].mxu0
      %v2839 = vadd.f32 %v594, %v2838
      %v2840 = vpop.f32.mrb[0].mxu0
      %v2841 = vpop.f32.mrb[0].mxu0
      %v2842 = vadd.f32 %v594, %v2841
      %v2843 = vpop.f32.mrb[0].mxu0
      %2844 = vmatprep.mubr.bf16.mxu0 %v1575
      %2845 = vmatmul.mubr.bf16.gmra.mrb[0].mxu0 %v1574
      %v2846 = vpop.f32.mrb[0].mxu0
      %v2847 = vadd.f32 %v594, %v2846
      %v2848 = vpop.f32.mrb[0].mxu0
      %v2849 = vpop.f32.mrb[0].mxu0
      %v2850 = vadd.f32 %v594, %v2849
      %v2851 = vpop.f32.mrb[0].mxu0
      %2852 = vmatprep.mubr.bf16.mxu0 %v1577
      %2853 = vmatmul.mubr.bf16.gmra.mrb[0].mxu0 %v1576
      %v2854 = vpop.f32.mrb[0].mxu0
      %v2855 = vadd.f32 %v594, %v2854
      %v2856 = vpop.f32.mrb[0].mxu0
      %v2857 = vpop.f32.mrb[0].mxu0
      %v2858 = vadd.f32 %v594, %v2857
      %v2859 = vpop.f32.mrb[0].mxu0
      %2860 = vmatprep.mubr.bf16.mxu0 %v1579
      %2861 = vmatmul.mubr.bf16.gmra.mrb[0].mxu0 %v1578
      %v2862 = vpop.f32.mrb[0].mxu0
      %v2863 = vadd.f32 %v594, %v2862
      %v2864 = vpop.f32.mrb[0].mxu0
      %v2865 = vpop.f32.mrb[0].mxu0
      %v2866 = vadd.f32 %v594, %v2865
      %v2867 = vpop.f32.mrb[0].mxu0
      %2868 = vmatprep.mubr.bf16.mxu0 %v1581
      %2869 = vmatmul.mubr.bf16.gmra.mrb[0].mxu0 %v1580
      %v2870 = vpop.f32.mrb[0].mxu0
      %v2871 = vadd.f32 %v594, %v2870
      %v2872 = vpop.f32.mrb[0].mxu0
      %v2873 = vpop.f32.mrb[0].mxu0
      %v2874 = vadd.f32 %v594, %v2873
      %v2875 = vpop.f32.mrb[0].mxu0
      %2876 = vmatprep.mubr.bf16.mxu0 %v1583
      %2877 = vmatmul.mubr.bf16.gmra.mrb[0].mxu0 %v1582
      %v2878 = vpop.f32.mrb[0].mxu0
      %v2879 = vadd.f32 %v594, %v2878
      %v2880 = vpop.f32.mrb[0].mxu0
      %v2881 = vpop.f32.mrb[0].mxu0
      %v2882 = vadd.f32 %v594, %v2881
      %v2883 = vpop.f32.mrb[0].mxu0
      %2884 = vmatprep.mubr.bf16.mxu0 %v1585
      %2885 = vmatmul.mubr.bf16.gmra.mrb[0].mxu0 %v1584
      %v2886 = vpop.f32.mrb[0].mxu0
      %v2887 = vadd.f32 %v594, %v2886
      %v2888 = vpop.f32.mrb[0].mxu0
      %v2889 = vpop.f32.mrb[0].mxu0
      %v2890 = vadd.f32 %v594, %v2889
      %v2891 = vpop.f32.mrb[0].mxu0
      %2892 = vmatprep.mubr.bf16.mxu0 %v1587
      %2893 = vmatmul.mubr.bf16.gmra.mrb[0].mxu0 %v1586
      %v2894 = vpop.f32.mrb[0].mxu0
      %v2895 = vadd.f32 %v594, %v2894
      %v2896 = vpop.f32.mrb[0].mxu0
      %v2897 = vpop.f32.mrb[0].mxu0
      %v2898 = vadd.f32 %v594, %v2897
      %v2899 = vpop.f32.mrb[0].mxu0
      %2900 = vmatprep.mubr.bf16.mxu0 %v1589
      %2901 = vmatmul.mubr.bf16.gmra.mrb[0].mxu0 %v1588
      %v2902 = vpop.f32.mrb[0].mxu0
      %v2903 = vadd.f32 %v594, %v2902
      %v2904 = vpop.f32.mrb[0].mxu0
      %v2905 = vpop.f32.mrb[0].mxu0
      %v2906 = vadd.f32 %v594, %v2905
      %v2907 = vpop.f32.mrb[0].mxu0
      %2908 = vmatprep.mubr.bf16.mxu0 %v1591
      %2909 = vmatmul.mubr.bf16.gmra.mrb[0].mxu0 %v1590
      %v2910 = vpop.f32.mrb[0].mxu0
      %v2911 = vadd.f32 %v594, %v2910
      %v2912 = vpop.f32.mrb[0].mxu0
      %v2913 = vpop.f32.mrb[0].mxu0
      %v2914 = vadd.f32 %v594, %v2913
      %v2915 = vpop.f32.mrb[0].mxu0
      %2916 = vmatprep.mubr.bf16.mxu0 %v1593
      %2917 = vmatmul.mubr.bf16.gmra.mrb[0].mxu0 %v1592
      %v2918 = vpop.f32.mrb[0].mxu0
      %v2919 = vadd.f32 %v594, %v2918
      %v2920 = vpop.f32.mrb[0].mxu0
      %v2921 = vpop.f32.mrb[0].mxu0
      %v2922 = vadd.f32 %v594, %v2921
      %v2923 = vpop.f32.mrb[0].mxu0
      %2924 = vmatprep.mubr.bf16.mxu0 %v1595
      %2925 = vmatmul.mubr.bf16.gmra.mrb[0].mxu0 %v1594
      %v2926 = vpop.f32.mrb[0].mxu0
      %v2927 = vadd.f32 %v594, %v2926
      %v2928 = vpop.f32.mrb[0].mxu0
      %v2929 = vpop.f32.mrb[0].mxu0
      %v2930 = vadd.f32 %v594, %v2929
      %v2931 = vpop.f32.mrb[0].mxu0
      %2932 = vmatprep.mubr.bf16.mxu0 %v1597
      %2933 = vmatmul.mubr.bf16.gmra.mrb[0].mxu0 %v1596
      %v2934 = vpop.f32.mrb[0].mxu0
      %v2935 = vadd.f32 %v594, %v2934
      %v2936 = vpop.f32.mrb[0].mxu0
      %v2937 = vpop.f32.mrb[0].mxu0
      %v2938 = vadd.f32 %v594, %v2937
      %v2939 = vpop.f32.mrb[0].mxu0
      %2940 = vmatprep.mubr.bf16.mxu0 %v1599
      %2941 = vmatmul.mubr.bf16.gmra.mrb[0].mxu0 %v1598
      %v2942 = vpop.f32.mrb[0].mxu0
      %v2943 = vadd.f32 %v594, %v2942
      %v2944 = vpop.f32.mrb[0].mxu0
      %v2945 = vpop.f32.mrb[0].mxu0
      %v2946 = vadd.f32 %v594, %v2945
      %v2947 = vpop.f32.mrb[0].mxu0
      %2948 = vmatprep.mubr.bf16.mxu0 %v1601
      %2949 = vmatmul.mubr.bf16.gmra.mrb[0].mxu0 %v1600
      %v2950 = vpop.f32.mrb[0].mxu0
      %v2951 = vadd.f32 %v594, %v2950
      %v2952 = vpop.f32.mrb[0].mxu0
      %v2953 = vpop.f32.mrb[0].mxu0
      %v2954 = vadd.f32 %v594, %v2953
      %v2955 = vpop.f32.mrb[0].mxu0
      %2956 = vmatprep.mubr.bf16.mxu0 %v1603
      %2957 = vmatmul.mubr.bf16.gmra.mrb[0].mxu0 %v1602
      %v2958 = vpop.f32.mrb[0].mxu0
      %v2959 = vadd.f32 %v594, %v2958
      %v2960 = vpop.f32.mrb[0].mxu0
      %v2961 = vpop.f32.mrb[0].mxu0
      %v2962 = vadd.f32 %v594, %v2961
      %v2963 = vpop.f32.mrb[0].mxu0
      %2964 = vmatprep.mubr.bf16.mxu0 %v1605
      %2965 = vmatmul.mubr.bf16.gmra.mrb[0].mxu0 %v1604
      %v2966 = vpop.f32.mrb[0].mxu0
      %v2967 = vadd.f32 %v594, %v2966
      %v2968 = vpop.f32.mrb[0].mxu0
      %v2969 = vpop.f32.mrb[0].mxu0
      %v2970 = vadd.f32 %v594, %v2969
      %v2971 = vpop.f32.mrb[0].mxu0
      %2972 = vmatprep.mubr.bf16.mxu0 %v1607
      %2973 = vmatmul.mubr.bf16.gmra.mrb[0].mxu0 %v1606
      %v2974 = vpop.f32.mrb[0].mxu0
      %v2975 = vadd.f32 %v594, %v2974
      %v2976 = vpop.f32.mrb[0].mxu0
      %v2977 = vpop.f32.mrb[0].mxu0
      %v2978 = vadd.f32 %v594, %v2977
      %v2979 = vpop.f32.mrb[0].mxu0
      %2980 = vmatprep.mubr.bf16.mxu0 %v1609
      %2981 = vmatmul.mubr.bf16.gmra.mrb[0].mxu0 %v1608
      %v2982 = vpop.f32.mrb[0].mxu0
      %v2983 = vadd.f32 %v594, %v2982
      %v2984 = vpop.f32.mrb[0].mxu0
      %v2985 = vpop.f32.mrb[0].mxu0
      %v2986 = vadd.f32 %v594, %v2985
      %v2987 = vpop.f32.mrb[0].mxu0
      %2988 = vmatprep.mubr.bf16.mxu0 %v1611
      %2989 = vmatmul.mubr.bf16.gmra.mrb[0].mxu0 %v1610
      %v2990 = vpop.f32.mrb[0].mxu0
      %v2991 = vadd.f32 %v594, %v2990
      %v2992 = vpop.f32.mrb[0].mxu0
      %v2993 = vpop.f32.mrb[0].mxu0
      %v2994 = vadd.f32 %v594, %v2993
      %v2995 = vpop.f32.mrb[0].mxu0
      %2996 = vmatprep.mubr.bf16.mxu0 %v1613
      %2997 = vmatmul.mubr.bf16.gmra.mrb[0].mxu0 %v1612
      %v2998 = vpop.f32.mrb[0].mxu0
      %v2999 = vadd.f32 %v594, %v2998
      %v3000 = vpop.f32.mrb[0].mxu0
      %v3001 = vpop.f32.mrb[0].mxu0
      %v3002 = vadd.f32 %v594, %v3001
      %v3003 = vpop.f32.mrb[0].mxu0
      %3004 = vmatprep.mubr.bf16.mxu0 %v1615
      %3005 = vmatmul.mubr.bf16.gmra.mrb[0].mxu0 %v1614
      %v3006 = vpop.f32.mrb[0].mxu0
      %v3007 = vadd.f32 %v594, %v3006
      %v3008 = vpop.f32.mrb[0].mxu0
      %v3009 = vpop.f32.mrb[0].mxu0
      %v3010 = vadd.f32 %v594, %v3009
      %v3011 = vpop.f32.mrb[0].mxu0
      %3012 = vmatprep.mubr.bf16.mxu0 %v1617
      %3013 = vmatmul.mubr.bf16.gmra.mrb[0].mxu0 %v1616
      %v3014 = vpop.f32.mrb[0].mxu0
      %v3015 = vadd.f32 %v594, %v3014
      %v3016 = vpop.f32.mrb[0].mxu0
      %v3017 = vpop.f32.mrb[0].mxu0
      %v3018 = vadd.f32 %v594, %v3017
      %v3019 = vpop.f32.mrb[0].mxu0
      %3020 = vmatprep.mubr.bf16.mxu0 %v1619
      %3021 = vmatmul.mubr.bf16.gmra.mrb[0].mxu0 %v1618
      %v3022 = vpop.f32.mrb[0].mxu0
      %v3023 = vadd.f32 %v594, %v3022
      %v3024 = vpop.f32.mrb[0].mxu0
      %v3025 = vpop.f32.mrb[0].mxu0
      %v3026 = vadd.f32 %v594, %v3025
      %v3027 = vpop.f32.mrb[0].mxu0
      %3028 = vdwg.mxu0
      %v3029 = vmax.f32 %v2007, 0.0
      %v3030 = vmax.f32 %v2010, 0.0
      %v3031 = vmax.f32 %v2015, 0.0
      %v3032 = vmax.f32 %v2018, 0.0
      %v3033 = vmax.f32 %v2023, 0.0
      %v3034 = vmax.f32 %v2026, 0.0
      %v3035 = vmax.f32 %v2031, 0.0
      %v3036 = vmax.f32 %v2034, 0.0
      %v3037 = vmax.f32 %v2039, 0.0
      %v3038 = vmax.f32 %v2042, 0.0
      %v3039 = vmax.f32 %v2047, 0.0
      %v3040 = vmax.f32 %v2050, 0.0
      %v3041 = vmax.f32 %v2055, 0.0
      %v3042 = vmax.f32 %v2058, 0.0
      %v3043 = vmax.f32 %v2063, 0.0
      %v3044 = vmax.f32 %v2066, 0.0
      %v3045 = vmax.f32 %v2071, 0.0
      %v3046 = vmax.f32 %v2074, 0.0
      %v3047 = vmax.f32 %v2079, 0.0
      %v3048 = vmax.f32 %v2082, 0.0
      %v3049 = vmax.f32 %v2087, 0.0
      %v3050 = vmax.f32 %v2090, 0.0
      %v3051 = vmax.f32 %v2095, 0.0
      %v3052 = vmax.f32 %v2098, 0.0
      %v3053 = vmax.f32 %v2103, 0.0
      %v3054 = vmax.f32 %v2106, 0.0
      %v3055 = vmax.f32 %v2111, 0.0
      %v3056 = vmax.f32 %v2114, 0.0
      %v3057 = vmax.f32 %v2119, 0.0
      %v3058 = vmax.f32 %v2122, 0.0
      %v3059 = vmax.f32 %v2127, 0.0
      %v3060 = vmax.f32 %v2130, 0.0
      %v3061 = vmax.f32 %v2135, 0.0
      %v3062 = vmax.f32 %v2138, 0.0
      %v3063 = vmax.f32 %v2143, 0.0
      %v3064 = vmax.f32 %v2146, 0.0
      %v3065 = vmax.f32 %v2151, 0.0
      %v3066 = vmax.f32 %v2154, 0.0
      %v3067 = vmax.f32 %v2159, 0.0
      %v3068 = vmax.f32 %v2162, 0.0
      %v3069 = vmax.f32 %v2167, 0.0
      %v3070 = vmax.f32 %v2170, 0.0
      %v3071 = vmax.f32 %v2175, 0.0
      %v3072 = vmax.f32 %v2178, 0.0
      %v3073 = vmax.f32 %v2183, 0.0
      %v3074 = vmax.f32 %v2186, 0.0
      %v3075 = vmax.f32 %v2191, 0.0
      %v3076 = vmax.f32 %v2194, 0.0
      %v3077 = vmax.f32 %v2199, 0.0
      %v3078 = vmax.f32 %v2202, 0.0
      %v3079 = vmax.f32 %v2207, 0.0
      %v3080 = vmax.f32 %v2210, 0.0
      %v3081 = vmax.f32 %v2215, 0.0
      %v3082 = vmax.f32 %v2218, 0.0
      %v3083 = vmax.f32 %v2223, 0.0
      %v3084 = vmax.f32 %v2226, 0.0
      %v3085 = vmax.f32 %v2231, 0.0
      %v3086 = vmax.f32 %v2234, 0.0
      %v3087 = vmax.f32 %v2239, 0.0
      %v3088 = vmax.f32 %v2242, 0.0
      %v3089 = vmax.f32 %v2247, 0.0
      %v3090 = vmax.f32 %v2250, 0.0
      %v3091 = vmax.f32 %v2255, 0.0
      %v3092 = vmax.f32 %v2258, 0.0
      %v3093 = vmax.f32 %v2263, 0.0
      %v3094 = vmax.f32 %v2266, 0.0
      %v3095 = vmax.f32 %v2271, 0.0
      %v3096 = vmax.f32 %v2274, 0.0
      %v3097 = vmax.f32 %v2279, 0.0
      %v3098 = vmax.f32 %v2282, 0.0
      %v3099 = vmax.f32 %v2287, 0.0
      %v3100 = vmax.f32 %v2290, 0.0
      %v3101 = vmax.f32 %v2295, 0.0
      %v3102 = vmax.f32 %v2298, 0.0
      %v3103 = vmax.f32 %v2303, 0.0
      %v3104 = vmax.f32 %v2306, 0.0
      %v3105 = vmax.f32 %v2311, 0.0
      %v3106 = vmax.f32 %v2314, 0.0
      %v3107 = vmax.f32 %v2319, 0.0
      %v3108 = vmax.f32 %v2322, 0.0
      %v3109 = vmax.f32 %v2327, 0.0
      %v3110 = vmax.f32 %v2330, 0.0
      %v3111 = vmax.f32 %v2335, 0.0
      %v3112 = vmax.f32 %v2338, 0.0
      %v3113 = vmax.f32 %v2343, 0.0
      %v3114 = vmax.f32 %v2346, 0.0
      %v3115 = vmax.f32 %v2351, 0.0
      %v3116 = vmax.f32 %v2354, 0.0
      %v3117 = vmax.f32 %v2359, 0.0
      %v3118 = vmax.f32 %v2362, 0.0
      %v3119 = vmax.f32 %v2367, 0.0
      %v3120 = vmax.f32 %v2370, 0.0
      %v3121 = vmax.f32 %v2375, 0.0
      %v3122 = vmax.f32 %v2378, 0.0
      %v3123 = vmax.f32 %v2383, 0.0
      %v3124 = vmax.f32 %v2386, 0.0
      %v3125 = vmax.f32 %v2391, 0.0
      %v3126 = vmax.f32 %v2394, 0.0
      %v3127 = vmax.f32 %v2399, 0.0
      %v3128 = vmax.f32 %v2402, 0.0
      %v3129 = vmax.f32 %v2407, 0.0
      %v3130 = vmax.f32 %v2410, 0.0
      %v3131 = vmax.f32 %v2415, 0.0
      %v3132 = vmax.f32 %v2418, 0.0
      %v3133 = vmax.f32 %v2423, 0.0
      %v3134 = vmax.f32 %v2426, 0.0
      %v3135 = vmax.f32 %v2431, 0.0
      %v3136 = vmax.f32 %v2434, 0.0
      %v3137 = vmax.f32 %v2439, 0.0
      %v3138 = vmax.f32 %v2442, 0.0
      %v3139 = vmax.f32 %v2447, 0.0
      %v3140 = vmax.f32 %v2450, 0.0
      %v3141 = vmax.f32 %v2455, 0.0
      %v3142 = vmax.f32 %v2458, 0.0
      %v3143 = vmax.f32 %v2463, 0.0
      %v3144 = vmax.f32 %v2466, 0.0
      %v3145 = vmax.f32 %v2471, 0.0
      %v3146 = vmax.f32 %v2474, 0.0
      %v3147 = vmax.f32 %v2479, 0.0
      %v3148 = vmax.f32 %v2482, 0.0
      %v3149 = vmax.f32 %v2487, 0.0
      %v3150 = vmax.f32 %v2490, 0.0
      %v3151 = vmax.f32 %v2495, 0.0
      %v3152 = vmax.f32 %v2498, 0.0
      %v3153 = vmax.f32 %v2503, 0.0
      %v3154 = vmax.f32 %v2506, 0.0
      %v3155 = vmax.f32 %v2511, 0.0
      %v3156 = vmax.f32 %v2514, 0.0
      %v3157 = vmax.f32 %v2519, 0.0
      %v3158 = vmax.f32 %v2522, 0.0
      %v3159 = vmax.f32 %v2527, 0.0
      %v3160 = vmax.f32 %v2530, 0.0
      %v3161 = vmax.f32 %v2535, 0.0
      %v3162 = vmax.f32 %v2538, 0.0
      %v3163 = vmax.f32 %v2543, 0.0
      %v3164 = vmax.f32 %v2546, 0.0
      %v3165 = vmax.f32 %v2551, 0.0
      %v3166 = vmax.f32 %v2554, 0.0
      %v3167 = vmax.f32 %v2559, 0.0
      %v3168 = vmax.f32 %v2562, 0.0
      %v3169 = vmax.f32 %v2567, 0.0
      %v3170 = vmax.f32 %v2570, 0.0
      %v3171 = vmax.f32 %v2575, 0.0
      %v3172 = vmax.f32 %v2578, 0.0
      %v3173 = vmax.f32 %v2583, 0.0
      %v3174 = vmax.f32 %v2586, 0.0
      %v3175 = vmax.f32 %v2591, 0.0
      %v3176 = vmax.f32 %v2594, 0.0
      %v3177 = vmax.f32 %v2599, 0.0
      %v3178 = vmax.f32 %v2602, 0.0
      %v3179 = vmax.f32 %v2607, 0.0
      %v3180 = vmax.f32 %v2610, 0.0
      %v3181 = vmax.f32 %v2615, 0.0
      %v3182 = vmax.f32 %v2618, 0.0
      %v3183 = vmax.f32 %v2623, 0.0
      %v3184 = vmax.f32 %v2626, 0.0
      %v3185 = vmax.f32 %v2631, 0.0
      %v3186 = vmax.f32 %v2634, 0.0
      %v3187 = vmax.f32 %v2639, 0.0
      %v3188 = vmax.f32 %v2642, 0.0
      %v3189 = vmax.f32 %v2647, 0.0
      %v3190 = vmax.f32 %v2650, 0.0
      %v3191 = vmax.f32 %v2655, 0.0
      %v3192 = vmax.f32 %v2658, 0.0
      %v3193 = vmax.f32 %v2663, 0.0
      %v3194 = vmax.f32 %v2666, 0.0
      %v3195 = vmax.f32 %v2671, 0.0
      %v3196 = vmax.f32 %v2674, 0.0
      %v3197 = vmax.f32 %v2679, 0.0
      %v3198 = vmax.f32 %v2682, 0.0
      %v3199 = vmax.f32 %v2687, 0.0
      %v3200 = vmax.f32 %v2690, 0.0
      %v3201 = vmax.f32 %v2695, 0.0
      %v3202 = vmax.f32 %v2698, 0.0
      %v3203 = vmax.f32 %v2703, 0.0
      %v3204 = vmax.f32 %v2706, 0.0
      %v3205 = vmax.f32 %v2711, 0.0
      %v3206 = vmax.f32 %v2714, 0.0
      %v3207 = vmax.f32 %v2719, 0.0
      %v3208 = vmax.f32 %v2722, 0.0
      %v3209 = vmax.f32 %v2727, 0.0
      %v3210 = vmax.f32 %v2730, 0.0
      %v3211 = vmax.f32 %v2735, 0.0
      %v3212 = vmax.f32 %v2738, 0.0
      %v3213 = vmax.f32 %v2743, 0.0
      %v3214 = vmax.f32 %v2746, 0.0
      %v3215 = vmax.f32 %v2751, 0.0
      %v3216 = vmax.f32 %v2754, 0.0
      %v3217 = vmax.f32 %v2759, 0.0
      %v3218 = vmax.f32 %v2762, 0.0
      %v3219 = vmax.f32 %v2767, 0.0
      %v3220 = vmax.f32 %v2770, 0.0
      %v3221 = vmax.f32 %v2775, 0.0
      %v3222 = vmax.f32 %v2778, 0.0
      %v3223 = vmax.f32 %v2783, 0.0
      %v3224 = vmax.f32 %v2786, 0.0
      %v3225 = vmax.f32 %v2791, 0.0
      %v3226 = vmax.f32 %v2794, 0.0
      %v3227 = vmax.f32 %v2799, 0.0
      %v3228 = vmax.f32 %v2802, 0.0
      %v3229 = vmax.f32 %v2807, 0.0
      %v3230 = vmax.f32 %v2810, 0.0
      %v3231 = vmax.f32 %v2815, 0.0
      %v3232 = vmax.f32 %v2818, 0.0
      %v3233 = vmax.f32 %v2823, 0.0
      %v3234 = vmax.f32 %v2826, 0.0
      %v3235 = vmax.f32 %v2831, 0.0
      %v3236 = vmax.f32 %v2834, 0.0
      %v3237 = vmax.f32 %v2839, 0.0
      %v3238 = vmax.f32 %v2842, 0.0
      %v3239 = vmax.f32 %v2847, 0.0
      %v3240 = vmax.f32 %v2850, 0.0
      %v3241 = vmax.f32 %v2855, 0.0
      %v3242 = vmax.f32 %v2858, 0.0
      %v3243 = vmax.f32 %v2863, 0.0
      %v3244 = vmax.f32 %v2866, 0.0
      %v3245 = vmax.f32 %v2871, 0.0
      %v3246 = vmax.f32 %v2874, 0.0
      %v3247 = vmax.f32 %v2879, 0.0
      %v3248 = vmax.f32 %v2882, 0.0
      %v3249 = vmax.f32 %v2887, 0.0
      %v3250 = vmax.f32 %v2890, 0.0
      %v3251 = vmax.f32 %v2895, 0.0
      %v3252 = vmax.f32 %v2898, 0.0
      %v3253 = vmax.f32 %v2903, 0.0
      %v3254 = vmax.f32 %v2906, 0.0
      %v3255 = vmax.f32 %v2911, 0.0
      %v3256 = vmax.f32 %v2914, 0.0
      %v3257 = vmax.f32 %v2919, 0.0
      %v3258 = vmax.f32 %v2922, 0.0
      %v3259 = vmax.f32 %v2927, 0.0
      %v3260 = vmax.f32 %v2930, 0.0
      %v3261 = vmax.f32 %v2935, 0.0
      %v3262 = vmax.f32 %v2938, 0.0
      %v3263 = vmax.f32 %v2943, 0.0
      %v3264 = vmax.f32 %v2946, 0.0
      %v3265 = vmax.f32 %v2951, 0.0
      %v3266 = vmax.f32 %v2954, 0.0
      %v3267 = vmax.f32 %v2959, 0.0
      %v3268 = vmax.f32 %v2962, 0.0
      %v3269 = vmax.f32 %v2967, 0.0
      %v3270 = vmax.f32 %v2970, 0.0
      %v3271 = vmax.f32 %v2975, 0.0
      %v3272 = vmax.f32 %v2978, 0.0
      %v3273 = vmax.f32 %v2983, 0.0
      %v3274 = vmax.f32 %v2986, 0.0
      %v3275 = vmax.f32 %v2991, 0.0
      %v3276 = vmax.f32 %v2994, 0.0
      %v3277 = vmax.f32 %v2999, 0.0
      %v3278 = vmax.f32 %v3002, 0.0
      %v3279 = vmax.f32 %v3007, 0.0
      %v3280 = vmax.f32 %v3010, 0.0
      %v3281 = vmax.f32 %v3015, 0.0
      %v3282 = vmax.f32 %v3018, 0.0
      %v3283 = vmax.f32 %v3023, 0.0
      %v3284 = vmax.f32 %v3026, 0.0
      %v3285 = vadd.f32 %v3029, %v3030
      %v3286 = vadd.f32 %v3285, %v3031
      %v3287 = vadd.f32 %v3286, %v3032
      %v3288 = vadd.f32 %v3287, %v3033
      %v3289 = vadd.f32 %v3288, %v3034
      %v3290 = vadd.f32 %v3289, %v3035
      %v3291 = vadd.f32 %v3290, %v3036
      %v3292 = vadd.f32 %v3291, %v3037
      %v3293 = vadd.f32 %v3292, %v3038
      %v3294 = vadd.f32 %v3293, %v3039
      %v3295 = vadd.f32 %v3294, %v3040
      %v3296 = vadd.f32 %v3295, %v3041
      %v3297 = vadd.f32 %v3296, %v3042
      %v3298 = vadd.f32 %v3297, %v3043
      %v3299 = vadd.f32 %v3298, %v3044
      %v3300 = vadd.f32 %v3299, %v3045
      %v3301 = vadd.f32 %v3300, %v3046
      %v3302 = vadd.f32 %v3301, %v3047
      %v3303 = vadd.f32 %v3302, %v3048
      %v3304 = vadd.f32 %v3303, %v3049
      %v3305 = vadd.f32 %v3304, %v3050
      %v3306 = vadd.f32 %v3305, %v3051
      %v3307 = vadd.f32 %v3306, %v3052
      %v3308 = vadd.f32 %v3307, %v3053
      %v3309 = vadd.f32 %v3308, %v3054
      %v3310 = vadd.f32 %v3309, %v3055
      %v3311 = vadd.f32 %v3310, %v3056
      %v3312 = vadd.f32 %v3311, %v3057
      %v3313 = vadd.f32 %v3312, %v3058
      %v3314 = vadd.f32 %v3313, %v3059
      %v3315 = vadd.f32 %v3314, %v3060
      %v3316 = vrot.slane %v3315, 4
      %v3317 = vadd.f32 %v3315, %v3316
      %v3318 = vrot.slane %v3317, 2
      %v3319 = vadd.f32 %v3317, %v3318
      %v3320 = vrot.slane %v3319, 1
      %v3321 = vadd.f32 %v3319, %v3320
      %v3322 = vadd.f32 %v3061, %v3062
      %v3323 = vadd.f32 %v3322, %v3063
      %v3324 = vadd.f32 %v3323, %v3064
      %v3325 = vadd.f32 %v3324, %v3065
      %v3326 = vadd.f32 %v3325, %v3066
      %v3327 = vadd.f32 %v3326, %v3067
      %v3328 = vadd.f32 %v3327, %v3068
      %v3329 = vadd.f32 %v3328, %v3069
      %v3330 = vadd.f32 %v3329, %v3070
      %v3331 = vadd.f32 %v3330, %v3071
      %v3332 = vadd.f32 %v3331, %v3072
      %v3333 = vadd.f32 %v3332, %v3073
      %v3334 = vadd.f32 %v3333, %v3074
      %v3335 = vadd.f32 %v3334, %v3075
      %v3336 = vadd.f32 %v3335, %v3076
      %v3337 = vadd.f32 %v3336, %v3077
      %v3338 = vadd.f32 %v3337, %v3078
      %v3339 = vadd.f32 %v3338, %v3079
      %v3340 = vadd.f32 %v3339, %v3080
      %v3341 = vadd.f32 %v3340, %v3081
      %v3342 = vadd.f32 %v3341, %v3082
      %v3343 = vadd.f32 %v3342, %v3083
      %v3344 = vadd.f32 %v3343, %v3084
      %v3345 = vadd.f32 %v3344, %v3085
      %v3346 = vadd.f32 %v3345, %v3086
      %v3347 = vadd.f32 %v3346, %v3087
      %v3348 = vadd.f32 %v3347, %v3088
      %v3349 = vadd.f32 %v3348, %v3089
      %v3350 = vadd.f32 %v3349, %v3090
      %v3351 = vadd.f32 %v3350, %v3091
      %v3352 = vadd.f32 %v3351, %v3092
      %v3353 = vrot.slane %v3352, 4
      %v3354 = vadd.f32 %v3352, %v3353
      %v3355 = vrot.slane %v3354, 2
      %v3356 = vadd.f32 %v3354, %v3355
      %v3357 = vrot.slane %v3356, 1
      %v3358 = vadd.f32 %v3356, %v3357
      %v3359 = vadd.f32 %v3093, %v3094
      %v3360 = vadd.f32 %v3359, %v3095
      %v3361 = vadd.f32 %v3360, %v3096
      %v3362 = vadd.f32 %v3361, %v3097
      %v3363 = vadd.f32 %v3362, %v3098
      %v3364 = vadd.f32 %v3363, %v3099
      %v3365 = vadd.f32 %v3364, %v3100
      %v3366 = vadd.f32 %v3365, %v3101
      %v3367 = vadd.f32 %v3366, %v3102
      %v3368 = vadd.f32 %v3367, %v3103
      %v3369 = vadd.f32 %v3368, %v3104
      %v3370 = vadd.f32 %v3369, %v3105
      %v3371 = vadd.f32 %v3370, %v3106
      %v3372 = vadd.f32 %v3371, %v3107
      %v3373 = vadd.f32 %v3372, %v3108
      %v3374 = vadd.f32 %v3373, %v3109
      %v3375 = vadd.f32 %v3374, %v3110
      %v3376 = vadd.f32 %v3375, %v3111
      %v3377 = vadd.f32 %v3376, %v3112
      %v3378 = vadd.f32 %v3377, %v3113
      %v3379 = vadd.f32 %v3378, %v3114
      %v3380 = vadd.f32 %v3379, %v3115
      %v3381 = vadd.f32 %v3380, %v3116
      %v3382 = vadd.f32 %v3381, %v3117
      %v3383 = vadd.f32 %v3382, %v3118
      %v3384 = vadd.f32 %v3383, %v3119
      %v3385 = vadd.f32 %v3384, %v3120
      %v3386 = vadd.f32 %v3385, %v3121
      %v3387 = vadd.f32 %v3386, %v3122
      %v3388 = vadd.f32 %v3387, %v3123
      %v3389 = vadd.f32 %v3388, %v3124
      %v3390 = vrot.slane %v3389, 4
      %v3391 = vadd.f32 %v3389, %v3390
      %v3392 = vrot.slane %v3391, 2
      %v3393 = vadd.f32 %v3391, %v3392
      %v3394 = vrot.slane %v3393, 1
      %v3395 = vadd.f32 %v3393, %v3394
      %v3396 = vadd.f32 %v3125, %v3126
      %v3397 = vadd.f32 %v3396, %v3127
      %v3398 = vadd.f32 %v3397, %v3128
      %v3399 = vadd.f32 %v3398, %v3129
      %v3400 = vadd.f32 %v3399, %v3130
      %v3401 = vadd.f32 %v3400, %v3131
      %v3402 = vadd.f32 %v3401, %v3132
      %v3403 = vadd.f32 %v3402, %v3133
      %v3404 = vadd.f32 %v3403, %v3134
      %v3405 = vadd.f32 %v3404, %v3135
      %v3406 = vadd.f32 %v3405, %v3136
      %v3407 = vadd.f32 %v3406, %v3137
      %v3408 = vadd.f32 %v3407, %v3138
      %v3409 = vadd.f32 %v3408, %v3139
      %v3410 = vadd.f32 %v3409, %v3140
      %v3411 = vadd.f32 %v3410, %v3141
      %v3412 = vadd.f32 %v3411, %v3142
      %v3413 = vadd.f32 %v3412, %v3143
      %v3414 = vadd.f32 %v3413, %v3144
      %v3415 = vadd.f32 %v3414, %v3145
      %v3416 = vadd.f32 %v3415, %v3146
      %v3417 = vadd.f32 %v3416, %v3147
      %v3418 = vadd.f32 %v3417, %v3148
      %v3419 = vadd.f32 %v3418, %v3149
      %v3420 = vadd.f32 %v3419, %v3150
      %v3421 = vadd.f32 %v3420, %v3151
      %v3422 = vadd.f32 %v3421, %v3152
      %v3423 = vadd.f32 %v3422, %v3153
      %v3424 = vadd.f32 %v3423, %v3154
      %v3425 = vadd.f32 %v3424, %v3155
      %v3426 = vadd.f32 %v3425, %v3156
      %v3427 = vrot.slane %v3426, 4
      %v3428 = vadd.f32 %v3426, %v3427
      %v3429 = vrot.slane %v3428, 2
      %v3430 = vadd.f32 %v3428, %v3429
      %v3431 = vrot.slane %v3430, 1
      %v3432 = vadd.f32 %v3430, %v3431
      %v3433 = vadd.f32 %v3157, %v3158
      %v3434 = vadd.f32 %v3433, %v3159
      %v3435 = vadd.f32 %v3434, %v3160
      %v3436 = vadd.f32 %v3435, %v3161
      %v3437 = vadd.f32 %v3436, %v3162
      %v3438 = vadd.f32 %v3437, %v3163
      %v3439 = vadd.f32 %v3438, %v3164
      %v3440 = vadd.f32 %v3439, %v3165
      %v3441 = vadd.f32 %v3440, %v3166
      %v3442 = vadd.f32 %v3441, %v3167
      %v3443 = vadd.f32 %v3442, %v3168
      %v3444 = vadd.f32 %v3443, %v3169
      %v3445 = vadd.f32 %v3444, %v3170
      %v3446 = vadd.f32 %v3445, %v3171
      %v3447 = vadd.f32 %v3446, %v3172
      %v3448 = vadd.f32 %v3447, %v3173
      %v3449 = vadd.f32 %v3448, %v3174
      %v3450 = vadd.f32 %v3449, %v3175
      %v3451 = vadd.f32 %v3450, %v3176
      %v3452 = vadd.f32 %v3451, %v3177
      %v3453 = vadd.f32 %v3452, %v3178
      %v3454 = vadd.f32 %v3453, %v3179
      %v3455 = vadd.f32 %v3454, %v3180
      %v3456 = vadd.f32 %v3455, %v3181
      %v3457 = vadd.f32 %v3456, %v3182
      %v3458 = vadd.f32 %v3457, %v3183
      %v3459 = vadd.f32 %v3458, %v3184
      %v3460 = vadd.f32 %v3459, %v3185
      %v3461 = vadd.f32 %v3460, %v3186
      %v3462 = vadd.f32 %v3461, %v3187
      %v3463 = vadd.f32 %v3462, %v3188
      %v3464 = vrot.slane %v3463, 4
      %v3465 = vadd.f32 %v3463, %v3464
      %v3466 = vrot.slane %v3465, 2
      %v3467 = vadd.f32 %v3465, %v3466
      %v3468 = vrot.slane %v3467, 1
      %v3469 = vadd.f32 %v3467, %v3468
      %v3470 = vadd.f32 %v3189, %v3190
      %v3471 = vadd.f32 %v3470, %v3191
      %v3472 = vadd.f32 %v3471, %v3192
      %v3473 = vadd.f32 %v3472, %v3193
      %v3474 = vadd.f32 %v3473, %v3194
      %v3475 = vadd.f32 %v3474, %v3195
      %v3476 = vadd.f32 %v3475, %v3196
      %v3477 = vadd.f32 %v3476, %v3197
      %v3478 = vadd.f32 %v3477, %v3198
      %v3479 = vadd.f32 %v3478, %v3199
      %v3480 = vadd.f32 %v3479, %v3200
      %v3481 = vadd.f32 %v3480, %v3201
      %v3482 = vadd.f32 %v3481, %v3202
      %v3483 = vadd.f32 %v3482, %v3203
      %v3484 = vadd.f32 %v3483, %v3204
      %v3485 = vadd.f32 %v3484, %v3205
      %v3486 = vadd.f32 %v3485, %v3206
      %v3487 = vadd.f32 %v3486, %v3207
      %v3488 = vadd.f32 %v3487, %v3208
      %v3489 = vadd.f32 %v3488, %v3209
      %v3490 = vadd.f32 %v3489, %v3210
      %v3491 = vadd.f32 %v3490, %v3211
      %v3492 = vadd.f32 %v3491, %v3212
      %v3493 = vadd.f32 %v3492, %v3213
      %v3494 = vadd.f32 %v3493, %v3214
      %v3495 = vadd.f32 %v3494, %v3215
      %v3496 = vadd.f32 %v3495, %v3216
      %v3497 = vadd.f32 %v3496, %v3217
      %v3498 = vadd.f32 %v3497, %v3218
      %v3499 = vadd.f32 %v3498, %v3219
      %v3500 = vadd.f32 %v3499, %v3220
      %v3501 = vrot.slane %v3500, 4
      %v3502 = vadd.f32 %v3500, %v3501
      %v3503 = vrot.slane %v3502, 2
      %v3504 = vadd.f32 %v3502, %v3503
      %v3505 = vrot.slane %v3504, 1
      %v3506 = vadd.f32 %v3504, %v3505
      %v3507 = vadd.f32 %v3221, %v3222
      %v3508 = vadd.f32 %v3507, %v3223
      %v3509 = vadd.f32 %v3508, %v3224
      %v3510 = vadd.f32 %v3509, %v3225
      %v3511 = vadd.f32 %v3510, %v3226
      %v3512 = vadd.f32 %v3511, %v3227
      %v3513 = vadd.f32 %v3512, %v3228
      %v3514 = vadd.f32 %v3513, %v3229
      %v3515 = vadd.f32 %v3514, %v3230
      %v3516 = vadd.f32 %v3515, %v3231
      %v3517 = vadd.f32 %v3516, %v3232
      %v3518 = vadd.f32 %v3517, %v3233
      %v3519 = vadd.f32 %v3518, %v3234
      %v3520 = vadd.f32 %v3519, %v3235
      %v3521 = vadd.f32 %v3520, %v3236
      %v3522 = vadd.f32 %v3521, %v3237
      %v3523 = vadd.f32 %v3522, %v3238
      %v3524 = vadd.f32 %v3523, %v3239
      %v3525 = vadd.f32 %v3524, %v3240
      %v3526 = vadd.f32 %v3525, %v3241
      %v3527 = vadd.f32 %v3526, %v3242
      %v3528 = vadd.f32 %v3527, %v3243
      %v3529 = vadd.f32 %v3528, %v3244
      %v3530 = vadd.f32 %v3529, %v3245
      %v3531 = vadd.f32 %v3530, %v3246
      %v3532 = vadd.f32 %v3531, %v3247
      %v3533 = vadd.f32 %v3532, %v3248
      %v3534 = vadd.f32 %v3533, %v3249
      %v3535 = vadd.f32 %v3534, %v3250
      %v3536 = vadd.f32 %v3535, %v3251
      %v3537 = vadd.f32 %v3536, %v3252
      %v3538 = vrot.slane %v3537, 4
      %v3539 = vadd.f32 %v3537, %v3538
      %v3540 = vrot.slane %v3539, 2
      %v3541 = vadd.f32 %v3539, %v3540
      %v3542 = vrot.slane %v3541, 1
      %v3543 = vadd.f32 %v3541, %v3542
      %v3544 = vadd.f32 %v3253, %v3254
      %v3545 = vadd.f32 %v3544, %v3255
      %v3546 = vadd.f32 %v3545, %v3256
      %v3547 = vadd.f32 %v3546, %v3257
      %v3548 = vadd.f32 %v3547, %v3258
      %v3549 = vadd.f32 %v3548, %v3259
      %v3550 = vadd.f32 %v3549, %v3260
      %v3551 = vadd.f32 %v3550, %v3261
      %v3552 = vadd.f32 %v3551, %v3262
      %v3553 = vadd.f32 %v3552, %v3263
      %v3554 = vadd.f32 %v3553, %v3264
      %v3555 = vadd.f32 %v3554, %v3265
      %v3556 = vadd.f32 %v3555, %v3266
      %v3557 = vadd.f32 %v3556, %v3267
      %v3558 = vadd.f32 %v3557, %v3268
      %v3559 = vadd.f32 %v3558, %v3269
      %v3560 = vadd.f32 %v3559, %v3270
      %v3561 = vadd.f32 %v3560, %v3271
      %v3562 = vadd.f32 %v3561, %v3272
      %v3563 = vadd.f32 %v3562, %v3273
      %v3564 = vadd.f32 %v3563, %v3274
      %v3565 = vadd.f32 %v3564, %v3275
      %v3566 = vadd.f32 %v3565, %v3276
      %v3567 = vadd.f32 %v3566, %v3277
      %v3568 = vadd.f32 %v3567, %v3278
      %v3569 = vadd.f32 %v3568, %v3279
      %v3570 = vadd.f32 %v3569, %v3280
      %v3571 = vadd.f32 %v3570, %v3281
      %v3572 = vadd.f32 %v3571, %v3282
      %v3573 = vadd.f32 %v3572, %v3283
      %v3574 = vadd.f32 %v3573, %v3284
      %v3575 = vrot.slane %v3574, 4
      %v3576 = vadd.f32 %v3574, %v3575
      %v3577 = vrot.slane %v3576, 2
      %v3578 = vadd.f32 %v3576, %v3577
      %v3579 = vrot.slane %v3578, 1
      %v3580 = vadd.f32 %v3578, %v3579
      %v3581 = vrcp.pop 256.0
      %v3582 = vmul.f32 %v3321, %v3581
      %v3583 = vmul.f32 %v3358, %v3581
      %v3584 = vmul.f32 %v3395, %v3581
      %v3585 = vmul.f32 %v3432, %v3581
      %v3586 = vmul.f32 %v3469, %v3581
      %v3587 = vmul.f32 %v3506, %v3581
      %v3588 = vmul.f32 %v3543, %v3581
      %v3589 = vmul.f32 %v3580, %v3581
      %v3590 = vpack.c.bf16 %v3582, %v3582
      %v3591 = vpack.c.bf16 %v3583, %v3583
      %v3592 = vpack.c.bf16 %v3584, %v3584
      %v3593 = vpack.c.bf16 %v3585, %v3585
      %v3594 = vpack.c.bf16 %v3586, %v3586
      %v3595 = vpack.c.bf16 %v3587, %v3587
      %v3596 = vpack.c.bf16 %v3588, %v3588
      %v3597 = vpack.c.bf16 %v3589, %v3589
      %v3598 = vld [vmem:[%s3] sm:$0xff]
      %v3599 = vld [vmem:[%s3 + $0x8] sm:$0xff]
      %v3600 = vld [vmem:[%s3 + $0x10] sm:$0xff]
      %v3601 = vld [vmem:[%s3 + $0x18] sm:$0xff]
      %v3602 = vld [vmem:[%s3 + $0x20] sm:$0xff]
      %v3603 = vld [vmem:[%s3 + $0x28] sm:$0xff]
      %v3604 = vld [vmem:[%s3 + $0x30] sm:$0xff]
      %v3605 = vld [vmem:[%s3 + $0x38] sm:$0xff]
      %v3606 = vld [vmem:[%s3 + $0x40] sm:$0xff]
      %v3607 = vld [vmem:[%s3 + $0x48] sm:$0xff]
      %v3608 = vld [vmem:[%s3 + $0x50] sm:$0xff]
      %v3609 = vld [vmem:[%s3 + $0x58] sm:$0xff]
      %v3610 = vld [vmem:[%s3 + $0x60] sm:$0xff]
      %v3611 = vld [vmem:[%s3 + $0x68] sm:$0xff]
      %v3612 = vld [vmem:[%s3 + $0x70] sm:$0xff]
      %v3613 = vld [vmem:[%s3 + $0x78] sm:$0xff]
      %v3614 = vld [vmem:[%s3 + $0x80] sm:$0xff]
      %v3615 = vld [vmem:[%s3 + $0x88] sm:$0xff]
      %v3616 = vld [vmem:[%s3 + $0x90] sm:$0xff]
      %v3617 = vld [vmem:[%s3 + $0x98] sm:$0xff]
      %v3618 = vld [vmem:[%s3 + $0xa0] sm:$0xff]
      %v3619 = vld [vmem:[%s3 + $0xa8] sm:$0xff]
      %v3620 = vld [vmem:[%s3 + $0xb0] sm:$0xff]
      %v3621 = vld [vmem:[%s3 + $0xb8] sm:$0xff]
      %v3622 = vld [vmem:[%s3 + $0xc0] sm:$0xff]
      %v3623 = vld [vmem:[%s3 + $0xc8] sm:$0xff]
      %v3624 = vld [vmem:[%s3 + $0xd0] sm:$0xff]
      %v3625 = vld [vmem:[%s3 + $0xd8] sm:$0xff]
      %v3626 = vld [vmem:[%s3 + $0xe0] sm:$0xff]
      %v3627 = vld [vmem:[%s3 + $0xe8] sm:$0xff]
      %v3628 = vld [vmem:[%s3 + $0xf0] sm:$0xff]
      %v3629 = vld [vmem:[%s3 + $0xf8] sm:$0xff]
      %v3630 = vld [vmem:[%s4] sm:$0xf]
      %v3632 = vlaneseq
      %v3633 = vshrl.u32 %v3632, 7
      %v3634 = vsub.s32 0, %v3633
      %v3635 = vrot.slane %v3630, %v3634
      %v3636 = vlaneseq
      %v3637 = vshrl.u32 %v3636, 7
      %v3638 = vsub.s32 1, %v3637
      %v3639 = vrot.slane %v3630, %v3638
      %v3640 = vlaneseq
      %v3641 = vshrl.u32 %v3640, 7
      %v3642 = vsub.s32 2, %v3641
      %v3643 = vrot.slane %v3630, %v3642
      %v3644 = vlaneseq
      %v3645 = vshrl.u32 %v3644, 7
      %v3646 = vsub.s32 3, %v3645
      %v3647 = vrot.slane %v3630, %v3646
      %v3660 = vunpack.c.l.b16 %v3590
      %v3661 = vunpack.c.l.b16 %v3591
      %v3662 = vunpack.c.l.b16 %v3592
      %v3663 = vunpack.c.l.b16 %v3593
      %v3664 = vunpack.c.l.b16 %v3594
      %v3665 = vunpack.c.l.b16 %v3595
      %v3666 = vunpack.c.l.b16 %v3596
      %v3667 = vunpack.c.l.b16 %v3597
      %vm3668 = vcmask 1041409
      %v3669 = vsel %vm3668, %v3661, %v3660
      %vm3670 = vcmask 1042434
      %v3671 = vsel %vm3670, %v3662, %v3669
      %vm3672 = vcmask 1043459
      %v3673 = vsel %vm3672, %v3663, %v3671
      %vm3674 = vcmask 1044484
      %v3675 = vsel %vm3674, %v3664, %v3673
      %vm3676 = vcmask 1045509
      %v3677 = vsel %vm3676, %v3665, %v3675
      %vm3678 = vcmask 1046534
      %v3679 = vsel %vm3678, %v3666, %v3677
      %vm3680 = vcmask 1047559
      %v3681 = vsel %vm3680, %v3667, %v3679
      %v3682 = vpack.c.b16 %v3681, %v3681
      %v3716 = vunpack.c.l.b16 %v3598
      %v3717 = vunpack.c.h.b16 %v3598
      %v3718 = vunpack.c.l.b16 %v3599
      %v3719 = vunpack.c.h.b16 %v3599
      %v3720 = vunpack.c.l.b16 %v3600
      %v3721 = vunpack.c.h.b16 %v3600
      %v3722 = vunpack.c.l.b16 %v3601
      %v3723 = vunpack.c.h.b16 %v3601
      %v3724 = vunpack.c.l.b16 %v3602
      %v3725 = vunpack.c.h.b16 %v3602
      %v3726 = vunpack.c.l.b16 %v3603
      %v3727 = vunpack.c.h.b16 %v3603
      %v3728 = vunpack.c.l.b16 %v3604
      %v3729 = vunpack.c.h.b16 %v3604
      %v3730 = vunpack.c.l.b16 %v3605
      %v3731 = vunpack.c.h.b16 %v3605
      %v3732 = vunpack.c.l.b16 %v3606
      %v3733 = vunpack.c.h.b16 %v3606
      %v3734 = vunpack.c.l.b16 %v3607
      %v3735 = vunpack.c.h.b16 %v3607
      %v3736 = vunpack.c.l.b16 %v3608
      %v3737 = vunpack.c.h.b16 %v3608
      %v3738 = vunpack.c.l.b16 %v3609
      %v3739 = vunpack.c.h.b16 %v3609
      %v3740 = vunpack.c.l.b16 %v3610
      %v3741 = vunpack.c.h.b16 %v3610
      %v3742 = vunpack.c.l.b16 %v3611
      %v3743 = vunpack.c.h.b16 %v3611
      %v3744 = vunpack.c.l.b16 %v3612
      %v3745 = vunpack.c.h.b16 %v3612
      %v3746 = vunpack.c.l.b16 %v3613
      %v3747 = vunpack.c.h.b16 %v3613
      %v3748 = vunpack.c.l.b16 %v3614
      %v3749 = vunpack.c.h.b16 %v3614
      %v3750 = vunpack.c.l.b16 %v3615
      %v3751 = vunpack.c.h.b16 %v3615
      %v3752 = vunpack.c.l.b16 %v3616
      %v3753 = vunpack.c.h.b16 %v3616
      %v3754 = vunpack.c.l.b16 %v3617
      %v3755 = vunpack.c.h.b16 %v3617
      %v3756 = vunpack.c.l.b16 %v3618
      %v3757 = vunpack.c.h.b16 %v3618
      %v3758 = vunpack.c.l.b16 %v3619
      %v3759 = vunpack.c.h.b16 %v3619
      %v3760 = vunpack.c.l.b16 %v3620
      %v3761 = vunpack.c.h.b16 %v3620
      %v3762 = vunpack.c.l.b16 %v3621
      %v3763 = vunpack.c.h.b16 %v3621
      %v3764 = vunpack.c.l.b16 %v3622
      %v3765 = vunpack.c.h.b16 %v3622
      %v3766 = vunpack.c.l.b16 %v3623
      %v3767 = vunpack.c.h.b16 %v3623
      %v3768 = vunpack.c.l.b16 %v3624
      %v3769 = vunpack.c.h.b16 %v3624
      %v3770 = vunpack.c.l.b16 %v3625
      %v3771 = vunpack.c.h.b16 %v3625
      %v3772 = vunpack.c.l.b16 %v3626
      %v3773 = vunpack.c.h.b16 %v3626
      %v3774 = vunpack.c.l.b16 %v3627
      %v3775 = vunpack.c.h.b16 %v3627
      %v3776 = vunpack.c.l.b16 %v3628
      %v3777 = vunpack.c.h.b16 %v3628
      %v3778 = vunpack.c.l.b16 %v3629
      %v3779 = vunpack.c.h.b16 %v3629
      %v3780 = vpack.c.b16 %v3720, %v3716
      %v3781 = vpack.c.b16 %v3721, %v3717
      %v3782 = vpack.c.b16 %v3722, %v3718
      %v3783 = vpack.c.b16 %v3723, %v3719
      %v3784 = vpack.c.b16 %v3728, %v3724
      %v3785 = vpack.c.b16 %v3729, %v3725
      %v3786 = vpack.c.b16 %v3730, %v3726
      %v3787 = vpack.c.b16 %v3731, %v3727
      %v3788 = vpack.c.b16 %v3736, %v3732
      %v3789 = vpack.c.b16 %v3737, %v3733
      %v3790 = vpack.c.b16 %v3738, %v3734
      %v3791 = vpack.c.b16 %v3739, %v3735
      %v3792 = vpack.c.b16 %v3744, %v3740
      %v3793 = vpack.c.b16 %v3745, %v3741
      %v3794 = vpack.c.b16 %v3746, %v3742
      %v3795 = vpack.c.b16 %v3747, %v3743
      %v3796 = vpack.c.b16 %v3752, %v3748
      %v3797 = vpack.c.b16 %v3753, %v3749
      %v3798 = vpack.c.b16 %v3754, %v3750
      %v3799 = vpack.c.b16 %v3755, %v3751
      %v3800 = vpack.c.b16 %v3760, %v3756
      %v3801 = vpack.c.b16 %v3761, %v3757
      %v3802 = vpack.c.b16 %v3762, %v3758
      %v3803 = vpack.c.b16 %v3763, %v3759
      %v3804 = vpack.c.b16 %v3768, %v3764
      %v3805 = vpack.c.b16 %v3769, %v3765
      %v3806 = vpack.c.b16 %v3770, %v3766
      %v3807 = vpack.c.b16 %v3771, %v3767
      %v3808 = vpack.c.b16 %v3776, %v3772
      %v3809 = vpack.c.b16 %v3777, %v3773
      %v3810 = vpack.c.b16 %v3778, %v3774
      %v3811 = vpack.c.b16 %v3779, %v3775
      %3844 = vmatprep.subr.bf16.mxu0 %v3781
      %3845 = vmatpush1.bf16.msra.mxu0 %v3780
      %3846 = vmatprep.subr.bf16.mxu0 %v3785
      %3847 = vmatpush1.bf16.msra.mxu0 %v3784
      %3848 = vmatprep.subr.bf16.mxu0 %v3789
      %3849 = vmatpush1.bf16.msra.mxu0 %v3788
      %3850 = vmatprep.subr.bf16.mxu0 %v3793
      %3851 = vmatpush1.bf16.msra.mxu0 %v3792
      %3852 = vmatprep.subr.bf16.mxu0 %v3797
      %3853 = vmatpush1.bf16.msra.mxu0 %v3796
      %3854 = vmatprep.subr.bf16.mxu0 %v3801
      %3855 = vmatpush1.bf16.msra.mxu0 %v3800
      %3856 = vmatprep.subr.bf16.mxu0 %v3805
      %3857 = vmatpush1.bf16.msra.mxu0 %v3804
      %3858 = vmatprep.subr.bf16.mxu0 %v3809
      %3859 = vmatpush1.bf16.msra.mxu0 %v3808
      %3860 = vmatprep.subr.bf16.mxu0 0
      %3861 = vmatpush1.bf16.msra.mxu0 0
      %3862 = vmatprep.subr.bf16.mxu0 0
      %3863 = vmatpush1.bf16.msra.mxu0 0
      %3864 = vmatprep.subr.bf16.mxu0 0
      %3865 = vmatpush1.bf16.msra.mxu0 0
      %3866 = vmatprep.subr.bf16.mxu0 0
      %3867 = vmatpush1.bf16.msra.mxu0 0
      %3868 = vmatprep.subr.bf16.mxu0 0
      %3869 = vmatpush1.bf16.msra.mxu0 0
      %3870 = vmatprep.subr.bf16.mxu0 0
      %3871 = vmatpush1.bf16.msra.mxu0 0
      %3872 = vmatprep.subr.bf16.mxu0 0
      %3873 = vmatpush1.bf16.msra.mxu0 0
      %3874 = vmatprep.subr.bf16.mxu0 0
      %3875 = vmatpush1.bf16.msra.mxu0 0
      %3876 = vmatprep.mubr.bf16.mxu0 0
      %3877 = vmatmul.mubr.bf16.gmra.mrb[0].mxu0 %v3682
      %v3878 = vpop.f32.mrb[0].mxu0
      %v3879 = vadd.f32 %v3635, %v3878
      %v3880 = vpop.f32.mrb[0].mxu0
      %v3881 = vadd.f32 %v3639, %v3880
      %v3882 = vpop.f32.mrb[0].mxu0
      %v3883 = vpop.f32.mrb[0].mxu0
      %3884 = vdwg.mxu0
      %3885 = vmatprep.subr.bf16.mxu0 %v3783
      %3886 = vmatpush1.bf16.msra.mxu0 %v3782
      %3887 = vmatprep.subr.bf16.mxu0 %v3787
      %3888 = vmatpush1.bf16.msra.mxu0 %v3786
      %3889 = vmatprep.subr.bf16.mxu0 %v3791
      %3890 = vmatpush1.bf16.msra.mxu0 %v3790
      %3891 = vmatprep.subr.bf16.mxu0 %v3795
      %3892 = vmatpush1.bf16.msra.mxu0 %v3794
      %3893 = vmatprep.subr.bf16.mxu0 %v3799
      %3894 = vmatpush1.bf16.msra.mxu0 %v3798
      %3895 = vmatprep.subr.bf16.mxu0 %v3803
      %3896 = vmatpush1.bf16.msra.mxu0 %v3802
      %3897 = vmatprep.subr.bf16.mxu0 %v3807
      %3898 = vmatpush1.bf16.msra.mxu0 %v3806
      %3899 = vmatprep.subr.bf16.mxu0 %v3811
      %3900 = vmatpush1.bf16.msra.mxu0 %v3810
      %3901 = vmatprep.subr.bf16.mxu0 0
      %3902 = vmatpush1.bf16.msra.mxu0 0
      %3903 = vmatprep.subr.bf16.mxu0 0
      %3904 = vmatpush1.bf16.msra.mxu0 0
      %3905 = vmatprep.subr.bf16.mxu0 0
      %3906 = vmatpush1.bf16.msra.mxu0 0
      %3907 = vmatprep.subr.bf16.mxu0 0
      %3908 = vmatpush1.bf16.msra.mxu0 0
      %3909 = vmatprep.subr.bf16.mxu0 0
      %3910 = vmatpush1.bf16.msra.mxu0 0
      %3911 = vmatprep.subr.bf16.mxu0 0
      %3912 = vmatpush1.bf16.msra.mxu0 0
      %3913 = vmatprep.subr.bf16.mxu0 0
      %3914 = vmatpush1.bf16.msra.mxu0 0
      %3915 = vmatprep.subr.bf16.mxu0 0
      %3916 = vmatpush1.bf16.msra.mxu0 0
      %3917 = vmatprep.mubr.bf16.mxu0 0
      %3918 = vmatmul.mubr.bf16.gmra.mrb[0].mxu0 %v3682
      %v3919 = vpop.f32.mrb[0].mxu0
      %v3920 = vadd.f32 %v3643, %v3919
      %v3921 = vpop.f32.mrb[0].mxu0
      %v3922 = vadd.f32 %v3647, %v3921
      %v3923 = vpop.f32.mrb[0].mxu0
      %v3924 = vpop.f32.mrb[0].mxu0
      %3925 = vdwg.mxu0
      %3926 = vst [vmem:[%s299] sm:$0xff] %v3879
      %3927 = vst [vmem:[%s299 + $0x8] sm:$0xff] %v3881
      %3928 = vst [vmem:[%s299 + $0x10] sm:$0xff] %v3920
      %3929 = vst [vmem:[%s299 + $0x18] sm:$0xff] %v3922
      %p3930 = scmp.lt.s32.totalorder %s20, 1
      %s3931 = scalar_select %p3930, %s20, 1
      %p3932 = scmp.lt.s32.totalorder %s21, 0
      %s3933 = scalar_select %p3932, %s21, 0
      %s3934 = smul.addr %s3933, 4
      %s3935 = smul.addr %s3931, 4
      %s3936 = sadd.s32 %s3934, %s3935
      %s3937 = smul.addr %s3936, 8
      %s3938 = scalar_lea.vmem %s5, %s3937
      // Predicated region
      $region41: #{segmentation_model_output_wrapper.1} parent=39 // pred_check
        %p3939 = pneg %p170
      $region42: #{segmentation_model_output_wrapper.1} parent=39 // pred_check_branch
        %3941 = sbr.rel (%p3939) target = $region44
      $region43: #{segmentation_model_output_wrapper.1} parent=39 // pred_region
        _
      $region44: #{segmentation_model_output_wrapper.1} parent=39 // pred_fallthru
        _
    $region40: #{segmentation_model_output_wrapper.1} parent=5 // pred_fallthru
      _
    %p3942 = scmp.le.s32.totalorder 2, %s11
    // Predicated region
    $region45: #{segmentation_model_output_wrapper.1} parent=5 // pred_check
      %p3943 = pneg %p3942
    $region46: #{segmentation_model_output_wrapper.1} parent=5 // pred_check_branch
      %3945 = sbr.rel (%p3943) target = $region48
    $region47: #{segmentation_model_output_wrapper.1} parent=5 // pred_region
      %s3946 = ssub.s32 %s11, 2
      // Predicated region
      $region49: #{segmentation_model_output_wrapper.1} parent=47 // pred_check
        %p3947 = pneg %p176
      $region50: #{segmentation_model_output_wrapper.1} parent=47 // pred_check_branch
        %3949 = sbr.rel (%p3947) target = $region52
      $region51: #{segmentation_model_output_wrapper.1} parent=47 // pred_region
        %p3950 = scmp.lt.s32.totalorder %s22, 1
        %s3951 = scalar_select %p3950, %s22, 1
        %p3952 = scmp.lt.s32.totalorder %s23, 0
        %s3953 = scalar_select %p3952, %s23, 0
        %s3954 = smul.addr %s3953, 4
        %s3955 = smul.addr %s3951, 4
        %s3956 = sadd.s32 %s3954, %s3955
        %s3957 = smul.addr %s3956, 8
        %s3958 = scalar_lea.vmem %s5, %s3957
      $region52: #{segmentation_model_output_wrapper.1} parent=47 // pred_fallthru
        _
    $region48: #{segmentation_model_output_wrapper.1} parent=5 // pred_fallthru
      _
  $region6: #{segmentation_model_output_wrapper.1} parent=0 // loop_footer
    %s15 = sadd.s32 1, %s11
  $region7: #{segmentation_model_output_wrapper.1} parent=0 // loop_footer_branch
    %10 = sbr.rel target = $region3
  $region8: #{segmentation_model_output_wrapper.1} parent=0 // loop_exit
    _

</llo_original>
